<compile_context>
chip_gen: v6e
topology: v6e:2x2x1
jax: 0.10.0
libtpu: 0.0.40
codegen_flags: <defaults>
</compile_context>

<pallas_src>
import jax
import jax.numpy as jnp
import numpy as np
from jax.experimental import pallas as pl
from jax.experimental.pallas import tpu as pltpu

LRELU_SLOPE = 0.1
BN_EPS = 1e-5
FC_LANES = 128          # lane-pad the FC output so the final store is lane-dense


# ------------------------------ kernel helpers --------------------------------

def _leaky_relu(x):
    return jnp.where(x >= 0, x, LRELU_SLOPE * x)


def _maxpool2x2(y):
    """2x2 stride-2 max pool on a (B, H, W, C) value (C on the lane axis)."""
    B, H, W, C = y.shape
    t = y.reshape(B * (H // 2), 2, W // 2, 2, C)
    m = jnp.maximum(jnp.maximum(t[:, 0, :, 0, :], t[:, 0, :, 1, :]),
                    jnp.maximum(t[:, 1, :, 0, :], t[:, 1, :, 1, :]))
    return m.reshape(B, H // 2, W // 2, C)


# ------------------------------- fused kernel ---------------------------------

def _fused_cnn_kernel(x_ref, w1_ref, b1_ref, w2_ref, b2_ref, fc_ref, o_ref,
                      xp_ref, p1_ref, y1p_ref, p2_ref):
    """conv1+BN+LReLU+pool -> conv2+BN+LReLU+pool -> GAP -> FC, all in VMEM.

    x_ref  : (B, H, W, Cin)          input tile (f32)
    w1_ref : (9*Cin, C1)             conv1 weights, BN1 scale folded in
    b1_ref : (1, C1)                 folded conv1+BN1 bias
    w2_ref : (9*C1, C2)              conv2 weights, BN2 scale folded in
    b2_ref : (1, C2)                 folded conv2+BN2 bias
    fc_ref : (C2, FC_LANES)          FC weight, real logit in column 0
    o_ref  : (B, 1, FC_LANES)        lane-dense logits output
    xp_ref : (B, H+2, W+2, Cin)      VMEM halo-padded input
    p1_ref : (B, H, W, 9*Cin)        VMEM im2col patch for conv1
    y1p_ref: (B, H/2+2, W/2+2, C1)   VMEM halo-padded block-1 activation
    p2_ref : (B, H/2, W/2, 9*C1)     VMEM im2col patch for conv2
    """
    B, H, W, Cin = x_ref.shape
    C1 = w1_ref.shape[1]
    C2 = w2_ref.shape[1]
    Ho, Wo = H // 2, W // 2
    Hq, Wq = Ho // 2, Wo // 2

    # ---- block 1: SAME halo in VMEM + im2col + one K=9*Cin MXU matmul ----
    xp_ref[...] = jnp.zeros(xp_ref.shape, xp_ref.dtype)
    xp_ref[:, 1:H + 1, 1:W + 1, :] = x_ref[...]
    for kh in range(3):
        for kw in range(3):
            t = kh * 3 + kw
            p1_ref[:, :, :, t * Cin:(t + 1) * Cin] = \
                xp_ref[:, kh:kh + H, kw:kw + W, :]
    a1 = jnp.dot(p1_ref[...].reshape(B * H * W, 9 * Cin), w1_ref[...],
                 preferred_element_type=jnp.float32)                 # (B*H*W, C1)
    a1 = _leaky_relu(a1 + b1_ref[...])
    y1 = _maxpool2x2(a1.reshape(B, H, W, C1))                        # (B, Ho, Wo, C1)

    # ---- block 2: y1 never leaves VMEM; taps K-packed to one matmul ----
    y1p_ref[...] = jnp.zeros(y1p_ref.shape, y1p_ref.dtype)
    y1p_ref[:, 1:Ho + 1, 1:Wo + 1, :] = y1
    for kh in range(3):
        for kw in range(3):
            t = kh * 3 + kw
            p2_ref[:, :, :, t * C1:(t + 1) * C1] = \
                y1p_ref[:, kh:kh + Ho, kw:kw + Wo, :]
    a2 = jnp.dot(p2_ref[...].reshape(B * Ho * Wo, 9 * C1), w2_ref[...],
                 preferred_element_type=jnp.float32)                 # (B*Ho*Wo, C2)
    a2 = _leaky_relu(a2 + b2_ref[...])
    y2 = _maxpool2x2(a2.reshape(B, Ho, Wo, C2))                      # (B, Hq, Wq, C2)

    # ---- global average pool + FC (dropout = identity in eval mode) ----
    avg = jnp.sum(jnp.sum(y2, axis=2), axis=1) * (1.0 / (Hq * Wq))   # (B, C2)
    logits = jnp.dot(avg, fc_ref[...], preferred_element_type=jnp.float32)
    o_ref[...] = logits.reshape(B, 1, fc_ref.shape[-1])


# --------------------------------- wrapper -------------------------------------

def _pick_batch_tile(n, cap=8):
    """Images per grid step: amortize per-step overhead, but keep >= 2 grid
    steps whenever possible so both v7x TensorCores get work."""
    if n <= 1:
        return 1
    return max(1, min(cap, n // 2))


def _fused_cnn_call(x_nhwc, w1, b1, w2, b2, fc_w, *, block_n):
    N, H, W, Cin = x_nhwc.shape
    assert N % block_n == 0
    C1, C2 = w1.shape[1], w2.shape[1]
    lanes = fc_w.shape[1]
    Ho, Wo = H // 2, W // 2
    return pl.pallas_call(
        _fused_cnn_kernel,
        out_shape=jax.ShapeDtypeStruct((N, 1, lanes), jnp.float32),
        grid=(N // block_n,),
        in_specs=[
            pl.BlockSpec((block_n, H, W, Cin), lambda n: (n, 0, 0, 0)),
            pl.BlockSpec(w1.shape, lambda n: (0, 0)),
            pl.BlockSpec(b1.shape, lambda n: (0, 0)),
            pl.BlockSpec(w2.shape, lambda n: (0, 0)),
            pl.BlockSpec(b2.shape, lambda n: (0, 0)),
            pl.BlockSpec(fc_w.shape, lambda n: (0, 0)),
        ],
        out_specs=pl.BlockSpec((block_n, 1, lanes), lambda n: (n, 0, 0)),
        scratch_shapes=[
            pltpu.VMEM((block_n, H + 2, W + 2, Cin), jnp.float32),    # halo input
            pltpu.VMEM((block_n, H, W, 9 * Cin), jnp.float32),        # conv1 im2col
            pltpu.VMEM((block_n, Ho + 2, Wo + 2, C1), jnp.float32),   # halo y1 (VMEM only)
            pltpu.VMEM((block_n, Ho, Wo, 9 * C1), jnp.float32),       # conv2 im2col
        ],
        compiler_params=pltpu.CompilerParams(
            dimension_semantics=("parallel",)),
    )(x_nhwc, w1, b1, w2, b2, fc_w)


# ------------------------------- param prep ------------------------------------

def _fold_conv_bn(w_oihw, conv_b, gamma, beta, mean, var):
    """Fold eval-mode BatchNorm (running stats) into the conv weights/bias.

    torch (Cout, Cin, 3, 3) -> (9*Cin, Cout) f32 with BN scale folded in;
    row index = (kh*3 + kw)*Cin + cin, matching the in-kernel im2col layout.
    """
    cout, cin = w_oihw.shape[0], w_oihw.shape[1]
    scale = gamma / jnp.sqrt(var + BN_EPS)                      # (Cout,)
    bias = beta + (conv_b - mean) * scale                       # (Cout,)
    w = jnp.transpose(w_oihw, (2, 3, 1, 0)).reshape(9 * cin, cout)
    return ((w * scale[None, :]).astype(jnp.float32),
            bias.reshape(1, cout).astype(jnp.float32))


def _prep_fc_weight(fc_w, lanes=FC_LANES):
    """torch Linear (out=1, in=64) -> (64, lanes) f32, real logit in column 0."""
    out_f, in_f = fc_w.shape
    return jnp.zeros((in_f, lanes), jnp.float32).at[:, :out_f].set(fc_w.T)


def binary_cnn_forward(x_nchw, params):
    x = jnp.transpose(x_nchw, (0, 2, 3, 1)).astype(jnp.float32)   # NCHW -> NHWC
    N, H, W, _ = x.shape
    assert H % 4 == 0 and W % 4 == 0, "two 2x2 pools require H, W % 4 == 0"

    w1, b1 = _fold_conv_bn(params["conv1_w"], params["conv1_b"], params["bn1_gamma"],
                           params["bn1_beta"], params["bn1_mean"], params["bn1_var"])
    w2, b2 = _fold_conv_bn(params["conv2_w"], params["conv2_b"], params["bn2_gamma"],
                           params["bn2_beta"], params["bn2_mean"], params["bn2_var"])
    fc_w = _prep_fc_weight(params["fc_w"])

    # TODO(synk): training-mode dropout / batch-statistics BN not implemented.
    block_n = _pick_batch_tile(N)
    n_pad = pl.cdiv(N, block_n) * block_n
    if n_pad != N:
        x = jnp.pad(x, ((0, n_pad - N), (0, 0), (0, 0), (0, 0)))
    logits = _fused_cnn_call(x, w1, b1, w2, b2, fc_w, block_n=block_n)  # (n_pad,1,128)
    return logits[:N, 0, :1] + params["fc_b"].reshape(1, 1)


# ------------------------- reference (pure JAX, f32) ----------------------------

def reference_forward(x_nchw, params):
    x = jnp.transpose(x_nchw, (0, 2, 3, 1)).astype(jnp.float32)

    def block(x, w, b, g, bt, m, v):
        y = jax.lax.conv_general_dilated(
            x, jnp.transpose(w, (2, 3, 1, 0)), (1, 1), "SAME",
            dimension_numbers=("NHWC", "HWIO", "NHWC")) + b
        y = (y - m) * (g / jnp.sqrt(v + BN_EPS)) + bt
        y = jnp.where(y >= 0, y, LRELU_SLOPE * y)
        return jax.lax.reduce_window(y, -jnp.inf, jax.lax.max,
                                     (1, 2, 2, 1), (1, 2, 2, 1), "VALID")

    y = block(x, params["conv1_w"], params["conv1_b"], params["bn1_gamma"],
              params["bn1_beta"], params["bn1_mean"], params["bn1_var"])
    y = block(y, params["conv2_w"], params["conv2_b"], params["bn2_gamma"],
              params["bn2_beta"], params["bn2_mean"], params["bn2_var"])
    pooled = jnp.mean(y, axis=(1, 2))
    return pooled @ params["fc_w"].T + params["fc_b"]


# ---------------------------------- params --------------------------------------

def init_params(key):
    ks = jax.random.split(key, 16)
    p = {}
    p["conv1_w"] = 0.1 * jax.random.normal(ks[0], (32, 3, 3, 3), jnp.float32)
    p["conv1_b"] = 0.1 * jax.random.normal(ks[1], (32,), jnp.float32)
    p["bn1_gamma"] = 1.0 + 0.1 * jax.random.normal(ks[2], (32,), jnp.float32)
    p["bn1_beta"] = 0.1 * jax.random.normal(ks[3], (32,), jnp.float32)
    p["bn1_mean"] = 0.1 * jax.random.normal(ks[4], (32,), jnp.float32)
    p["bn1_var"] = 0.5 + jnp.abs(jax.random.normal(ks[5], (32,), jnp.float32))
    p["conv2_w"] = 0.05 * jax.random.normal(ks[6], (64, 32, 3, 3), jnp.float32)
    p["conv2_b"] = 0.1 * jax.random.normal(ks[7], (64,), jnp.float32)
    p["bn2_gamma"] = 1.0 + 0.1 * jax.random.normal(ks[8], (64,), jnp.float32)
    p["bn2_beta"] = 0.1 * jax.random.normal(ks[9], (64,), jnp.float32)
    p["bn2_mean"] = 0.1 * jax.random.normal(ks[10], (64,), jnp.float32)
    p["bn2_var"] = 0.5 + jnp.abs(jax.random.normal(ks[11], (64,), jnp.float32))
    p["fc_w"] = 0.1 * jax.random.normal(ks[12], (1, 64), jnp.float32)
    p["fc_b"] = 0.1 * jax.random.normal(ks[13], (1,), jnp.float32)
    return p


if __name__ == "__main__":
    key = jax.random.PRNGKey(0)
    k_x, k_p = jax.random.split(key)
    x = jax.random.normal(k_x, (2, 3, 16, 16), jnp.float32)   # NCHW like PyTorch
    params = init_params(k_p)

    out = jax.jit(binary_cnn_forward)(x, params)
    out = jax.block_until_ready(out)

    ref = jax.block_until_ready(reference_forward(x, params))
    np.testing.assert_allclose(np.asarray(out), np.asarray(ref),
                               rtol=2e-2, atol=2e-2)
    assert out.shape == (2, 1)
    print("KERNEL_OK")
</pallas_src>

<mosaic_0001>
module attributes {stable_mosaic.version = 11 : i64} {
  func.func @_fused_cnn_kernel(%arg0: i32, %arg1: memref<1x16x16x3xf32, #tpu.memory_space<vmem>>, %arg2: memref<27x32xf32, #tpu.memory_space<vmem>>, %arg3: memref<1x32xf32, #tpu.memory_space<vmem>>, %arg4: memref<288x64xf32, #tpu.memory_space<vmem>>, %arg5: memref<1x64xf32, #tpu.memory_space<vmem>>, %arg6: memref<64x128xf32, #tpu.memory_space<vmem>>, %arg7: memref<1x1x128xf32, #tpu.memory_space<vmem>>, %arg8: memref<1x18x18x3xf32, #tpu.memory_space<vmem>>, %arg9: memref<1x16x16x27xf32, #tpu.memory_space<vmem>>, %arg10: memref<1x10x10x32xf32, #tpu.memory_space<vmem>>, %arg11: memref<1x8x8x288xf32, #tpu.memory_space<vmem>>) attributes {dimension_semantics = [#tpu.dimension_semantics<parallel>], iteration_bounds = array<i64: 2>, scalar_prefetch = 0 : i64, scratch_operands = 4 : i64, tpu.core_type = #tpu.core_type<tc>, window_params = [{transform_indices = @transform_0, window_bounds = array<i64: 1, 16, 16, 3>}, {pipeline_mode = #tpu.pipeline_mode<synchronous>, transform_indices = @transform_1, window_bounds = array<i64: 27, 32>}, {pipeline_mode = #tpu.pipeline_mode<synchronous>, transform_indices = @transform_2, window_bounds = array<i64: 1, 32>}, {pipeline_mode = #tpu.pipeline_mode<synchronous>, transform_indices = @transform_3, window_bounds = array<i64: 288, 64>}, {pipeline_mode = #tpu.pipeline_mode<synchronous>, transform_indices = @transform_4, window_bounds = array<i64: 1, 64>}, {pipeline_mode = #tpu.pipeline_mode<synchronous>, transform_indices = @transform_5, window_bounds = array<i64: 64, 128>}, {transform_indices = @transform_6, window_bounds = array<i64: 1, 1, 128>}]} {
    %cst = arith.constant 0.000000e+00 : f32
    %0 = vector.broadcast %cst : f32 to vector<1x18x18x3xf32>
    %c0 = arith.constant 0 : index
    %c0_0 = arith.constant 0 : index
    %c0_1 = arith.constant 0 : index
    %c0_2 = arith.constant 0 : index
    %1 = vector.load %arg8[%c0, %c0_0, %c0_1, %c0_2] : memref<1x18x18x3xf32, #tpu.memory_space<vmem>>, vector<1x18x18x3xf32>
    tpu.vector_store %arg8[%c0, %c0_0, %c0_1, %c0_2], %0 {strides = array<i32>} : memref<1x18x18x3xf32, #tpu.memory_space<vmem>>, vector<1x18x18x3xf32>,
    %c0_3 = arith.constant 0 : index
    %c0_4 = arith.constant 0 : index
    %c0_5 = arith.constant 0 : index
    %c0_6 = arith.constant 0 : index
    %2 = vector.load %arg1[%c0_3, %c0_4, %c0_5, %c0_6] : memref<1x16x16x3xf32, #tpu.memory_space<vmem>>, vector<1x16x16x3xf32>
    %c0_7 = arith.constant 0 : index
    %c1 = arith.constant 1 : index
    %c1_8 = arith.constant 1 : index
    %c0_9 = arith.constant 0 : index
    %3 = vector.load %arg8[%c0_7, %c1, %c1_8, %c0_9] : memref<1x18x18x3xf32, #tpu.memory_space<vmem>>, vector<1x16x16x3xf32>
    tpu.vector_store %arg8[%c0_7, %c1, %c1_8, %c0_9], %2 {strides = array<i32>} : memref<1x18x18x3xf32, #tpu.memory_space<vmem>>, vector<1x16x16x3xf32>,
    %c0_10 = arith.constant 0 : index
    %c0_11 = arith.constant 0 : index
    %c0_12 = arith.constant 0 : index
    %c0_13 = arith.constant 0 : index
    %4 = vector.load %arg8[%c0_10, %c0_11, %c0_12, %c0_13] : memref<1x18x18x3xf32, #tpu.memory_space<vmem>>, vector<1x16x16x3xf32>
    %c0_14 = arith.constant 0 : index
    %c0_15 = arith.constant 0 : index
    %c0_16 = arith.constant 0 : index
    %c0_17 = arith.constant 0 : index
    %5 = vector.load %arg9[%c0_14, %c0_15, %c0_16, %c0_17] : memref<1x16x16x27xf32, #tpu.memory_space<vmem>>, vector<1x16x16x3xf32>
    tpu.vector_store %arg9[%c0_14, %c0_15, %c0_16, %c0_17], %4 {strides = array<i32>} : memref<1x16x16x27xf32, #tpu.memory_space<vmem>>, vector<1x16x16x3xf32>,
    %c0_18 = arith.constant 0 : index
    %c0_19 = arith.constant 0 : index
    %c1_20 = arith.constant 1 : index
    %c0_21 = arith.constant 0 : index
    %6 = vector.load %arg8[%c0_18, %c0_19, %c1_20, %c0_21] : memref<1x18x18x3xf32, #tpu.memory_space<vmem>>, vector<1x16x16x3xf32>
    %c0_22 = arith.constant 0 : index
    %c0_23 = arith.constant 0 : index
    %c0_24 = arith.constant 0 : index
    %c3 = arith.constant 3 : index
    %7 = vector.load %arg9[%c0_22, %c0_23, %c0_24, %c3] : memref<1x16x16x27xf32, #tpu.memory_space<vmem>>, vector<1x16x16x3xf32>
    tpu.vector_store %arg9[%c0_22, %c0_23, %c0_24, %c3], %6 {strides = array<i32>} : memref<1x16x16x27xf32, #tpu.memory_space<vmem>>, vector<1x16x16x3xf32>,
    %c0_25 = arith.constant 0 : index
    %c0_26 = arith.constant 0 : index
    %c2 = arith.constant 2 : index
    %c0_27 = arith.constant 0 : index
    %8 = vector.load %arg8[%c0_25, %c0_26, %c2, %c0_27] : memref<1x18x18x3xf32, #tpu.memory_space<vmem>>, vector<1x16x16x3xf32>
    %c0_28 = arith.constant 0 : index
    %c0_29 = arith.constant 0 : index
    %c0_30 = arith.constant 0 : index
    %c6 = arith.constant 6 : index
    %9 = vector.load %arg9[%c0_28, %c0_29, %c0_30, %c6] : memref<1x16x16x27xf32, #tpu.memory_space<vmem>>, vector<1x16x16x3xf32>
    tpu.vector_store %arg9[%c0_28, %c0_29, %c0_30, %c6], %8 {strides = array<i32>} : memref<1x16x16x27xf32, #tpu.memory_space<vmem>>, vector<1x16x16x3xf32>,
    %c0_31 = arith.constant 0 : index
    %c1_32 = arith.constant 1 : index
    %c0_33 = arith.constant 0 : index
    %c0_34 = arith.constant 0 : index
    %10 = vector.load %arg8[%c0_31, %c1_32, %c0_33, %c0_34] : memref<1x18x18x3xf32, #tpu.memory_space<vmem>>, vector<1x16x16x3xf32>
    %c0_35 = arith.constant 0 : index
    %c0_36 = arith.constant 0 : index
    %c0_37 = arith.constant 0 : index
    %c9 = arith.constant 9 : index
    %11 = vector.load %arg9[%c0_35, %c0_36, %c0_37, %c9] : memref<1x16x16x27xf32, #tpu.memory_space<vmem>>, vector<1x16x16x3xf32>
    tpu.vector_store %arg9[%c0_35, %c0_36, %c0_37, %c9], %10 {strides = array<i32>} : memref<1x16x16x27xf32, #tpu.memory_space<vmem>>, vector<1x16x16x3xf32>,
    %c0_38 = arith.constant 0 : index
    %c1_39 = arith.constant 1 : index
    %c1_40 = arith.constant 1 : index
    %c0_41 = arith.constant 0 : index
    %12 = vector.load %arg8[%c0_38, %c1_39, %c1_40, %c0_41] : memref<1x18x18x3xf32, #tpu.memory_space<vmem>>, vector<1x16x16x3xf32>
    %c0_42 = arith.constant 0 : index
    %c0_43 = arith.constant 0 : index
    %c0_44 = arith.constant 0 : index
    %c12 = arith.constant 12 : index
    %13 = vector.load %arg9[%c0_42, %c0_43, %c0_44, %c12] : memref<1x16x16x27xf32, #tpu.memory_space<vmem>>, vector<1x16x16x3xf32>
    tpu.vector_store %arg9[%c0_42, %c0_43, %c0_44, %c12], %12 {strides = array<i32>} : memref<1x16x16x27xf32, #tpu.memory_space<vmem>>, vector<1x16x16x3xf32>,
    %c0_45 = arith.constant 0 : index
    %c1_46 = arith.constant 1 : index
    %c2_47 = arith.constant 2 : index
    %c0_48 = arith.constant 0 : index
    %14 = vector.load %arg8[%c0_45, %c1_46, %c2_47, %c0_48] : memref<1x18x18x3xf32, #tpu.memory_space<vmem>>, vector<1x16x16x3xf32>
    %c0_49 = arith.constant 0 : index
    %c0_50 = arith.constant 0 : index
    %c0_51 = arith.constant 0 : index
    %c15 = arith.constant 15 : index
    %15 = vector.load %arg9[%c0_49, %c0_50, %c0_51, %c15] : memref<1x16x16x27xf32, #tpu.memory_space<vmem>>, vector<1x16x16x3xf32>
    tpu.vector_store %arg9[%c0_49, %c0_50, %c0_51, %c15], %14 {strides = array<i32>} : memref<1x16x16x27xf32, #tpu.memory_space<vmem>>, vector<1x16x16x3xf32>,
    %c0_52 = arith.constant 0 : index
    %c2_53 = arith.constant 2 : index
    %c0_54 = arith.constant 0 : index
    %c0_55 = arith.constant 0 : index
    %16 = vector.load %arg8[%c0_52, %c2_53, %c0_54, %c0_55] : memref<1x18x18x3xf32, #tpu.memory_space<vmem>>, vector<1x16x16x3xf32>
    %c0_56 = arith.constant 0 : index
    %c0_57 = arith.constant 0 : index
    %c0_58 = arith.constant 0 : index
    %c18 = arith.constant 18 : index
    %17 = vector.load %arg9[%c0_56, %c0_57, %c0_58, %c18] : memref<1x16x16x27xf32, #tpu.memory_space<vmem>>, vector<1x16x16x3xf32>
    tpu.vector_store %arg9[%c0_56, %c0_57, %c0_58, %c18], %16 {strides = array<i32>} : memref<1x16x16x27xf32, #tpu.memory_space<vmem>>, vector<1x16x16x3xf32>,
    %c0_59 = arith.constant 0 : index
    %c2_60 = arith.constant 2 : index
    %c1_61 = arith.constant 1 : index
    %c0_62 = arith.constant 0 : index
    %18 = vector.load %arg8[%c0_59, %c2_60, %c1_61, %c0_62] : memref<1x18x18x3xf32, #tpu.memory_space<vmem>>, vector<1x16x16x3xf32>
    %c0_63 = arith.constant 0 : index
    %c0_64 = arith.constant 0 : index
    %c0_65 = arith.constant 0 : index
    %c21 = arith.constant 21 : index
    %19 = vector.load %arg9[%c0_63, %c0_64, %c0_65, %c21] : memref<1x16x16x27xf32, #tpu.memory_space<vmem>>, vector<1x16x16x3xf32>
    tpu.vector_store %arg9[%c0_63, %c0_64, %c0_65, %c21], %18 {strides = array<i32>} : memref<1x16x16x27xf32, #tpu.memory_space<vmem>>, vector<1x16x16x3xf32>,
    %c0_66 = arith.constant 0 : index
    %c2_67 = arith.constant 2 : index
    %c2_68 = arith.constant 2 : index
    %c0_69 = arith.constant 0 : index
    %20 = vector.load %arg8[%c0_66, %c2_67, %c2_68, %c0_69] : memref<1x18x18x3xf32, #tpu.memory_space<vmem>>, vector<1x16x16x3xf32>
    %c0_70 = arith.constant 0 : index
    %c0_71 = arith.constant 0 : index
    %c0_72 = arith.constant 0 : index
    %c24 = arith.constant 24 : index
    %21 = vector.load %arg9[%c0_70, %c0_71, %c0_72, %c24] : memref<1x16x16x27xf32, #tpu.memory_space<vmem>>, vector<1x16x16x3xf32>
    tpu.vector_store %arg9[%c0_70, %c0_71, %c0_72, %c24], %20 {strides = array<i32>} : memref<1x16x16x27xf32, #tpu.memory_space<vmem>>, vector<1x16x16x3xf32>,
    %c0_73 = arith.constant 0 : index
    %c0_74 = arith.constant 0 : index
    %c0_75 = arith.constant 0 : index
    %c0_76 = arith.constant 0 : index
    %22 = vector.load %arg9[%c0_73, %c0_74, %c0_75, %c0_76] : memref<1x16x16x27xf32, #tpu.memory_space<vmem>>, vector<1x16x16x27xf32>
    %23 = vector.shape_cast %22 : vector<1x16x16x27xf32> to vector<256x27xf32>
    %c0_77 = arith.constant 0 : index
    %c0_78 = arith.constant 0 : index
    %24 = vector.load %arg2[%c0_77, %c0_78] : memref<27x32xf32, #tpu.memory_space<vmem>>, vector<27x32xf32>
    %cst_79 = arith.constant dense<0.000000e+00> : vector<256x32xf32>
    %25 = tpu.matmul %23, %24, %cst_79 {dimension_numbers = #tpu.dot_dimension_numbers<[1], [0], [0], [1], [0, 0, 1, 1], [], []>} : vector<256x27xf32>, vector<27x32xf32>, vector<256x32xf32> -> vector<256x32xf32>
    %c0_80 = arith.constant 0 : index
    %c0_81 = arith.constant 0 : index
    %26 = vector.load %arg3[%c0_80, %c0_81] : memref<1x32xf32, #tpu.memory_space<vmem>>, vector<1x32xf32>
    %27 = vector.broadcast %26 : vector<1x32xf32> to vector<256x32xf32>
    %28 = arith.addf %25, %27 : vector<256x32xf32>
    %cst_82 = arith.constant 0.000000e+00 : f32
    %29 = vector.broadcast %cst_82 : f32 to vector<256x32xf32>
    %30 = arith.cmpf oge, %28, %29 : vector<256x32xf32>
    %cst_83 = arith.constant 1.000000e-01 : f32
    %31 = vector.broadcast %cst_83 : f32 to vector<256x32xf32>
    %32 = arith.mulf %31, %28 : vector<256x32xf32>
    %33 = arith.select %30, %28, %32 : vector<256x32xi1>, vector<256x32xf32>
    %34 = vector.shape_cast %33 : vector<256x32xf32> to vector<1x16x16x32xf32>
    %35 = vector.shape_cast %34 : vector<1x16x16x32xf32> to vector<8x2x8x2x32xf32>
    %36 = vector.extract_strided_slice %35 {offsets = [0, 0, 0, 0, 0], sizes = [8, 1, 8, 1, 32], strides = [1, 1, 1, 1, 1]} : vector<8x2x8x2x32xf32> to vector<8x1x8x1x32xf32>
    %37 = vector.shape_cast %36 : vector<8x1x8x1x32xf32> to vector<8x8x32xf32>
    %38 = vector.extract_strided_slice %35 {offsets = [0, 0, 0, 1, 0], sizes = [8, 1, 8, 1, 32], strides = [1, 1, 1, 1, 1]} : vector<8x2x8x2x32xf32> to vector<8x1x8x1x32xf32>
    %39 = vector.shape_cast %38 : vector<8x1x8x1x32xf32> to vector<8x8x32xf32>
    %40 = arith.maximumf %37, %39 : vector<8x8x32xf32>
    %41 = vector.extract_strided_slice %35 {offsets = [0, 1, 0, 0, 0], sizes = [8, 1, 8, 1, 32], strides = [1, 1, 1, 1, 1]} : vector<8x2x8x2x32xf32> to vector<8x1x8x1x32xf32>
    %42 = vector.shape_cast %41 : vector<8x1x8x1x32xf32> to vector<8x8x32xf32>
    %43 = vector.extract_strided_slice %35 {offsets = [0, 1, 0, 1, 0], sizes = [8, 1, 8, 1, 32], strides = [1, 1, 1, 1, 1]} : vector<8x2x8x2x32xf32> to vector<8x1x8x1x32xf32>
    %44 = vector.shape_cast %43 : vector<8x1x8x1x32xf32> to vector<8x8x32xf32>
    %45 = arith.maximumf %42, %44 : vector<8x8x32xf32>
    %46 = arith.maximumf %40, %45 : vector<8x8x32xf32>
    %47 = vector.shape_cast %46 : vector<8x8x32xf32> to vector<1x8x8x32xf32>
    %cst_84 = arith.constant 0.000000e+00 : f32
    %48 = vector.broadcast %cst_84 : f32 to vector<1x10x10x32xf32>
    %c0_85 = arith.constant 0 : index
    %c0_86 = arith.constant 0 : index
    %c0_87 = arith.constant 0 : index
    %c0_88 = arith.constant 0 : index
    %49 = vector.load %arg10[%c0_85, %c0_86, %c0_87, %c0_88] : memref<1x10x10x32xf32, #tpu.memory_space<vmem>>, vector<1x10x10x32xf32>
    tpu.vector_store %arg10[%c0_85, %c0_86, %c0_87, %c0_88], %48 {strides = array<i32>} : memref<1x10x10x32xf32, #tpu.memory_space<vmem>>, vector<1x10x10x32xf32>,
    %c0_89 = arith.constant 0 : index
    %c1_90 = arith.constant 1 : index
    %c1_91 = arith.constant 1 : index
    %c0_92 = arith.constant 0 : index
    %50 = vector.load %arg10[%c0_89, %c1_90, %c1_91, %c0_92] : memref<1x10x10x32xf32, #tpu.memory_space<vmem>>, vector<1x8x8x32xf32>
    tpu.vector_store %arg10[%c0_89, %c1_90, %c1_91, %c0_92], %47 {strides = array<i32>} : memref<1x10x10x32xf32, #tpu.memory_space<vmem>>, vector<1x8x8x32xf32>,
    %c0_93 = arith.constant 0 : index
    %c0_94 = arith.constant 0 : index
    %c0_95 = arith.constant 0 : index
    %c0_96 = arith.constant 0 : index
    %51 = vector.load %arg10[%c0_93, %c0_94, %c0_95, %c0_96] : memref<1x10x10x32xf32, #tpu.memory_space<vmem>>, vector<1x8x8x32xf32>
    %c0_97 = arith.constant 0 : index
    %c0_98 = arith.constant 0 : index
    %c0_99 = arith.constant 0 : index
    %c0_100 = arith.constant 0 : index
    %52 = vector.load %arg11[%c0_97, %c0_98, %c0_99, %c0_100] : memref<1x8x8x288xf32, #tpu.memory_space<vmem>>, vector<1x8x8x32xf32>
    tpu.vector_store %arg11[%c0_97, %c0_98, %c0_99, %c0_100], %51 {strides = array<i32>} : memref<1x8x8x288xf32, #tpu.memory_space<vmem>>, vector<1x8x8x32xf32>,
    %c0_101 = arith.constant 0 : index
    %c0_102 = arith.constant 0 : index
    %c1_103 = arith.constant 1 : index
    %c0_104 = arith.constant 0 : index
    %53 = vector.load %arg10[%c0_101, %c0_102, %c1_103, %c0_104] : memref<1x10x10x32xf32, #tpu.memory_space<vmem>>, vector<1x8x8x32xf32>
    %c0_105 = arith.constant 0 : index
    %c0_106 = arith.constant 0 : index
    %c0_107 = arith.constant 0 : index
    %c32 = arith.constant 32 : index
    %54 = vector.load %arg11[%c0_105, %c0_106, %c0_107, %c32] : memref<1x8x8x288xf32, #tpu.memory_space<vmem>>, vector<1x8x8x32xf32>
    tpu.vector_store %arg11[%c0_105, %c0_106, %c0_107, %c32], %53 {strides = array<i32>} : memref<1x8x8x288xf32, #tpu.memory_space<vmem>>, vector<1x8x8x32xf32>,
    %c0_108 = arith.constant 0 : index
    %c0_109 = arith.constant 0 : index
    %c2_110 = arith.constant 2 : index
    %c0_111 = arith.constant 0 : index
    %55 = vector.load %arg10[%c0_108, %c0_109, %c2_110, %c0_111] : memref<1x10x10x32xf32, #tpu.memory_space<vmem>>, vector<1x8x8x32xf32>
    %c0_112 = arith.constant 0 : index
    %c0_113 = arith.constant 0 : index
    %c0_114 = arith.constant 0 : index
    %c64 = arith.constant 64 : index
    %56 = vector.load %arg11[%c0_112, %c0_113, %c0_114, %c64] : memref<1x8x8x288xf32, #tpu.memory_space<vmem>>, vector<1x8x8x32xf32>
    tpu.vector_store %arg11[%c0_112, %c0_113, %c0_114, %c64], %55 {strides = array<i32>} : memref<1x8x8x288xf32, #tpu.memory_space<vmem>>, vector<1x8x8x32xf32>,
    %c0_115 = arith.constant 0 : index
    %c1_116 = arith.constant 1 : index
    %c0_117 = arith.constant 0 : index
    %c0_118 = arith.constant 0 : index
    %57 = vector.load %arg10[%c0_115, %c1_116, %c0_117, %c0_118] : memref<1x10x10x32xf32, #tpu.memory_space<vmem>>, vector<1x8x8x32xf32>
    %c0_119 = arith.constant 0 : index
    %c0_120 = arith.constant 0 : index
    %c0_121 = arith.constant 0 : index
    %c96 = arith.constant 96 : index
    %58 = vector.load %arg11[%c0_119, %c0_120, %c0_121, %c96] : memref<1x8x8x288xf32, #tpu.memory_space<vmem>>, vector<1x8x8x32xf32>
    tpu.vector_store %arg11[%c0_119, %c0_120, %c0_121, %c96], %57 {strides = array<i32>} : memref<1x8x8x288xf32, #tpu.memory_space<vmem>>, vector<1x8x8x32xf32>,
    %c0_122 = arith.constant 0 : index
    %c1_123 = arith.constant 1 : index
    %c1_124 = arith.constant 1 : index
    %c0_125 = arith.constant 0 : index
    %59 = vector.load %arg10[%c0_122, %c1_123, %c1_124, %c0_125] : memref<1x10x10x32xf32, #tpu.memory_space<vmem>>, vector<1x8x8x32xf32>
    %c0_126 = arith.constant 0 : index
    %c0_127 = arith.constant 0 : index
    %c0_128 = arith.constant 0 : index
    %c128 = arith.constant 128 : index
    %60 = vector.load %arg11[%c0_126, %c0_127, %c0_128, %c128] : memref<1x8x8x288xf32, #tpu.memory_space<vmem>>, vector<1x8x8x32xf32>
    tpu.vector_store %arg11[%c0_126, %c0_127, %c0_128, %c128], %59 {strides = array<i32>} : memref<1x8x8x288xf32, #tpu.memory_space<vmem>>, vector<1x8x8x32xf32>,
    %c0_129 = arith.constant 0 : index
    %c1_130 = arith.constant 1 : index
    %c2_131 = arith.constant 2 : index
    %c0_132 = arith.constant 0 : index
    %61 = vector.load %arg10[%c0_129, %c1_130, %c2_131, %c0_132] : memref<1x10x10x32xf32, #tpu.memory_space<vmem>>, vector<1x8x8x32xf32>
    %c0_133 = arith.constant 0 : index
    %c0_134 = arith.constant 0 : index
    %c0_135 = arith.constant 0 : index
    %c160 = arith.constant 160 : index
    %62 = vector.load %arg11[%c0_133, %c0_134, %c0_135, %c160] : memref<1x8x8x288xf32, #tpu.memory_space<vmem>>, vector<1x8x8x32xf32>
    tpu.vector_store %arg11[%c0_133, %c0_134, %c0_135, %c160], %61 {strides = array<i32>} : memref<1x8x8x288xf32, #tpu.memory_space<vmem>>, vector<1x8x8x32xf32>,
    %c0_136 = arith.constant 0 : index
    %c2_137 = arith.constant 2 : index
    %c0_138 = arith.constant 0 : index
    %c0_139 = arith.constant 0 : index
    %63 = vector.load %arg10[%c0_136, %c2_137, %c0_138, %c0_139] : memref<1x10x10x32xf32, #tpu.memory_space<vmem>>, vector<1x8x8x32xf32>
    %c0_140 = arith.constant 0 : index
    %c0_141 = arith.constant 0 : index
    %c0_142 = arith.constant 0 : index
    %c192 = arith.constant 192 : index
    %64 = vector.load %arg11[%c0_140, %c0_141, %c0_142, %c192] : memref<1x8x8x288xf32, #tpu.memory_space<vmem>>, vector<1x8x8x32xf32>
    tpu.vector_store %arg11[%c0_140, %c0_141, %c0_142, %c192], %63 {strides = array<i32>} : memref<1x8x8x288xf32, #tpu.memory_space<vmem>>, vector<1x8x8x32xf32>,
    %c0_143 = arith.constant 0 : index
    %c2_144 = arith.constant 2 : index
    %c1_145 = arith.constant 1 : index
    %c0_146 = arith.constant 0 : index
    %65 = vector.load %arg10[%c0_143, %c2_144, %c1_145, %c0_146] : memref<1x10x10x32xf32, #tpu.memory_space<vmem>>, vector<1x8x8x32xf32>
    %c0_147 = arith.constant 0 : index
    %c0_148 = arith.constant 0 : index
    %c0_149 = arith.constant 0 : index
    %c224 = arith.constant 224 : index
    %66 = vector.load %arg11[%c0_147, %c0_148, %c0_149, %c224] : memref<1x8x8x288xf32, #tpu.memory_space<vmem>>, vector<1x8x8x32xf32>
    tpu.vector_store %arg11[%c0_147, %c0_148, %c0_149, %c224], %65 {strides = array<i32>} : memref<1x8x8x288xf32, #tpu.memory_space<vmem>>, vector<1x8x8x32xf32>,
    %c0_150 = arith.constant 0 : index
    %c2_151 = arith.constant 2 : index
    %c2_152 = arith.constant 2 : index
    %c0_153 = arith.constant 0 : index
    %67 = vector.load %arg10[%c0_150, %c2_151, %c2_152, %c0_153] : memref<1x10x10x32xf32, #tpu.memory_space<vmem>>, vector<1x8x8x32xf32>
    %c0_154 = arith.constant 0 : index
    %c0_155 = arith.constant 0 : index
    %c0_156 = arith.constant 0 : index
    %c256 = arith.constant 256 : index
    %68 = vector.load %arg11[%c0_154, %c0_155, %c0_156, %c256] : memref<1x8x8x288xf32, #tpu.memory_space<vmem>>, vector<1x8x8x32xf32>
    tpu.vector_store %arg11[%c0_154, %c0_155, %c0_156, %c256], %67 {strides = array<i32>} : memref<1x8x8x288xf32, #tpu.memory_space<vmem>>, vector<1x8x8x32xf32>,
    %c0_157 = arith.constant 0 : index
    %c0_158 = arith.constant 0 : index
    %c0_159 = arith.constant 0 : index
    %c0_160 = arith.constant 0 : index
    %69 = vector.load %arg11[%c0_157, %c0_158, %c0_159, %c0_160] : memref<1x8x8x288xf32, #tpu.memory_space<vmem>>, vector<1x8x8x288xf32>
    %70 = vector.shape_cast %69 : vector<1x8x8x288xf32> to vector<64x288xf32>
    %c0_161 = arith.constant 0 : index
    %c0_162 = arith.constant 0 : index
    %71 = vector.load %arg4[%c0_161, %c0_162] : memref<288x64xf32, #tpu.memory_space<vmem>>, vector<288x64xf32>
    %cst_163 = arith.constant dense<0.000000e+00> : vector<64x64xf32>
    %72 = tpu.matmul %70, %71, %cst_163 {dimension_numbers = #tpu.dot_dimension_numbers<[1], [0], [0], [1], [0, 0, 1, 1], [], []>} : vector<64x288xf32>, vector<288x64xf32>, vector<64x64xf32> -> vector<64x64xf32>
    %c0_164 = arith.constant 0 : index
    %c0_165 = arith.constant 0 : index
    %73 = vector.load %arg5[%c0_164, %c0_165] : memref<1x64xf32, #tpu.memory_space<vmem>>, vector<1x64xf32>
    %74 = vector.broadcast %73 : vector<1x64xf32> to vector<64x64xf32>
    %75 = arith.addf %72, %74 : vector<64x64xf32>
    %cst_166 = arith.constant 0.000000e+00 : f32
    %76 = vector.broadcast %cst_166 : f32 to vector<64x64xf32>
    %77 = arith.cmpf oge, %75, %76 : vector<64x64xf32>
    %cst_167 = arith.constant 1.000000e-01 : f32
    %78 = vector.broadcast %cst_167 : f32 to vector<64x64xf32>
    %79 = arith.mulf %78, %75 : vector<64x64xf32>
    %80 = arith.select %77, %75, %79 : vector<64x64xi1>, vector<64x64xf32>
    %81 = vector.shape_cast %80 : vector<64x64xf32> to vector<1x8x8x64xf32>
    %82 = vector.shape_cast %81 : vector<1x8x8x64xf32> to vector<4x2x4x2x64xf32>
    %83 = vector.extract_strided_slice %82 {offsets = [0, 0, 0, 0, 0], sizes = [4, 1, 4, 1, 64], strides = [1, 1, 1, 1, 1]} : vector<4x2x4x2x64xf32> to vector<4x1x4x1x64xf32>
    %84 = vector.shape_cast %83 : vector<4x1x4x1x64xf32> to vector<4x4x64xf32>
    %85 = vector.extract_strided_slice %82 {offsets = [0, 0, 0, 1, 0], sizes = [4, 1, 4, 1, 64], strides = [1, 1, 1, 1, 1]} : vector<4x2x4x2x64xf32> to vector<4x1x4x1x64xf32>
    %86 = vector.shape_cast %85 : vector<4x1x4x1x64xf32> to vector<4x4x64xf32>
    %87 = arith.maximumf %84, %86 : vector<4x4x64xf32>
    %88 = vector.extract_strided_slice %82 {offsets = [0, 1, 0, 0, 0], sizes = [4, 1, 4, 1, 64], strides = [1, 1, 1, 1, 1]} : vector<4x2x4x2x64xf32> to vector<4x1x4x1x64xf32>
    %89 = vector.shape_cast %88 : vector<4x1x4x1x64xf32> to vector<4x4x64xf32>
    %90 = vector.extract_strided_slice %82 {offsets = [0, 1, 0, 1, 0], sizes = [4, 1, 4, 1, 64], strides = [1, 1, 1, 1, 1]} : vector<4x2x4x2x64xf32> to vector<4x1x4x1x64xf32>
    %91 = vector.shape_cast %90 : vector<4x1x4x1x64xf32> to vector<4x4x64xf32>
    %92 = arith.maximumf %89, %91 : vector<4x4x64xf32>
    %93 = arith.maximumf %87, %92 : vector<4x4x64xf32>
    %94 = vector.shape_cast %93 : vector<4x4x64xf32> to vector<1x4x4x64xf32>
    %cst_168 = arith.constant dense<0.000000e+00> : vector<1x4x64xf32>
    %95 = vector.multi_reduction <add>, %94, %cst_168 [2] : vector<1x4x4x64xf32> to vector<1x4x64xf32>
    %cst_169 = arith.constant dense<0.000000e+00> : vector<1x64xf32>
    %96 = vector.multi_reduction <add>, %95, %cst_169 [1] : vector<1x4x64xf32> to vector<1x64xf32>
    %cst_170 = arith.constant 6.250000e-02 : f32
    %97 = vector.broadcast %cst_170 : f32 to vector<1x64xf32>
    %98 = arith.mulf %96, %97 : vector<1x64xf32>
    %c0_171 = arith.constant 0 : index
    %c0_172 = arith.constant 0 : index
    %99 = vector.load %arg6[%c0_171, %c0_172] : memref<64x128xf32, #tpu.memory_space<vmem>>, vector<64x128xf32>
    %cst_173 = arith.constant dense<0.000000e+00> : vector<1x128xf32>
    %100 = tpu.matmul %98, %99, %cst_173 {dimension_numbers = #tpu.dot_dimension_numbers<[1], [0], [0], [1], [0, 0, 1, 1], [], []>} : vector<1x64xf32>, vector<64x128xf32>, vector<1x128xf32> -> vector<1x128xf32>
    %101 = vector.shape_cast %100 : vector<1x128xf32> to vector<1x1x128xf32>
    %c0_174 = arith.constant 0 : index
    %c0_175 = arith.constant 0 : index
    %c0_176 = arith.constant 0 : index
    %102 = vector.load %arg7[%c0_174, %c0_175, %c0_176] : memref<1x1x128xf32, #tpu.memory_space<vmem>>, vector<1x1x128xf32>
    tpu.vector_store %arg7[%c0_174, %c0_175, %c0_176], %101 {strides = array<i32>} : memref<1x1x128xf32, #tpu.memory_space<vmem>>, vector<1x1x128xf32>,
    return
  }
  func.func @transform_0(%arg0: i32) -> (i32, i32, i32, i32) {
    %c0_i32 = arith.constant 0 : i32
    %c0_i32_0 = arith.constant 0 : i32
    %c0_i32_1 = arith.constant 0 : i32
    %c0_i32_2 = arith.constant 0 : i32
    return %arg0, %c0_i32, %c0_i32_0, %c0_i32_1 : i32, i32, i32, i32
  }
  func.func @transform_1(%arg0: i32) -> (i32, i32) {
    %c0_i32 = arith.constant 0 : i32
    %c0_i32_0 = arith.constant 0 : i32
    %c0_i32_1 = arith.constant 0 : i32
    return %c0_i32, %c0_i32_0 : i32, i32
  }
  func.func @transform_2(%arg0: i32) -> (i32, i32) {
    %c0_i32 = arith.constant 0 : i32
    %c0_i32_0 = arith.constant 0 : i32
    %c0_i32_1 = arith.constant 0 : i32
    return %c0_i32, %c0_i32_0 : i32, i32
  }
  func.func @transform_3(%arg0: i32) -> (i32, i32) {
    %c0_i32 = arith.constant 0 : i32
    %c0_i32_0 = arith.constant 0 : i32
    %c0_i32_1 = arith.constant 0 : i32
    return %c0_i32, %c0_i32_0 : i32, i32
  }
  func.func @transform_4(%arg0: i32) -> (i32, i32) {
    %c0_i32 = arith.constant 0 : i32
    %c0_i32_0 = arith.constant 0 : i32
    %c0_i32_1 = arith.constant 0 : i32
    return %c0_i32, %c0_i32_0 : i32, i32
  }
  func.func @transform_5(%arg0: i32) -> (i32, i32) {
    %c0_i32 = arith.constant 0 : i32
    %c0_i32_0 = arith.constant 0 : i32
    %c0_i32_1 = arith.constant 0 : i32
    return %c0_i32, %c0_i32_0 : i32, i32
  }
  func.func @transform_6(%arg0: i32) -> (i32, i32, i32) {
    %c0_i32 = arith.constant 0 : i32
    %c0_i32_0 = arith.constant 0 : i32
    %c0_i32_1 = arith.constant 0 : i32
    return %arg0, %c0_i32, %c0_i32_0 : i32, i32, i32
  }
}

</mosaic_0001>

<llo_original>
// kernel: binary_cnn_forward.1
$region0: #{binary_cnn_forward.1}
  #allocation0 [shape = 'u32[]', space=smem, size = 0x4, offset = 0x4, fixed_abs, tag = 'smem constant byte address 0x4 - core index']
  #allocation1 [shape = 'u32[144,128]{1,0:T(1,128)}', space=vmem, size = 0x12000, scoped, tag = 'internal scratch']
  #allocation2 [shape = 'f32[1,18,18,3]{3,2,1,0:T(8,128)}', space=vmem, size = 0x36000, scoped, tag = 'scratch operand']
  #allocation3 [shape = 'f32[1,16,16,27]{3,2,1,0:T(8,128)}', space=vmem, size = 0x20000, scoped, tag = 'scratch operand']
  #allocation4 [shape = 'f32[1,10,10,32]{3,2,1,0:T(8,128)}', space=vmem, size = 0x14000, scoped, tag = 'scratch operand']
  #allocation5 [shape = 'f32[1,8,8,288]{3,2,1,0:T(8,128)}', space=vmem, size = 0x18000, scoped, tag = 'scratch operand']
  %s0 = inlined_call_operand.vmem [shape: f32[2,16,16,3], index: 0, kind: input, shape index: {}]
  %s1 = inlined_call_operand.vmem [shape: f32[27,32], index: 1, kind: input, shape index: {}]
  %s2 = inlined_call_operand.vmem [shape: f32[1,32], index: 2, kind: input, shape index: {}]
  %s3 = inlined_call_operand.vmem [shape: f32[288,64], index: 3, kind: input, shape index: {}]
  %s4 = inlined_call_operand.vmem [shape: f32[1,64], index: 4, kind: input, shape index: {}]
  %s5 = inlined_call_operand.vmem [shape: f32[64,128], index: 5, kind: input, shape index: {}]
  %s6 = inlined_call_operand.vmem [shape: f32[2,1,128], index: 6, kind: output, shape index: {}]
  %s7 = sld [smem:[#allocation0]]
  $region57: #{binary_cnn_forward.1} parent=0
    _
  %s9 = ssub.s32 1, %s7
  %s10 = scalar_select 0, %s9, %s7
  loop: start=0, step=1, limit=4
  $region2: #{binary_cnn_forward.1} parent=0 // loop_pre_header
    _
  $region3: #{binary_cnn_forward.1} parent=0 // loop_header
    %s12 = sphi 0, %s16
    %p13 = scmp.ge.s32.totalorder %s12, 4
    %s22 = sphi 0, %s24
    %s25 = sphi 0, %s22
    %s26 = sphi 0, %s25
    %s42 = sphi 0, %s26
    %s46 = sphi 0, %s46
    %s48 = sphi 0, %s46
    %s49 = sphi 0, %s48
    %s63 = sphi 0, %s49
    %s67 = sphi 0, %s67
    %s69 = sphi 0, %s67
    %s70 = sphi 0, %s69
    %s84 = sphi 0, %s70
    %s88 = sphi 0, %s88
    %s90 = sphi 0, %s88
    %s91 = sphi 0, %s90
    %s105 = sphi 0, %s91
    %s109 = sphi 0, %s109
    %s111 = sphi 0, %s109
    %s112 = sphi 0, %s111
    %s126 = sphi 0, %s112
    %s130 = sphi 0, %s130
    %s132 = sphi 0, %s130
    %s133 = sphi 0, %s132
    %s147 = sphi 0, %s133
    %s153 = sphi 0, %s155
    %s156 = sphi 0, %s153
    %s157 = sphi 0, %s156
    %s173 = sphi 0, %s157
  $region4: #{binary_cnn_forward.1} parent=0 // loop_header_branch
    %15 = sbr.rel (%p13) target = $region8
  $region5: #{binary_cnn_forward.1} parent=0 // loop_body
    %s17 = ssub.s32 %s12, 1
    %s18 = ssub.s32 %s12, 2
    %s19 = sadd.s32 %s12, 1
    %s20 = ssub.s32 %s12, %s19
    %p21 = scmp.eq.s32.totalorder %s20, 0
    %s23 = sadd.s32 %s22, 1
    %s24 = scalar_select %p21, %s22, %s23
    %p27 = pneg %p21
    %p28 = scmp.eq.s32.totalorder %s12, 1
    %p29 = por %p27, %p28
    %p30 = scmp.ne.s32.totalorder %s22, %s25
    %p31 = scmp.eq.s32.totalorder %s12, 0
    %p32 = por %p30, %p31
    %p33 = scmp.ne.s32.totalorder %s22, %s25
    %p34 = scmp.eq.s32.totalorder %s17, 1
    %p35 = por %p33, %p34
    %p36 = scmp.ne.s32.totalorder %s25, %s26
    %p37 = scmp.eq.s32.totalorder %s17, 0
    %p38 = por %p36, %p37
    %p39 = scmp.ne.s32.totalorder %s25, %s26
    %p40 = scmp.eq.s32.totalorder %s18, 1
    %p41 = por %p39, %p40
    %p43 = scmp.ne.s32.totalorder %s26, %s42
    %p44 = scmp.eq.s32.totalorder %s18, 0
    %p45 = por %p43, %p44
    %s47 = sadd.s32 %s46, 1
    %p50 = scmp.eq.s32.totalorder %s12, 1
    %p51 = scmp.ne.s32.totalorder %s46, %s48
    %p52 = scmp.eq.s32.totalorder %s12, 0
    %p53 = por %p51, %p52
    %p54 = scmp.ne.s32.totalorder %s46, %s48
    %p55 = scmp.eq.s32.totalorder %s17, 1
    %p56 = por %p54, %p55
    %p57 = scmp.ne.s32.totalorder %s48, %s49
    %p58 = scmp.eq.s32.totalorder %s17, 0
    %p59 = por %p57, %p58
    %p60 = scmp.ne.s32.totalorder %s48, %s49
    %p61 = scmp.eq.s32.totalorder %s18, 1
    %p62 = por %p60, %p61
    %p64 = scmp.ne.s32.totalorder %s49, %s63
    %p65 = scmp.eq.s32.totalorder %s18, 0
    %p66 = por %p64, %p65
    %s68 = sadd.s32 %s67, 1
    %p71 = scmp.eq.s32.totalorder %s12, 1
    %p72 = scmp.ne.s32.totalorder %s67, %s69
    %p73 = scmp.eq.s32.totalorder %s12, 0
    %p74 = por %p72, %p73
    %p75 = scmp.ne.s32.totalorder %s67, %s69
    %p76 = scmp.eq.s32.totalorder %s17, 1
    %p77 = por %p75, %p76
    %p78 = scmp.ne.s32.totalorder %s69, %s70
    %p79 = scmp.eq.s32.totalorder %s17, 0
    %p80 = por %p78, %p79
    %p81 = scmp.ne.s32.totalorder %s69, %s70
    %p82 = scmp.eq.s32.totalorder %s18, 1
    %p83 = por %p81, %p82
    %p85 = scmp.ne.s32.totalorder %s70, %s84
    %p86 = scmp.eq.s32.totalorder %s18, 0
    %p87 = por %p85, %p86
    %s89 = sadd.s32 %s88, 1
    %p92 = scmp.eq.s32.totalorder %s12, 1
    %p93 = scmp.ne.s32.totalorder %s88, %s90
    %p94 = scmp.eq.s32.totalorder %s12, 0
    %p95 = por %p93, %p94
    %p96 = scmp.ne.s32.totalorder %s88, %s90
    %p97 = scmp.eq.s32.totalorder %s17, 1
    %p98 = por %p96, %p97
    %p99 = scmp.ne.s32.totalorder %s90, %s91
    %p100 = scmp.eq.s32.totalorder %s17, 0
    %p101 = por %p99, %p100
    %p102 = scmp.ne.s32.totalorder %s90, %s91
    %p103 = scmp.eq.s32.totalorder %s18, 1
    %p104 = por %p102, %p103
    %p106 = scmp.ne.s32.totalorder %s91, %s105
    %p107 = scmp.eq.s32.totalorder %s18, 0
    %p108 = por %p106, %p107
    %s110 = sadd.s32 %s109, 1
    %p113 = scmp.eq.s32.totalorder %s12, 1
    %p114 = scmp.ne.s32.totalorder %s109, %s111
    %p115 = scmp.eq.s32.totalorder %s12, 0
    %p116 = por %p114, %p115
    %p117 = scmp.ne.s32.totalorder %s109, %s111
    %p118 = scmp.eq.s32.totalorder %s17, 1
    %p119 = por %p117, %p118
    %p120 = scmp.ne.s32.totalorder %s111, %s112
    %p121 = scmp.eq.s32.totalorder %s17, 0
    %p122 = por %p120, %p121
    %p123 = scmp.ne.s32.totalorder %s111, %s112
    %p124 = scmp.eq.s32.totalorder %s18, 1
    %p125 = por %p123, %p124
    %p127 = scmp.ne.s32.totalorder %s112, %s126
    %p128 = scmp.eq.s32.totalorder %s18, 0
    %p129 = por %p127, %p128
    %s131 = sadd.s32 %s130, 1
    %p134 = scmp.eq.s32.totalorder %s12, 1
    %p135 = scmp.ne.s32.totalorder %s130, %s132
    %p136 = scmp.eq.s32.totalorder %s12, 0
    %p137 = por %p135, %p136
    %p138 = scmp.ne.s32.totalorder %s130, %s132
    %p139 = scmp.eq.s32.totalorder %s17, 1
    %p140 = por %p138, %p139
    %p141 = scmp.ne.s32.totalorder %s132, %s133
    %p142 = scmp.eq.s32.totalorder %s17, 0
    %p143 = por %p141, %p142
    %p144 = scmp.ne.s32.totalorder %s132, %s133
    %p145 = scmp.eq.s32.totalorder %s18, 1
    %p146 = por %p144, %p145
    %p148 = scmp.ne.s32.totalorder %s133, %s147
    %p149 = scmp.eq.s32.totalorder %s18, 0
    %p150 = por %p148, %p149
    %s151 = ssub.s32 %s12, %s19
    %p152 = scmp.eq.s32.totalorder %s151, 0
    %s154 = sadd.s32 %s153, 1
    %s155 = scalar_select %p152, %s153, %s154
    %p158 = pneg %p152
    %p159 = scmp.eq.s32.totalorder %s12, 1
    %p160 = por %p158, %p159
    %p161 = scmp.ne.s32.totalorder %s153, %s156
    %p162 = scmp.eq.s32.totalorder %s12, 0
    %p163 = por %p161, %p162
    %p164 = scmp.ne.s32.totalorder %s153, %s156
    %p165 = scmp.eq.s32.totalorder %s17, 1
    %p166 = por %p164, %p165
    %p167 = scmp.ne.s32.totalorder %s156, %s157
    %p168 = scmp.eq.s32.totalorder %s17, 0
    %p169 = por %p167, %p168
    %p170 = scmp.ne.s32.totalorder %s156, %s157
    %p171 = scmp.eq.s32.totalorder %s18, 1
    %p172 = por %p170, %p171
    %p174 = scmp.ne.s32.totalorder %s157, %s173
    %p175 = scmp.eq.s32.totalorder %s18, 0
    %p176 = por %p174, %p175
    %p177 = scmp.le.s32.totalorder 1, %s12
    %p178 = scmp.lt.s32.totalorder %s12, 3
    %p179 = pnand %p177, %p178
    %p180 = pneg %p179
    // Predicated region
    $region9: #{binary_cnn_forward.1} parent=5 // pred_check
      _
    $region10: #{binary_cnn_forward.1} parent=5 // pred_check_branch
      %182 = sbr.rel (%p179) target = $region12
    $region11: #{binary_cnn_forward.1} parent=5 // pred_region
      %s183 = ssub.s32 %s12, 1
      // Predicated region
      $region13: #{binary_cnn_forward.1} parent=11 // pred_check
        %p184 = pneg %p59
      $region14: #{binary_cnn_forward.1} parent=11 // pred_check_branch
        %186 = sbr.rel (%p184) target = $region16
      $region15: #{binary_cnn_forward.1} parent=11 // pred_region
        _
      $region16: #{binary_cnn_forward.1} parent=11 // pred_fallthru
        _
      // Predicated region
      $region17: #{binary_cnn_forward.1} parent=11 // pred_check
        %p187 = pneg %p80
      $region18: #{binary_cnn_forward.1} parent=11 // pred_check_branch
        %189 = sbr.rel (%p187) target = $region20
      $region19: #{binary_cnn_forward.1} parent=11 // pred_region
        _
      $region20: #{binary_cnn_forward.1} parent=11 // pred_fallthru
        _
      // Predicated region
      $region21: #{binary_cnn_forward.1} parent=11 // pred_check
        %p190 = pneg %p101
      $region22: #{binary_cnn_forward.1} parent=11 // pred_check_branch
        %192 = sbr.rel (%p190) target = $region24
      $region23: #{binary_cnn_forward.1} parent=11 // pred_region
        _
      $region24: #{binary_cnn_forward.1} parent=11 // pred_fallthru
        _
      // Predicated region
      $region25: #{binary_cnn_forward.1} parent=11 // pred_check
        %p193 = pneg %p122
      $region26: #{binary_cnn_forward.1} parent=11 // pred_check_branch
        %195 = sbr.rel (%p193) target = $region28
      $region27: #{binary_cnn_forward.1} parent=11 // pred_region
        _
      $region28: #{binary_cnn_forward.1} parent=11 // pred_fallthru
        _
      // Predicated region
      $region29: #{binary_cnn_forward.1} parent=11 // pred_check
        %p196 = pneg %p143
      $region30: #{binary_cnn_forward.1} parent=11 // pred_check_branch
        %198 = sbr.rel (%p196) target = $region32
      $region31: #{binary_cnn_forward.1} parent=11 // pred_region
        _
      $region32: #{binary_cnn_forward.1} parent=11 // pred_fallthru
        _
    $region12: #{binary_cnn_forward.1} parent=5 // pred_fallthru
      _
    %p199 = scmp.lt.s32.totalorder %s12, 2
    // Predicated region
    $region33: #{binary_cnn_forward.1} parent=5 // pred_check
      %p200 = pneg %p199
    $region34: #{binary_cnn_forward.1} parent=5 // pred_check_branch
      %202 = sbr.rel (%p200) target = $region36
    $region35: #{binary_cnn_forward.1} parent=5 // pred_region
      // Predicated region
      $region37: #{binary_cnn_forward.1} parent=35 // pred_check
        %p203 = pneg %p32
      $region38: #{binary_cnn_forward.1} parent=35 // pred_check_branch
        %205 = sbr.rel (%p203) target = $region40
      $region39: #{binary_cnn_forward.1} parent=35 // pred_region
        %p206 = scmp.lt.s32.totalorder %s12, 1
        %s207 = scalar_select %p206, %s12, 1
        %s208 = smul.addr %s207, 32
        %s209 = smul.addr %s208, 8
        %s210 = scalar_lea.vmem %s0, %s209
      $region40: #{binary_cnn_forward.1} parent=35 // pred_fallthru
        _
    $region36: #{binary_cnn_forward.1} parent=5 // pred_fallthru
      _
    %p211 = scmp.le.s32.totalorder 1, %s12
    %p212 = scmp.lt.s32.totalorder %s12, 3
    %p213 = pnand %p211, %p212
    %p214 = pneg %p213
    // Predicated region
    $region41: #{binary_cnn_forward.1} parent=5 // pred_check
      _
    $region42: #{binary_cnn_forward.1} parent=5 // pred_check_branch
      %216 = sbr.rel (%p213) target = $region44
    $region43: #{binary_cnn_forward.1} parent=5 // pred_region
      %s217 = ssub.s32 %s12, 1
      %p218 = scmp.lt.s32.totalorder %s17, 1
      %s219 = scalar_select %p218, %s17, 1
      %s220 = smul.addr %s219, 32
      %s221 = smul.addr %s220, 8
      %s222 = scalar_lea.vmem %s0, %s221
      %p223 = pneg %p38
      %p224 = pneg %p35
      %p225 = pneg %p59
      %p226 = pneg %p56
      %p227 = pneg %p80
      %p228 = pneg %p77
      %p229 = pneg %p101
      %p230 = pneg %p98
      %p231 = pneg %p122
      %p232 = pneg %p119
      %p233 = pneg %p143
      %p234 = pneg %p140
      %p235 = pneg %p169
      %p236 = pneg %p166
      %p237 = scmp.lt.s32.totalorder %s17, 1
      %s238 = scalar_select %p237, %s17, 1
      %s239 = scalar_lea.vmem %s6, %s238
      %p240 = scmp.lt.s32.totalorder %s17, 1
      %s241 = scalar_select %p240, %s17, 1
      %s242 = smul.addr %s241, 32
      %s243 = smul.addr %s242, 8
      %s244 = scalar_lea.vmem %s0, %s243
      %p245 = scmp.lt.s32.totalorder %s17, 1
      %s246 = scalar_select %p245, %s17, 1
      %s247 = scalar_lea.vmem %s6, %s246
      %vm248 = vcmask 23552
      %249 = vst.msk [vmem:[#allocation2] sm:$0xff] %vm248, 0.0
      %250 = vst.msk [vmem:[#allocation2 + $0x8] sm:$0xff] %vm248, 0.0
      %vm251 = vcmask 17408
      %252 = vst.msk [vmem:[#allocation2 + $0x10] sm:$0x3] %vm251, 0.0
      %253 = vst.msk [vmem:[#allocation2 + $0x18] sm:$0xff] %vm248, 0.0
      %254 = vst.msk [vmem:[#allocation2 + $0x20] sm:$0xff] %vm248, 0.0
      %255 = vst.msk [vmem:[#allocation2 + $0x28] sm:$0x3] %vm251, 0.0
      %256 = vst.msk [vmem:[#allocation2 + $0x30] sm:$0xff] %vm248, 0.0
      %257 = vst.msk [vmem:[#allocation2 + $0x38] sm:$0xff] %vm248, 0.0
      %258 = vst.msk [vmem:[#allocation2 + $0x40] sm:$0x3] %vm251, 0.0
      %259 = vst.msk [vmem:[#allocation2 + $0x48] sm:$0xff] %vm248, 0.0
      %260 = vst.msk [vmem:[#allocation2 + $0x50] sm:$0xff] %vm248, 0.0
      %261 = vst.msk [vmem:[#allocation2 + $0x58] sm:$0x3] %vm251, 0.0
      %262 = vst.msk [vmem:[#allocation2 + $0x60] sm:$0xff] %vm248, 0.0
      %263 = vst.msk [vmem:[#allocation2 + $0x68] sm:$0xff] %vm248, 0.0
      %264 = vst.msk [vmem:[#allocation2 + $0x70] sm:$0x3] %vm251, 0.0
      %265 = vst.msk [vmem:[#allocation2 + $0x78] sm:$0xff] %vm248, 0.0
      %266 = vst.msk [vmem:[#allocation2 + $0x80] sm:$0xff] %vm248, 0.0
      %267 = vst.msk [vmem:[#allocation2 + $0x88] sm:$0x3] %vm251, 0.0
      %268 = vst.msk [vmem:[#allocation2 + $0x90] sm:$0xff] %vm248, 0.0
      %269 = vst.msk [vmem:[#allocation2 + $0x98] sm:$0xff] %vm248, 0.0
      %270 = vst.msk [vmem:[#allocation2 + $0xa0] sm:$0x3] %vm251, 0.0
      %271 = vst.msk [vmem:[#allocation2 + $0xa8] sm:$0xff] %vm248, 0.0
      %272 = vst.msk [vmem:[#allocation2 + $0xb0] sm:$0xff] %vm248, 0.0
      %273 = vst.msk [vmem:[#allocation2 + $0xb8] sm:$0x3] %vm251, 0.0
      %274 = vst.msk [vmem:[#allocation2 + $0xc0] sm:$0xff] %vm248, 0.0
      %275 = vst.msk [vmem:[#allocation2 + $0xc8] sm:$0xff] %vm248, 0.0
      %276 = vst.msk [vmem:[#allocation2 + $0xd0] sm:$0x3] %vm251, 0.0
      %277 = vst.msk [vmem:[#allocation2 + $0xd8] sm:$0xff] %vm248, 0.0
      %278 = vst.msk [vmem:[#allocation2 + $0xe0] sm:$0xff] %vm248, 0.0
      %279 = vst.msk [vmem:[#allocation2 + $0xe8] sm:$0x3] %vm251, 0.0
      %280 = vst.msk [vmem:[#allocation2 + $0xf0] sm:$0xff] %vm248, 0.0
      %281 = vst.msk [vmem:[#allocation2 + $0xf8] sm:$0xff] %vm248, 0.0
      %282 = vst.msk [vmem:[#allocation2 + $0x100] sm:$0x3] %vm251, 0.0
      %283 = vst.msk [vmem:[#allocation2 + $0x108] sm:$0xff] %vm248, 0.0
      %284 = vst.msk [vmem:[#allocation2 + $0x110] sm:$0xff] %vm248, 0.0
      %285 = vst.msk [vmem:[#allocation2 + $0x118] sm:$0x3] %vm251, 0.0
      %286 = vst.msk [vmem:[#allocation2 + $0x120] sm:$0xff] %vm248, 0.0
      %287 = vst.msk [vmem:[#allocation2 + $0x128] sm:$0xff] %vm248, 0.0
      %288 = vst.msk [vmem:[#allocation2 + $0x130] sm:$0x3] %vm251, 0.0
      %289 = vst.msk [vmem:[#allocation2 + $0x138] sm:$0xff] %vm248, 0.0
      %290 = vst.msk [vmem:[#allocation2 + $0x140] sm:$0xff] %vm248, 0.0
      %291 = vst.msk [vmem:[#allocation2 + $0x148] sm:$0x3] %vm251, 0.0
      %292 = vst.msk [vmem:[#allocation2 + $0x150] sm:$0xff] %vm248, 0.0
      %293 = vst.msk [vmem:[#allocation2 + $0x158] sm:$0xff] %vm248, 0.0
      %294 = vst.msk [vmem:[#allocation2 + $0x160] sm:$0x3] %vm251, 0.0
      %295 = vst.msk [vmem:[#allocation2 + $0x168] sm:$0xff] %vm248, 0.0
      %296 = vst.msk [vmem:[#allocation2 + $0x170] sm:$0xff] %vm248, 0.0
      %297 = vst.msk [vmem:[#allocation2 + $0x178] sm:$0x3] %vm251, 0.0
      %298 = vst.msk [vmem:[#allocation2 + $0x180] sm:$0xff] %vm248, 0.0
      %299 = vst.msk [vmem:[#allocation2 + $0x188] sm:$0xff] %vm248, 0.0
      %300 = vst.msk [vmem:[#allocation2 + $0x190] sm:$0x3] %vm251, 0.0
      %301 = vst.msk [vmem:[#allocation2 + $0x198] sm:$0xff] %vm248, 0.0
      %302 = vst.msk [vmem:[#allocation2 + $0x1a0] sm:$0xff] %vm248, 0.0
      %303 = vst.msk [vmem:[#allocation2 + $0x1a8] sm:$0x3] %vm251, 0.0
      %v304 = vld [vmem:[%s244] sm:$0xff]
      %v305 = vld [vmem:[%s244 + $0x8] sm:$0xff]
      %v306 = vld [vmem:[%s244 + $0x10] sm:$0xff]
      %v307 = vld [vmem:[%s244 + $0x18] sm:$0xff]
      %v308 = vld [vmem:[%s244 + $0x20] sm:$0xff]
      %v309 = vld [vmem:[%s244 + $0x28] sm:$0xff]
      %v310 = vld [vmem:[%s244 + $0x30] sm:$0xff]
      %v311 = vld [vmem:[%s244 + $0x38] sm:$0xff]
      %v312 = vld [vmem:[%s244 + $0x40] sm:$0xff]
      %v313 = vld [vmem:[%s244 + $0x48] sm:$0xff]
      %v314 = vld [vmem:[%s244 + $0x50] sm:$0xff]
      %v315 = vld [vmem:[%s244 + $0x58] sm:$0xff]
      %v316 = vld [vmem:[%s244 + $0x60] sm:$0xff]
      %v317 = vld [vmem:[%s244 + $0x68] sm:$0xff]
      %v318 = vld [vmem:[%s244 + $0x70] sm:$0xff]
      %v319 = vld [vmem:[%s244 + $0x78] sm:$0xff]
      %v320 = vld [vmem:[%s244 + $0x80] sm:$0xff]
      %v321 = vld [vmem:[%s244 + $0x88] sm:$0xff]
      %v322 = vld [vmem:[%s244 + $0x90] sm:$0xff]
      %v323 = vld [vmem:[%s244 + $0x98] sm:$0xff]
      %v324 = vld [vmem:[%s244 + $0xa0] sm:$0xff]
      %v325 = vld [vmem:[%s244 + $0xa8] sm:$0xff]
      %v326 = vld [vmem:[%s244 + $0xb0] sm:$0xff]
      %v327 = vld [vmem:[%s244 + $0xb8] sm:$0xff]
      %v328 = vld [vmem:[%s244 + $0xc0] sm:$0xff]
      %v329 = vld [vmem:[%s244 + $0xc8] sm:$0xff]
      %v330 = vld [vmem:[%s244 + $0xd0] sm:$0xff]
      %v331 = vld [vmem:[%s244 + $0xd8] sm:$0xff]
      %v332 = vld [vmem:[%s244 + $0xe0] sm:$0xff]
      %v333 = vld [vmem:[%s244 + $0xe8] sm:$0xff]
      %v334 = vld [vmem:[%s244 + $0xf0] sm:$0xff]
      %v335 = vld [vmem:[%s244 + $0xf8] sm:$0xff]
      %s336 = scalar_lea.vmem [#allocation2], 24
      %337 = vst.msk [vmem:[%s336 + $0x1] sm:$0xff] %vm248, %v304
      %338 = vst.msk [vmem:[%s336 + $0x9] sm:$0xff] %vm248, %v305
      %339 = vst.msk [vmem:[%s336 + $0x19] sm:$0xff] %vm248, %v306
      %340 = vst.msk [vmem:[%s336 + $0x21] sm:$0xff] %vm248, %v307
      %341 = vst.msk [vmem:[%s336 + $0x31] sm:$0xff] %vm248, %v308
      %342 = vst.msk [vmem:[%s336 + $0x39] sm:$0xff] %vm248, %v309
      %343 = vst.msk [vmem:[%s336 + $0x49] sm:$0xff] %vm248, %v310
      %344 = vst.msk [vmem:[%s336 + $0x51] sm:$0xff] %vm248, %v311
      %345 = vst.msk [vmem:[%s336 + $0x61] sm:$0xff] %vm248, %v312
      %346 = vst.msk [vmem:[%s336 + $0x69] sm:$0xff] %vm248, %v313
      %347 = vst.msk [vmem:[%s336 + $0x79] sm:$0xff] %vm248, %v314
      %348 = vst.msk [vmem:[%s336 + $0x81] sm:$0xff] %vm248, %v315
      %349 = vst.msk [vmem:[%s336 + $0x91] sm:$0xff] %vm248, %v316
      %350 = vst.msk [vmem:[%s336 + $0x99] sm:$0xff] %vm248, %v317
      %351 = vst.msk [vmem:[%s336 + $0xa9] sm:$0xff] %vm248, %v318
      %352 = vst.msk [vmem:[%s336 + $0xb1] sm:$0xff] %vm248, %v319
      %353 = vst.msk [vmem:[%s336 + $0xc1] sm:$0xff] %vm248, %v320
      %354 = vst.msk [vmem:[%s336 + $0xc9] sm:$0xff] %vm248, %v321
      %355 = vst.msk [vmem:[%s336 + $0xd9] sm:$0xff] %vm248, %v322
      %356 = vst.msk [vmem:[%s336 + $0xe1] sm:$0xff] %vm248, %v323
      %357 = vst.msk [vmem:[%s336 + $0xf1] sm:$0xff] %vm248, %v324
      %358 = vst.msk [vmem:[%s336 + $0xf9] sm:$0xff] %vm248, %v325
      %359 = vst.msk [vmem:[%s336 + $0x109] sm:$0xff] %vm248, %v326
      %360 = vst.msk [vmem:[%s336 + $0x111] sm:$0xff] %vm248, %v327
      %361 = vst.msk [vmem:[%s336 + $0x121] sm:$0xff] %vm248, %v328
      %362 = vst.msk [vmem:[%s336 + $0x129] sm:$0xff] %vm248, %v329
      %363 = vst.msk [vmem:[%s336 + $0x139] sm:$0xff] %vm248, %v330
      %364 = vst.msk [vmem:[%s336 + $0x141] sm:$0xff] %vm248, %v331
      %365 = vst.msk [vmem:[%s336 + $0x151] sm:$0xff] %vm248, %v332
      %366 = vst.msk [vmem:[%s336 + $0x159] sm:$0xff] %vm248, %v333
      %367 = vst.msk [vmem:[%s336 + $0x169] sm:$0xff] %vm248, %v334
      %368 = vst.msk [vmem:[%s336 + $0x171] sm:$0xff] %vm248, %v335
      %v369 = vld [vmem:[#allocation2] sm:$0xff]
      %v370 = vld [vmem:[#allocation2 + $0x8] sm:$0xff]
      %v371 = vld [vmem:[#allocation2 + $0x18] sm:$0xff]
      %v372 = vld [vmem:[#allocation2 + $0x20] sm:$0xff]
      %v373 = vld [vmem:[#allocation2 + $0x30] sm:$0xff]
      %v374 = vld [vmem:[#allocation2 + $0x38] sm:$0xff]
      %v375 = vld [vmem:[#allocation2 + $0x48] sm:$0xff]
      %v376 = vld [vmem:[#allocation2 + $0x50] sm:$0xff]
      %v377 = vld [vmem:[#allocation2 + $0x60] sm:$0xff]
      %v378 = vld [vmem:[#allocation2 + $0x68] sm:$0xff]
      %v379 = vld [vmem:[#allocation2 + $0x78] sm:$0xff]
      %v380 = vld [vmem:[#allocation2 + $0x80] sm:$0xff]
      %v381 = vld [vmem:[#allocation2 + $0x90] sm:$0xff]
      %v382 = vld [vmem:[#allocation2 + $0x98] sm:$0xff]
      %v383 = vld [vmem:[#allocation2 + $0xa8] sm:$0xff]
      %v384 = vld [vmem:[#allocation2 + $0xb0] sm:$0xff]
      %v385 = vld [vmem:[#allocation2 + $0xc0] sm:$0xff]
      %v386 = vld [vmem:[#allocation2 + $0xc8] sm:$0xff]
      %v387 = vld [vmem:[#allocation2 + $0xd8] sm:$0xff]
      %v388 = vld [vmem:[#allocation2 + $0xe0] sm:$0xff]
      %v389 = vld [vmem:[#allocation2 + $0xf0] sm:$0xff]
      %v390 = vld [vmem:[#allocation2 + $0xf8] sm:$0xff]
      %v391 = vld [vmem:[#allocation2 + $0x108] sm:$0xff]
      %v392 = vld [vmem:[#allocation2 + $0x110] sm:$0xff]
      %v393 = vld [vmem:[#allocation2 + $0x120] sm:$0xff]
      %v394 = vld [vmem:[#allocation2 + $0x128] sm:$0xff]
      %v395 = vld [vmem:[#allocation2 + $0x138] sm:$0xff]
      %v396 = vld [vmem:[#allocation2 + $0x140] sm:$0xff]
      %v397 = vld [vmem:[#allocation2 + $0x150] sm:$0xff]
      %v398 = vld [vmem:[#allocation2 + $0x158] sm:$0xff]
      %v399 = vld [vmem:[#allocation2 + $0x168] sm:$0xff]
      %v400 = vld [vmem:[#allocation2 + $0x170] sm:$0xff]
      %401 = vst.msk [vmem:[#allocation3] sm:$0xff] %vm248, %v369
      %402 = vst.msk [vmem:[#allocation3 + $0x8] sm:$0xff] %vm248, %v370
      %403 = vst.msk [vmem:[#allocation3 + $0x10] sm:$0xff] %vm248, %v371
      %404 = vst.msk [vmem:[#allocation3 + $0x18] sm:$0xff] %vm248, %v372
      %405 = vst.msk [vmem:[#allocation3 + $0x20] sm:$0xff] %vm248, %v373
      %406 = vst.msk [vmem:[#allocation3 + $0x28] sm:$0xff] %vm248, %v374
      %407 = vst.msk [vmem:[#allocation3 + $0x30] sm:$0xff] %vm248, %v375
      %408 = vst.msk [vmem:[#allocation3 + $0x38] sm:$0xff] %vm248, %v376
      %409 = vst.msk [vmem:[#allocation3 + $0x40] sm:$0xff] %vm248, %v377
      %410 = vst.msk [vmem:[#allocation3 + $0x48] sm:$0xff] %vm248, %v378
      %411 = vst.msk [vmem:[#allocation3 + $0x50] sm:$0xff] %vm248, %v379
      %412 = vst.msk [vmem:[#allocation3 + $0x58] sm:$0xff] %vm248, %v380
      %413 = vst.msk [vmem:[#allocation3 + $0x60] sm:$0xff] %vm248, %v381
      %414 = vst.msk [vmem:[#allocation3 + $0x68] sm:$0xff] %vm248, %v382
      %415 = vst.msk [vmem:[#allocation3 + $0x70] sm:$0xff] %vm248, %v383
      %416 = vst.msk [vmem:[#allocation3 + $0x78] sm:$0xff] %vm248, %v384
      %417 = vst.msk [vmem:[#allocation3 + $0x80] sm:$0xff] %vm248, %v385
      %418 = vst.msk [vmem:[#allocation3 + $0x88] sm:$0xff] %vm248, %v386
      %419 = vst.msk [vmem:[#allocation3 + $0x90] sm:$0xff] %vm248, %v387
      %420 = vst.msk [vmem:[#allocation3 + $0x98] sm:$0xff] %vm248, %v388
      %421 = vst.msk [vmem:[#allocation3 + $0xa0] sm:$0xff] %vm248, %v389
      %422 = vst.msk [vmem:[#allocation3 + $0xa8] sm:$0xff] %vm248, %v390
      %423 = vst.msk [vmem:[#allocation3 + $0xb0] sm:$0xff] %vm248, %v391
      %424 = vst.msk [vmem:[#allocation3 + $0xb8] sm:$0xff] %vm248, %v392
      %425 = vst.msk [vmem:[#allocation3 + $0xc0] sm:$0xff] %vm248, %v393
      %426 = vst.msk [vmem:[#allocation3 + $0xc8] sm:$0xff] %vm248, %v394
      %427 = vst.msk [vmem:[#allocation3 + $0xd0] sm:$0xff] %vm248, %v395
      %428 = vst.msk [vmem:[#allocation3 + $0xd8] sm:$0xff] %vm248, %v396
      %429 = vst.msk [vmem:[#allocation3 + $0xe0] sm:$0xff] %vm248, %v397
      %430 = vst.msk [vmem:[#allocation3 + $0xe8] sm:$0xff] %vm248, %v398
      %431 = vst.msk [vmem:[#allocation3 + $0xf0] sm:$0xff] %vm248, %v399
      %432 = vst.msk [vmem:[#allocation3 + $0xf8] sm:$0xff] %vm248, %v400
      %v433 = vld [vmem:[#allocation2 + $0x1] sm:$0xff]
      %v434 = vld [vmem:[#allocation2 + $0x9] sm:$0xff]
      %v435 = vld [vmem:[#allocation2 + $0x19] sm:$0xff]
      %v436 = vld [vmem:[#allocation2 + $0x21] sm:$0xff]
      %v437 = vld [vmem:[#allocation2 + $0x31] sm:$0xff]
      %v438 = vld [vmem:[#allocation2 + $0x39] sm:$0xff]
      %v439 = vld [vmem:[#allocation2 + $0x49] sm:$0xff]
      %v440 = vld [vmem:[#allocation2 + $0x51] sm:$0xff]
      %v441 = vld [vmem:[#allocation2 + $0x61] sm:$0xff]
      %v442 = vld [vmem:[#allocation2 + $0x69] sm:$0xff]
      %v443 = vld [vmem:[#allocation2 + $0x79] sm:$0xff]
      %v444 = vld [vmem:[#allocation2 + $0x81] sm:$0xff]
      %v445 = vld [vmem:[#allocation2 + $0x91] sm:$0xff]
      %v446 = vld [vmem:[#allocation2 + $0x99] sm:$0xff]
      %v447 = vld [vmem:[#allocation2 + $0xa9] sm:$0xff]
      %v448 = vld [vmem:[#allocation2 + $0xb1] sm:$0xff]
      %v449 = vld [vmem:[#allocation2 + $0xc1] sm:$0xff]
      %v450 = vld [vmem:[#allocation2 + $0xc9] sm:$0xff]
      %v451 = vld [vmem:[#allocation2 + $0xd9] sm:$0xff]
      %v452 = vld [vmem:[#allocation2 + $0xe1] sm:$0xff]
      %v453 = vld [vmem:[#allocation2 + $0xf1] sm:$0xff]
      %v454 = vld [vmem:[#allocation2 + $0xf9] sm:$0xff]
      %v455 = vld [vmem:[#allocation2 + $0x109] sm:$0xff]
      %v456 = vld [vmem:[#allocation2 + $0x111] sm:$0xff]
      %v457 = vld [vmem:[#allocation2 + $0x121] sm:$0xff]
      %v458 = vld [vmem:[#allocation2 + $0x129] sm:$0xff]
      %v459 = vld [vmem:[#allocation2 + $0x139] sm:$0xff]
      %v460 = vld [vmem:[#allocation2 + $0x141] sm:$0xff]
      %v461 = vld [vmem:[#allocation2 + $0x151] sm:$0xff]
      %v462 = vld [vmem:[#allocation2 + $0x159] sm:$0xff]
      %v463 = vld [vmem:[#allocation2 + $0x169] sm:$0xff]
      %v464 = vld [vmem:[#allocation2 + $0x171] sm:$0xff]
      %497 = vrot.lane.b32.xlu0 %v433, 3
      %v498 = vpop.permute.xlu0 %497
      %499 = vrot.lane.b32.xlu0 %v434, 3
      %v500 = vpop.permute.xlu0 %499
      %501 = vrot.lane.b32.xlu0 %v435, 3
      %v502 = vpop.permute.xlu0 %501
      %503 = vrot.lane.b32.xlu0 %v436, 3
      %v504 = vpop.permute.xlu0 %503
      %505 = vrot.lane.b32.xlu0 %v437, 3
      %v506 = vpop.permute.xlu0 %505
      %507 = vrot.lane.b32.xlu0 %v438, 3
      %v508 = vpop.permute.xlu0 %507
      %509 = vrot.lane.b32.xlu0 %v439, 3
      %v510 = vpop.permute.xlu0 %509
      %511 = vrot.lane.b32.xlu0 %v440, 3
      %v512 = vpop.permute.xlu0 %511
      %513 = vrot.lane.b32.xlu0 %v441, 3
      %v514 = vpop.permute.xlu0 %513
      %515 = vrot.lane.b32.xlu0 %v442, 3
      %v516 = vpop.permute.xlu0 %515
      %517 = vrot.lane.b32.xlu0 %v443, 3
      %v518 = vpop.permute.xlu0 %517
      %519 = vrot.lane.b32.xlu0 %v444, 3
      %v520 = vpop.permute.xlu0 %519
      %521 = vrot.lane.b32.xlu0 %v445, 3
      %v522 = vpop.permute.xlu0 %521
      %523 = vrot.lane.b32.xlu0 %v446, 3
      %v524 = vpop.permute.xlu0 %523
      %525 = vrot.lane.b32.xlu0 %v447, 3
      %v526 = vpop.permute.xlu0 %525
      %527 = vrot.lane.b32.xlu0 %v448, 3
      %v528 = vpop.permute.xlu0 %527
      %529 = vrot.lane.b32.xlu0 %v449, 3
      %v530 = vpop.permute.xlu0 %529
      %531 = vrot.lane.b32.xlu0 %v450, 3
      %v532 = vpop.permute.xlu0 %531
      %533 = vrot.lane.b32.xlu0 %v451, 3
      %v534 = vpop.permute.xlu0 %533
      %535 = vrot.lane.b32.xlu0 %v452, 3
      %v536 = vpop.permute.xlu0 %535
      %537 = vrot.lane.b32.xlu0 %v453, 3
      %v538 = vpop.permute.xlu0 %537
      %539 = vrot.lane.b32.xlu0 %v454, 3
      %v540 = vpop.permute.xlu0 %539
      %541 = vrot.lane.b32.xlu0 %v455, 3
      %v542 = vpop.permute.xlu0 %541
      %543 = vrot.lane.b32.xlu0 %v456, 3
      %v544 = vpop.permute.xlu0 %543
      %545 = vrot.lane.b32.xlu0 %v457, 3
      %v546 = vpop.permute.xlu0 %545
      %547 = vrot.lane.b32.xlu0 %v458, 3
      %v548 = vpop.permute.xlu0 %547
      %549 = vrot.lane.b32.xlu0 %v459, 3
      %v550 = vpop.permute.xlu0 %549
      %551 = vrot.lane.b32.xlu0 %v460, 3
      %v552 = vpop.permute.xlu0 %551
      %553 = vrot.lane.b32.xlu0 %v461, 3
      %v554 = vpop.permute.xlu0 %553
      %555 = vrot.lane.b32.xlu0 %v462, 3
      %v556 = vpop.permute.xlu0 %555
      %557 = vrot.lane.b32.xlu0 %v463, 3
      %v558 = vpop.permute.xlu0 %557
      %559 = vrot.lane.b32.xlu0 %v464, 3
      %v560 = vpop.permute.xlu0 %559
      %vm593 = vcmask 48152
      %594 = vst.msk [vmem:[#allocation3] sm:$0xff] %vm593, %v498
      %595 = vst.msk [vmem:[#allocation3 + $0x8] sm:$0xff] %vm593, %v500
      %596 = vst.msk [vmem:[#allocation3 + $0x10] sm:$0xff] %vm593, %v502
      %597 = vst.msk [vmem:[#allocation3 + $0x18] sm:$0xff] %vm593, %v504
      %598 = vst.msk [vmem:[#allocation3 + $0x20] sm:$0xff] %vm593, %v506
      %599 = vst.msk [vmem:[#allocation3 + $0x28] sm:$0xff] %vm593, %v508
      %600 = vst.msk [vmem:[#allocation3 + $0x30] sm:$0xff] %vm593, %v510
      %601 = vst.msk [vmem:[#allocation3 + $0x38] sm:$0xff] %vm593, %v512
      %602 = vst.msk [vmem:[#allocation3 + $0x40] sm:$0xff] %vm593, %v514
      %603 = vst.msk [vmem:[#allocation3 + $0x48] sm:$0xff] %vm593, %v516
      %604 = vst.msk [vmem:[#allocation3 + $0x50] sm:$0xff] %vm593, %v518
      %605 = vst.msk [vmem:[#allocation3 + $0x58] sm:$0xff] %vm593, %v520
      %606 = vst.msk [vmem:[#allocation3 + $0x60] sm:$0xff] %vm593, %v522
      %607 = vst.msk [vmem:[#allocation3 + $0x68] sm:$0xff] %vm593, %v524
      %608 = vst.msk [vmem:[#allocation3 + $0x70] sm:$0xff] %vm593, %v526
      %609 = vst.msk [vmem:[#allocation3 + $0x78] sm:$0xff] %vm593, %v528
      %610 = vst.msk [vmem:[#allocation3 + $0x80] sm:$0xff] %vm593, %v530
      %611 = vst.msk [vmem:[#allocation3 + $0x88] sm:$0xff] %vm593, %v532
      %612 = vst.msk [vmem:[#allocation3 + $0x90] sm:$0xff] %vm593, %v534
      %613 = vst.msk [vmem:[#allocation3 + $0x98] sm:$0xff] %vm593, %v536
      %614 = vst.msk [vmem:[#allocation3 + $0xa0] sm:$0xff] %vm593, %v538
      %615 = vst.msk [vmem:[#allocation3 + $0xa8] sm:$0xff] %vm593, %v540
      %616 = vst.msk [vmem:[#allocation3 + $0xb0] sm:$0xff] %vm593, %v542
      %617 = vst.msk [vmem:[#allocation3 + $0xb8] sm:$0xff] %vm593, %v544
      %618 = vst.msk [vmem:[#allocation3 + $0xc0] sm:$0xff] %vm593, %v546
      %619 = vst.msk [vmem:[#allocation3 + $0xc8] sm:$0xff] %vm593, %v548
      %620 = vst.msk [vmem:[#allocation3 + $0xd0] sm:$0xff] %vm593, %v550
      %621 = vst.msk [vmem:[#allocation3 + $0xd8] sm:$0xff] %vm593, %v552
      %622 = vst.msk [vmem:[#allocation3 + $0xe0] sm:$0xff] %vm593, %v554
      %623 = vst.msk [vmem:[#allocation3 + $0xe8] sm:$0xff] %vm593, %v556
      %624 = vst.msk [vmem:[#allocation3 + $0xf0] sm:$0xff] %vm593, %v558
      %625 = vst.msk [vmem:[#allocation3 + $0xf8] sm:$0xff] %vm593, %v560
      %v626 = vld [vmem:[#allocation2 + $0x2] sm:$0xff]
      %v627 = vld [vmem:[#allocation2 + $0xa] sm:$0xff]
      %v628 = vld [vmem:[#allocation2 + $0x1a] sm:$0xff]
      %v629 = vld [vmem:[#allocation2 + $0x22] sm:$0xff]
      %v630 = vld [vmem:[#allocation2 + $0x32] sm:$0xff]
      %v631 = vld [vmem:[#allocation2 + $0x3a] sm:$0xff]
      %v632 = vld [vmem:[#allocation2 + $0x4a] sm:$0xff]
      %v633 = vld [vmem:[#allocation2 + $0x52] sm:$0xff]
      %v634 = vld [vmem:[#allocation2 + $0x62] sm:$0xff]
      %v635 = vld [vmem:[#allocation2 + $0x6a] sm:$0xff]
      %v636 = vld [vmem:[#allocation2 + $0x7a] sm:$0xff]
      %v637 = vld [vmem:[#allocation2 + $0x82] sm:$0xff]
      %v638 = vld [vmem:[#allocation2 + $0x92] sm:$0xff]
      %v639 = vld [vmem:[#allocation2 + $0x9a] sm:$0xff]
      %v640 = vld [vmem:[#allocation2 + $0xaa] sm:$0xff]
      %v641 = vld [vmem:[#allocation2 + $0xb2] sm:$0xff]
      %v642 = vld [vmem:[#allocation2 + $0xc2] sm:$0xff]
      %v643 = vld [vmem:[#allocation2 + $0xca] sm:$0xff]
      %v644 = vld [vmem:[#allocation2 + $0xda] sm:$0xff]
      %v645 = vld [vmem:[#allocation2 + $0xe2] sm:$0xff]
      %v646 = vld [vmem:[#allocation2 + $0xf2] sm:$0xff]
      %v647 = vld [vmem:[#allocation2 + $0xfa] sm:$0xff]
      %v648 = vld [vmem:[#allocation2 + $0x10a] sm:$0xff]
      %v649 = vld [vmem:[#allocation2 + $0x112] sm:$0xff]
      %v650 = vld [vmem:[#allocation2 + $0x122] sm:$0xff]
      %v651 = vld [vmem:[#allocation2 + $0x12a] sm:$0xff]
      %v652 = vld [vmem:[#allocation2 + $0x13a] sm:$0xff]
      %v653 = vld [vmem:[#allocation2 + $0x142] sm:$0xff]
      %v654 = vld [vmem:[#allocation2 + $0x152] sm:$0xff]
      %v655 = vld [vmem:[#allocation2 + $0x15a] sm:$0xff]
      %v656 = vld [vmem:[#allocation2 + $0x16a] sm:$0xff]
      %v657 = vld [vmem:[#allocation2 + $0x172] sm:$0xff]
      %690 = vrot.lane.b32.xlu0 %v626, 6
      %v691 = vpop.permute.xlu0 %690
      %692 = vrot.lane.b32.xlu0 %v627, 6
      %v693 = vpop.permute.xlu0 %692
      %694 = vrot.lane.b32.xlu0 %v628, 6
      %v695 = vpop.permute.xlu0 %694
      %696 = vrot.lane.b32.xlu0 %v629, 6
      %v697 = vpop.permute.xlu0 %696
      %698 = vrot.lane.b32.xlu0 %v630, 6
      %v699 = vpop.permute.xlu0 %698
      %700 = vrot.lane.b32.xlu0 %v631, 6
      %v701 = vpop.permute.xlu0 %700
      %702 = vrot.lane.b32.xlu0 %v632, 6
      %v703 = vpop.permute.xlu0 %702
      %704 = vrot.lane.b32.xlu0 %v633, 6
      %v705 = vpop.permute.xlu0 %704
      %706 = vrot.lane.b32.xlu0 %v634, 6
      %v707 = vpop.permute.xlu0 %706
      %708 = vrot.lane.b32.xlu0 %v635, 6
      %v709 = vpop.permute.xlu0 %708
      %710 = vrot.lane.b32.xlu0 %v636, 6
      %v711 = vpop.permute.xlu0 %710
      %712 = vrot.lane.b32.xlu0 %v637, 6
      %v713 = vpop.permute.xlu0 %712
      %714 = vrot.lane.b32.xlu0 %v638, 6
      %v715 = vpop.permute.xlu0 %714
      %716 = vrot.lane.b32.xlu0 %v639, 6
      %v717 = vpop.permute.xlu0 %716
      %718 = vrot.lane.b32.xlu0 %v640, 6
      %v719 = vpop.permute.xlu0 %718
      %720 = vrot.lane.b32.xlu0 %v641, 6
      %v721 = vpop.permute.xlu0 %720
      %722 = vrot.lane.b32.xlu0 %v642, 6
      %v723 = vpop.permute.xlu0 %722
      %724 = vrot.lane.b32.xlu0 %v643, 6
      %v725 = vpop.permute.xlu0 %724
      %726 = vrot.lane.b32.xlu0 %v644, 6
      %v727 = vpop.permute.xlu0 %726
      %728 = vrot.lane.b32.xlu0 %v645, 6
      %v729 = vpop.permute.xlu0 %728
      %730 = vrot.lane.b32.xlu0 %v646, 6
      %v731 = vpop.permute.xlu0 %730
      %732 = vrot.lane.b32.xlu0 %v647, 6
      %v733 = vpop.permute.xlu0 %732
      %734 = vrot.lane.b32.xlu0 %v648, 6
      %v735 = vpop.permute.xlu0 %734
      %736 = vrot.lane.b32.xlu0 %v649, 6
      %v737 = vpop.permute.xlu0 %736
      %738 = vrot.lane.b32.xlu0 %v650, 6
      %v739 = vpop.permute.xlu0 %738
      %740 = vrot.lane.b32.xlu0 %v651, 6
      %v741 = vpop.permute.xlu0 %740
      %742 = vrot.lane.b32.xlu0 %v652, 6
      %v743 = vpop.permute.xlu0 %742
      %744 = vrot.lane.b32.xlu0 %v653, 6
      %v745 = vpop.permute.xlu0 %744
      %746 = vrot.lane.b32.xlu0 %v654, 6
      %v747 = vpop.permute.xlu0 %746
      %748 = vrot.lane.b32.xlu0 %v655, 6
      %v749 = vpop.permute.xlu0 %748
      %750 = vrot.lane.b32.xlu0 %v656, 6
      %v751 = vpop.permute.xlu0 %750
      %752 = vrot.lane.b32.xlu0 %v657, 6
      %v753 = vpop.permute.xlu0 %752
      %vm786 = vcmask 72752
      %787 = vst.msk [vmem:[#allocation3] sm:$0xff] %vm786, %v691
      %788 = vst.msk [vmem:[#allocation3 + $0x8] sm:$0xff] %vm786, %v693
      %789 = vst.msk [vmem:[#allocation3 + $0x10] sm:$0xff] %vm786, %v695
      %790 = vst.msk [vmem:[#allocation3 + $0x18] sm:$0xff] %vm786, %v697
      %791 = vst.msk [vmem:[#allocation3 + $0x20] sm:$0xff] %vm786, %v699
      %792 = vst.msk [vmem:[#allocation3 + $0x28] sm:$0xff] %vm786, %v701
      %793 = vst.msk [vmem:[#allocation3 + $0x30] sm:$0xff] %vm786, %v703
      %794 = vst.msk [vmem:[#allocation3 + $0x38] sm:$0xff] %vm786, %v705
      %795 = vst.msk [vmem:[#allocation3 + $0x40] sm:$0xff] %vm786, %v707
      %796 = vst.msk [vmem:[#allocation3 + $0x48] sm:$0xff] %vm786, %v709
      %797 = vst.msk [vmem:[#allocation3 + $0x50] sm:$0xff] %vm786, %v711
      %798 = vst.msk [vmem:[#allocation3 + $0x58] sm:$0xff] %vm786, %v713
      %799 = vst.msk [vmem:[#allocation3 + $0x60] sm:$0xff] %vm786, %v715
      %800 = vst.msk [vmem:[#allocation3 + $0x68] sm:$0xff] %vm786, %v717
      %801 = vst.msk [vmem:[#allocation3 + $0x70] sm:$0xff] %vm786, %v719
      %802 = vst.msk [vmem:[#allocation3 + $0x78] sm:$0xff] %vm786, %v721
      %803 = vst.msk [vmem:[#allocation3 + $0x80] sm:$0xff] %vm786, %v723
      %804 = vst.msk [vmem:[#allocation3 + $0x88] sm:$0xff] %vm786, %v725
      %805 = vst.msk [vmem:[#allocation3 + $0x90] sm:$0xff] %vm786, %v727
      %806 = vst.msk [vmem:[#allocation3 + $0x98] sm:$0xff] %vm786, %v729
      %807 = vst.msk [vmem:[#allocation3 + $0xa0] sm:$0xff] %vm786, %v731
      %808 = vst.msk [vmem:[#allocation3 + $0xa8] sm:$0xff] %vm786, %v733
      %809 = vst.msk [vmem:[#allocation3 + $0xb0] sm:$0xff] %vm786, %v735
      %810 = vst.msk [vmem:[#allocation3 + $0xb8] sm:$0xff] %vm786, %v737
      %811 = vst.msk [vmem:[#allocation3 + $0xc0] sm:$0xff] %vm786, %v739
      %812 = vst.msk [vmem:[#allocation3 + $0xc8] sm:$0xff] %vm786, %v741
      %813 = vst.msk [vmem:[#allocation3 + $0xd0] sm:$0xff] %vm786, %v743
      %814 = vst.msk [vmem:[#allocation3 + $0xd8] sm:$0xff] %vm786, %v745
      %815 = vst.msk [vmem:[#allocation3 + $0xe0] sm:$0xff] %vm786, %v747
      %816 = vst.msk [vmem:[#allocation3 + $0xe8] sm:$0xff] %vm786, %v749
      %817 = vst.msk [vmem:[#allocation3 + $0xf0] sm:$0xff] %vm786, %v751
      %818 = vst.msk [vmem:[#allocation3 + $0xf8] sm:$0xff] %vm786, %v753
      %v819 = vld [vmem:[%s336] sm:$0xff]
      %v820 = vld [vmem:[%s336 + $0x8] sm:$0xff]
      %v821 = vld [vmem:[%s336 + $0x18] sm:$0xff]
      %v822 = vld [vmem:[%s336 + $0x20] sm:$0xff]
      %v823 = vld [vmem:[%s336 + $0x30] sm:$0xff]
      %v824 = vld [vmem:[%s336 + $0x38] sm:$0xff]
      %v825 = vld [vmem:[%s336 + $0x48] sm:$0xff]
      %v826 = vld [vmem:[%s336 + $0x50] sm:$0xff]
      %v827 = vld [vmem:[%s336 + $0x60] sm:$0xff]
      %v828 = vld [vmem:[%s336 + $0x68] sm:$0xff]
      %v829 = vld [vmem:[%s336 + $0x78] sm:$0xff]
      %v830 = vld [vmem:[%s336 + $0x80] sm:$0xff]
      %v831 = vld [vmem:[%s336 + $0x90] sm:$0xff]
      %v832 = vld [vmem:[%s336 + $0x98] sm:$0xff]
      %v833 = vld [vmem:[%s336 + $0xa8] sm:$0xff]
      %v834 = vld [vmem:[%s336 + $0xb0] sm:$0xff]
      %v835 = vld [vmem:[%s336 + $0xc0] sm:$0xff]
      %v836 = vld [vmem:[%s336 + $0xc8] sm:$0xff]
      %v837 = vld [vmem:[%s336 + $0xd8] sm:$0xff]
      %v838 = vld [vmem:[%s336 + $0xe0] sm:$0xff]
      %v839 = vld [vmem:[%s336 + $0xf0] sm:$0xff]
      %v840 = vld [vmem:[%s336 + $0xf8] sm:$0xff]
      %v841 = vld [vmem:[%s336 + $0x108] sm:$0xff]
      %v842 = vld [vmem:[%s336 + $0x110] sm:$0xff]
      %v843 = vld [vmem:[%s336 + $0x120] sm:$0xff]
      %v844 = vld [vmem:[%s336 + $0x128] sm:$0xff]
      %v845 = vld [vmem:[%s336 + $0x138] sm:$0xff]
      %v846 = vld [vmem:[%s336 + $0x140] sm:$0xff]
      %v847 = vld [vmem:[%s336 + $0x150] sm:$0xff]
      %v848 = vld [vmem:[%s336 + $0x158] sm:$0xff]
      %v849 = vld [vmem:[%s336 + $0x168] sm:$0xff]
      %v850 = vld [vmem:[%s336 + $0x170] sm:$0xff]
      %883 = vrot.lane.b32.xlu0 %v819, 9
      %v884 = vpop.permute.xlu0 %883
      %885 = vrot.lane.b32.xlu0 %v820, 9
      %v886 = vpop.permute.xlu0 %885
      %887 = vrot.lane.b32.xlu0 %v821, 9
      %v888 = vpop.permute.xlu0 %887
      %889 = vrot.lane.b32.xlu0 %v822, 9
      %v890 = vpop.permute.xlu0 %889
      %891 = vrot.lane.b32.xlu0 %v823, 9
      %v892 = vpop.permute.xlu0 %891
      %893 = vrot.lane.b32.xlu0 %v824, 9
      %v894 = vpop.permute.xlu0 %893
      %895 = vrot.lane.b32.xlu0 %v825, 9
      %v896 = vpop.permute.xlu0 %895
      %897 = vrot.lane.b32.xlu0 %v826, 9
      %v898 = vpop.permute.xlu0 %897
      %899 = vrot.lane.b32.xlu0 %v827, 9
      %v900 = vpop.permute.xlu0 %899
      %901 = vrot.lane.b32.xlu0 %v828, 9
      %v902 = vpop.permute.xlu0 %901
      %903 = vrot.lane.b32.xlu0 %v829, 9
      %v904 = vpop.permute.xlu0 %903
      %905 = vrot.lane.b32.xlu0 %v830, 9
      %v906 = vpop.permute.xlu0 %905
      %907 = vrot.lane.b32.xlu0 %v831, 9
      %v908 = vpop.permute.xlu0 %907
      %909 = vrot.lane.b32.xlu0 %v832, 9
      %v910 = vpop.permute.xlu0 %909
      %911 = vrot.lane.b32.xlu0 %v833, 9
      %v912 = vpop.permute.xlu0 %911
      %913 = vrot.lane.b32.xlu0 %v834, 9
      %v914 = vpop.permute.xlu0 %913
      %915 = vrot.lane.b32.xlu0 %v835, 9
      %v916 = vpop.permute.xlu0 %915
      %917 = vrot.lane.b32.xlu0 %v836, 9
      %v918 = vpop.permute.xlu0 %917
      %919 = vrot.lane.b32.xlu0 %v837, 9
      %v920 = vpop.permute.xlu0 %919
      %921 = vrot.lane.b32.xlu0 %v838, 9
      %v922 = vpop.permute.xlu0 %921
      %923 = vrot.lane.b32.xlu0 %v839, 9
      %v924 = vpop.permute.xlu0 %923
      %925 = vrot.lane.b32.xlu0 %v840, 9
      %v926 = vpop.permute.xlu0 %925
      %927 = vrot.lane.b32.xlu0 %v841, 9
      %v928 = vpop.permute.xlu0 %927
      %929 = vrot.lane.b32.xlu0 %v842, 9
      %v930 = vpop.permute.xlu0 %929
      %931 = vrot.lane.b32.xlu0 %v843, 9
      %v932 = vpop.permute.xlu0 %931
      %933 = vrot.lane.b32.xlu0 %v844, 9
      %v934 = vpop.permute.xlu0 %933
      %935 = vrot.lane.b32.xlu0 %v845, 9
      %v936 = vpop.permute.xlu0 %935
      %937 = vrot.lane.b32.xlu0 %v846, 9
      %v938 = vpop.permute.xlu0 %937
      %939 = vrot.lane.b32.xlu0 %v847, 9
      %v940 = vpop.permute.xlu0 %939
      %941 = vrot.lane.b32.xlu0 %v848, 9
      %v942 = vpop.permute.xlu0 %941
      %943 = vrot.lane.b32.xlu0 %v849, 9
      %v944 = vpop.permute.xlu0 %943
      %945 = vrot.lane.b32.xlu0 %v850, 9
      %v946 = vpop.permute.xlu0 %945
      %vm979 = vcmask 97352
      %980 = vst.msk [vmem:[#allocation3] sm:$0xff] %vm979, %v884
      %981 = vst.msk [vmem:[#allocation3 + $0x8] sm:$0xff] %vm979, %v886
      %982 = vst.msk [vmem:[#allocation3 + $0x10] sm:$0xff] %vm979, %v888
      %983 = vst.msk [vmem:[#allocation3 + $0x18] sm:$0xff] %vm979, %v890
      %984 = vst.msk [vmem:[#allocation3 + $0x20] sm:$0xff] %vm979, %v892
      %985 = vst.msk [vmem:[#allocation3 + $0x28] sm:$0xff] %vm979, %v894
      %986 = vst.msk [vmem:[#allocation3 + $0x30] sm:$0xff] %vm979, %v896
      %987 = vst.msk [vmem:[#allocation3 + $0x38] sm:$0xff] %vm979, %v898
      %988 = vst.msk [vmem:[#allocation3 + $0x40] sm:$0xff] %vm979, %v900
      %989 = vst.msk [vmem:[#allocation3 + $0x48] sm:$0xff] %vm979, %v902
      %990 = vst.msk [vmem:[#allocation3 + $0x50] sm:$0xff] %vm979, %v904
      %991 = vst.msk [vmem:[#allocation3 + $0x58] sm:$0xff] %vm979, %v906
      %992 = vst.msk [vmem:[#allocation3 + $0x60] sm:$0xff] %vm979, %v908
      %993 = vst.msk [vmem:[#allocation3 + $0x68] sm:$0xff] %vm979, %v910
      %994 = vst.msk [vmem:[#allocation3 + $0x70] sm:$0xff] %vm979, %v912
      %995 = vst.msk [vmem:[#allocation3 + $0x78] sm:$0xff] %vm979, %v914
      %996 = vst.msk [vmem:[#allocation3 + $0x80] sm:$0xff] %vm979, %v916
      %997 = vst.msk [vmem:[#allocation3 + $0x88] sm:$0xff] %vm979, %v918
      %998 = vst.msk [vmem:[#allocation3 + $0x90] sm:$0xff] %vm979, %v920
      %999 = vst.msk [vmem:[#allocation3 + $0x98] sm:$0xff] %vm979, %v922
      %1000 = vst.msk [vmem:[#allocation3 + $0xa0] sm:$0xff] %vm979, %v924
      %1001 = vst.msk [vmem:[#allocation3 + $0xa8] sm:$0xff] %vm979, %v926
      %1002 = vst.msk [vmem:[#allocation3 + $0xb0] sm:$0xff] %vm979, %v928
      %1003 = vst.msk [vmem:[#allocation3 + $0xb8] sm:$0xff] %vm979, %v930
      %1004 = vst.msk [vmem:[#allocation3 + $0xc0] sm:$0xff] %vm979, %v932
      %1005 = vst.msk [vmem:[#allocation3 + $0xc8] sm:$0xff] %vm979, %v934
      %1006 = vst.msk [vmem:[#allocation3 + $0xd0] sm:$0xff] %vm979, %v936
      %1007 = vst.msk [vmem:[#allocation3 + $0xd8] sm:$0xff] %vm979, %v938
      %1008 = vst.msk [vmem:[#allocation3 + $0xe0] sm:$0xff] %vm979, %v940
      %1009 = vst.msk [vmem:[#allocation3 + $0xe8] sm:$0xff] %vm979, %v942
      %1010 = vst.msk [vmem:[#allocation3 + $0xf0] sm:$0xff] %vm979, %v944
      %1011 = vst.msk [vmem:[#allocation3 + $0xf8] sm:$0xff] %vm979, %v946
      %v1012 = vld [vmem:[%s336 + $0x1] sm:$0xff]
      %v1013 = vld [vmem:[%s336 + $0x9] sm:$0xff]
      %v1014 = vld [vmem:[%s336 + $0x19] sm:$0xff]
      %v1015 = vld [vmem:[%s336 + $0x21] sm:$0xff]
      %v1016 = vld [vmem:[%s336 + $0x31] sm:$0xff]
      %v1017 = vld [vmem:[%s336 + $0x39] sm:$0xff]
      %v1018 = vld [vmem:[%s336 + $0x49] sm:$0xff]
      %v1019 = vld [vmem:[%s336 + $0x51] sm:$0xff]
      %v1020 = vld [vmem:[%s336 + $0x61] sm:$0xff]
      %v1021 = vld [vmem:[%s336 + $0x69] sm:$0xff]
      %v1022 = vld [vmem:[%s336 + $0x79] sm:$0xff]
      %v1023 = vld [vmem:[%s336 + $0x81] sm:$0xff]
      %v1024 = vld [vmem:[%s336 + $0x91] sm:$0xff]
      %v1025 = vld [vmem:[%s336 + $0x99] sm:$0xff]
      %v1026 = vld [vmem:[%s336 + $0xa9] sm:$0xff]
      %v1027 = vld [vmem:[%s336 + $0xb1] sm:$0xff]
      %v1028 = vld [vmem:[%s336 + $0xc1] sm:$0xff]
      %v1029 = vld [vmem:[%s336 + $0xc9] sm:$0xff]
      %v1030 = vld [vmem:[%s336 + $0xd9] sm:$0xff]
      %v1031 = vld [vmem:[%s336 + $0xe1] sm:$0xff]
      %v1032 = vld [vmem:[%s336 + $0xf1] sm:$0xff]
      %v1033 = vld [vmem:[%s336 + $0xf9] sm:$0xff]
      %v1034 = vld [vmem:[%s336 + $0x109] sm:$0xff]
      %v1035 = vld [vmem:[%s336 + $0x111] sm:$0xff]
      %v1036 = vld [vmem:[%s336 + $0x121] sm:$0xff]
      %v1037 = vld [vmem:[%s336 + $0x129] sm:$0xff]
      %v1038 = vld [vmem:[%s336 + $0x139] sm:$0xff]
      %v1039 = vld [vmem:[%s336 + $0x141] sm:$0xff]
      %v1040 = vld [vmem:[%s336 + $0x151] sm:$0xff]
      %v1041 = vld [vmem:[%s336 + $0x159] sm:$0xff]
      %v1042 = vld [vmem:[%s336 + $0x169] sm:$0xff]
      %v1043 = vld [vmem:[%s336 + $0x171] sm:$0xff]
      %1076 = vrot.lane.b32.xlu0 %v1012, 12
      %v1077 = vpop.permute.xlu0 %1076
      %1078 = vrot.lane.b32.xlu0 %v1013, 12
      %v1079 = vpop.permute.xlu0 %1078
      %1080 = vrot.lane.b32.xlu0 %v1014, 12
      %v1081 = vpop.permute.xlu0 %1080
      %1082 = vrot.lane.b32.xlu0 %v1015, 12
      %v1083 = vpop.permute.xlu0 %1082
      %1084 = vrot.lane.b32.xlu0 %v1016, 12
      %v1085 = vpop.permute.xlu0 %1084
      %1086 = vrot.lane.b32.xlu0 %v1017, 12
      %v1087 = vpop.permute.xlu0 %1086
      %1088 = vrot.lane.b32.xlu0 %v1018, 12
      %v1089 = vpop.permute.xlu0 %1088
      %1090 = vrot.lane.b32.xlu0 %v1019, 12
      %v1091 = vpop.permute.xlu0 %1090
      %1092 = vrot.lane.b32.xlu0 %v1020, 12
      %v1093 = vpop.permute.xlu0 %1092
      %1094 = vrot.lane.b32.xlu0 %v1021, 12
      %v1095 = vpop.permute.xlu0 %1094
      %1096 = vrot.lane.b32.xlu0 %v1022, 12
      %v1097 = vpop.permute.xlu0 %1096
      %1098 = vrot.lane.b32.xlu0 %v1023, 12
      %v1099 = vpop.permute.xlu0 %1098
      %1100 = vrot.lane.b32.xlu0 %v1024, 12
      %v1101 = vpop.permute.xlu0 %1100
      %1102 = vrot.lane.b32.xlu0 %v1025, 12
      %v1103 = vpop.permute.xlu0 %1102
      %1104 = vrot.lane.b32.xlu0 %v1026, 12
      %v1105 = vpop.permute.xlu0 %1104
      %1106 = vrot.lane.b32.xlu0 %v1027, 12
      %v1107 = vpop.permute.xlu0 %1106
      %1108 = vrot.lane.b32.xlu0 %v1028, 12
      %v1109 = vpop.permute.xlu0 %1108
      %1110 = vrot.lane.b32.xlu0 %v1029, 12
      %v1111 = vpop.permute.xlu0 %1110
      %1112 = vrot.lane.b32.xlu0 %v1030, 12
      %v1113 = vpop.permute.xlu0 %1112
      %1114 = vrot.lane.b32.xlu0 %v1031, 12
      %v1115 = vpop.permute.xlu0 %1114
      %1116 = vrot.lane.b32.xlu0 %v1032, 12
      %v1117 = vpop.permute.xlu0 %1116
      %1118 = vrot.lane.b32.xlu0 %v1033, 12
      %v1119 = vpop.permute.xlu0 %1118
      %1120 = vrot.lane.b32.xlu0 %v1034, 12
      %v1121 = vpop.permute.xlu0 %1120
      %1122 = vrot.lane.b32.xlu0 %v1035, 12
      %v1123 = vpop.permute.xlu0 %1122
      %1124 = vrot.lane.b32.xlu0 %v1036, 12
      %v1125 = vpop.permute.xlu0 %1124
      %1126 = vrot.lane.b32.xlu0 %v1037, 12
      %v1127 = vpop.permute.xlu0 %1126
      %1128 = vrot.lane.b32.xlu0 %v1038, 12
      %v1129 = vpop.permute.xlu0 %1128
      %1130 = vrot.lane.b32.xlu0 %v1039, 12
      %v1131 = vpop.permute.xlu0 %1130
      %1132 = vrot.lane.b32.xlu0 %v1040, 12
      %v1133 = vpop.permute.xlu0 %1132
      %1134 = vrot.lane.b32.xlu0 %v1041, 12
      %v1135 = vpop.permute.xlu0 %1134
      %1136 = vrot.lane.b32.xlu0 %v1042, 12
      %v1137 = vpop.permute.xlu0 %1136
      %1138 = vrot.lane.b32.xlu0 %v1043, 12
      %v1139 = vpop.permute.xlu0 %1138
      %vm1172 = vcmask 121952
      %1173 = vst.msk [vmem:[#allocation3] sm:$0xff] %vm1172, %v1077
      %1174 = vst.msk [vmem:[#allocation3 + $0x8] sm:$0xff] %vm1172, %v1079
      %1175 = vst.msk [vmem:[#allocation3 + $0x10] sm:$0xff] %vm1172, %v1081
      %1176 = vst.msk [vmem:[#allocation3 + $0x18] sm:$0xff] %vm1172, %v1083
      %1177 = vst.msk [vmem:[#allocation3 + $0x20] sm:$0xff] %vm1172, %v1085
      %1178 = vst.msk [vmem:[#allocation3 + $0x28] sm:$0xff] %vm1172, %v1087
      %1179 = vst.msk [vmem:[#allocation3 + $0x30] sm:$0xff] %vm1172, %v1089
      %1180 = vst.msk [vmem:[#allocation3 + $0x38] sm:$0xff] %vm1172, %v1091
      %1181 = vst.msk [vmem:[#allocation3 + $0x40] sm:$0xff] %vm1172, %v1093
      %1182 = vst.msk [vmem:[#allocation3 + $0x48] sm:$0xff] %vm1172, %v1095
      %1183 = vst.msk [vmem:[#allocation3 + $0x50] sm:$0xff] %vm1172, %v1097
      %1184 = vst.msk [vmem:[#allocation3 + $0x58] sm:$0xff] %vm1172, %v1099
      %1185 = vst.msk [vmem:[#allocation3 + $0x60] sm:$0xff] %vm1172, %v1101
      %1186 = vst.msk [vmem:[#allocation3 + $0x68] sm:$0xff] %vm1172, %v1103
      %1187 = vst.msk [vmem:[#allocation3 + $0x70] sm:$0xff] %vm1172, %v1105
      %1188 = vst.msk [vmem:[#allocation3 + $0x78] sm:$0xff] %vm1172, %v1107
      %1189 = vst.msk [vmem:[#allocation3 + $0x80] sm:$0xff] %vm1172, %v1109
      %1190 = vst.msk [vmem:[#allocation3 + $0x88] sm:$0xff] %vm1172, %v1111
      %1191 = vst.msk [vmem:[#allocation3 + $0x90] sm:$0xff] %vm1172, %v1113
      %1192 = vst.msk [vmem:[#allocation3 + $0x98] sm:$0xff] %vm1172, %v1115
      %1193 = vst.msk [vmem:[#allocation3 + $0xa0] sm:$0xff] %vm1172, %v1117
      %1194 = vst.msk [vmem:[#allocation3 + $0xa8] sm:$0xff] %vm1172, %v1119
      %1195 = vst.msk [vmem:[#allocation3 + $0xb0] sm:$0xff] %vm1172, %v1121
      %1196 = vst.msk [vmem:[#allocation3 + $0xb8] sm:$0xff] %vm1172, %v1123
      %1197 = vst.msk [vmem:[#allocation3 + $0xc0] sm:$0xff] %vm1172, %v1125
      %1198 = vst.msk [vmem:[#allocation3 + $0xc8] sm:$0xff] %vm1172, %v1127
      %1199 = vst.msk [vmem:[#allocation3 + $0xd0] sm:$0xff] %vm1172, %v1129
      %1200 = vst.msk [vmem:[#allocation3 + $0xd8] sm:$0xff] %vm1172, %v1131
      %1201 = vst.msk [vmem:[#allocation3 + $0xe0] sm:$0xff] %vm1172, %v1133
      %1202 = vst.msk [vmem:[#allocation3 + $0xe8] sm:$0xff] %vm1172, %v1135
      %1203 = vst.msk [vmem:[#allocation3 + $0xf0] sm:$0xff] %vm1172, %v1137
      %1204 = vst.msk [vmem:[#allocation3 + $0xf8] sm:$0xff] %vm1172, %v1139
      %v1205 = vld [vmem:[%s336 + $0x2] sm:$0xff]
      %v1206 = vld [vmem:[%s336 + $0xa] sm:$0xff]
      %v1207 = vld [vmem:[%s336 + $0x1a] sm:$0xff]
      %v1208 = vld [vmem:[%s336 + $0x22] sm:$0xff]
      %v1209 = vld [vmem:[%s336 + $0x32] sm:$0xff]
      %v1210 = vld [vmem:[%s336 + $0x3a] sm:$0xff]
      %v1211 = vld [vmem:[%s336 + $0x4a] sm:$0xff]
      %v1212 = vld [vmem:[%s336 + $0x52] sm:$0xff]
      %v1213 = vld [vmem:[%s336 + $0x62] sm:$0xff]
      %v1214 = vld [vmem:[%s336 + $0x6a] sm:$0xff]
      %v1215 = vld [vmem:[%s336 + $0x7a] sm:$0xff]
      %v1216 = vld [vmem:[%s336 + $0x82] sm:$0xff]
      %v1217 = vld [vmem:[%s336 + $0x92] sm:$0xff]
      %v1218 = vld [vmem:[%s336 + $0x9a] sm:$0xff]
      %v1219 = vld [vmem:[%s336 + $0xaa] sm:$0xff]
      %v1220 = vld [vmem:[%s336 + $0xb2] sm:$0xff]
      %v1221 = vld [vmem:[%s336 + $0xc2] sm:$0xff]
      %v1222 = vld [vmem:[%s336 + $0xca] sm:$0xff]
      %v1223 = vld [vmem:[%s336 + $0xda] sm:$0xff]
      %v1224 = vld [vmem:[%s336 + $0xe2] sm:$0xff]
      %v1225 = vld [vmem:[%s336 + $0xf2] sm:$0xff]
      %v1226 = vld [vmem:[%s336 + $0xfa] sm:$0xff]
      %v1227 = vld [vmem:[%s336 + $0x10a] sm:$0xff]
      %v1228 = vld [vmem:[%s336 + $0x112] sm:$0xff]
      %v1229 = vld [vmem:[%s336 + $0x122] sm:$0xff]
      %v1230 = vld [vmem:[%s336 + $0x12a] sm:$0xff]
      %v1231 = vld [vmem:[%s336 + $0x13a] sm:$0xff]
      %v1232 = vld [vmem:[%s336 + $0x142] sm:$0xff]
      %v1233 = vld [vmem:[%s336 + $0x152] sm:$0xff]
      %v1234 = vld [vmem:[%s336 + $0x15a] sm:$0xff]
      %v1235 = vld [vmem:[%s336 + $0x16a] sm:$0xff]
      %v1236 = vld [vmem:[%s336 + $0x172] sm:$0xff]
      %1269 = vrot.lane.b32.xlu0 %v1205, 15
      %v1270 = vpop.permute.xlu0 %1269
      %1271 = vrot.lane.b32.xlu0 %v1206, 15
      %v1272 = vpop.permute.xlu0 %1271
      %1273 = vrot.lane.b32.xlu0 %v1207, 15
      %v1274 = vpop.permute.xlu0 %1273
      %1275 = vrot.lane.b32.xlu0 %v1208, 15
      %v1276 = vpop.permute.xlu0 %1275
      %1277 = vrot.lane.b32.xlu0 %v1209, 15
      %v1278 = vpop.permute.xlu0 %1277
      %1279 = vrot.lane.b32.xlu0 %v1210, 15
      %v1280 = vpop.permute.xlu0 %1279
      %1281 = vrot.lane.b32.xlu0 %v1211, 15
      %v1282 = vpop.permute.xlu0 %1281
      %1283 = vrot.lane.b32.xlu0 %v1212, 15
      %v1284 = vpop.permute.xlu0 %1283
      %1285 = vrot.lane.b32.xlu0 %v1213, 15
      %v1286 = vpop.permute.xlu0 %1285
      %1287 = vrot.lane.b32.xlu0 %v1214, 15
      %v1288 = vpop.permute.xlu0 %1287
      %1289 = vrot.lane.b32.xlu0 %v1215, 15
      %v1290 = vpop.permute.xlu0 %1289
      %1291 = vrot.lane.b32.xlu0 %v1216, 15
      %v1292 = vpop.permute.xlu0 %1291
      %1293 = vrot.lane.b32.xlu0 %v1217, 15
      %v1294 = vpop.permute.xlu0 %1293
      %1295 = vrot.lane.b32.xlu0 %v1218, 15
      %v1296 = vpop.permute.xlu0 %1295
      %1297 = vrot.lane.b32.xlu0 %v1219, 15
      %v1298 = vpop.permute.xlu0 %1297
      %1299 = vrot.lane.b32.xlu0 %v1220, 15
      %v1300 = vpop.permute.xlu0 %1299
      %1301 = vrot.lane.b32.xlu0 %v1221, 15
      %v1302 = vpop.permute.xlu0 %1301
      %1303 = vrot.lane.b32.xlu0 %v1222, 15
      %v1304 = vpop.permute.xlu0 %1303
      %1305 = vrot.lane.b32.xlu0 %v1223, 15
      %v1306 = vpop.permute.xlu0 %1305
      %1307 = vrot.lane.b32.xlu0 %v1224, 15
      %v1308 = vpop.permute.xlu0 %1307
      %1309 = vrot.lane.b32.xlu0 %v1225, 15
      %v1310 = vpop.permute.xlu0 %1309
      %1311 = vrot.lane.b32.xlu0 %v1226, 15
      %v1312 = vpop.permute.xlu0 %1311
      %1313 = vrot.lane.b32.xlu0 %v1227, 15
      %v1314 = vpop.permute.xlu0 %1313
      %1315 = vrot.lane.b32.xlu0 %v1228, 15
      %v1316 = vpop.permute.xlu0 %1315
      %1317 = vrot.lane.b32.xlu0 %v1229, 15
      %v1318 = vpop.permute.xlu0 %1317
      %1319 = vrot.lane.b32.xlu0 %v1230, 15
      %v1320 = vpop.permute.xlu0 %1319
      %1321 = vrot.lane.b32.xlu0 %v1231, 15
      %v1322 = vpop.permute.xlu0 %1321
      %1323 = vrot.lane.b32.xlu0 %v1232, 15
      %v1324 = vpop.permute.xlu0 %1323
      %1325 = vrot.lane.b32.xlu0 %v1233, 15
      %v1326 = vpop.permute.xlu0 %1325
      %1327 = vrot.lane.b32.xlu0 %v1234, 15
      %v1328 = vpop.permute.xlu0 %1327
      %1329 = vrot.lane.b32.xlu0 %v1235, 15
      %v1330 = vpop.permute.xlu0 %1329
      %1331 = vrot.lane.b32.xlu0 %v1236, 15
      %v1332 = vpop.permute.xlu0 %1331
      %vm1365 = vcmask 146552
      %1366 = vst.msk [vmem:[#allocation3] sm:$0xff] %vm1365, %v1270
      %1367 = vst.msk [vmem:[#allocation3 + $0x8] sm:$0xff] %vm1365, %v1272
      %1368 = vst.msk [vmem:[#allocation3 + $0x10] sm:$0xff] %vm1365, %v1274
      %1369 = vst.msk [vmem:[#allocation3 + $0x18] sm:$0xff] %vm1365, %v1276
      %1370 = vst.msk [vmem:[#allocation3 + $0x20] sm:$0xff] %vm1365, %v1278
      %1371 = vst.msk [vmem:[#allocation3 + $0x28] sm:$0xff] %vm1365, %v1280
      %1372 = vst.msk [vmem:[#allocation3 + $0x30] sm:$0xff] %vm1365, %v1282
      %1373 = vst.msk [vmem:[#allocation3 + $0x38] sm:$0xff] %vm1365, %v1284
      %1374 = vst.msk [vmem:[#allocation3 + $0x40] sm:$0xff] %vm1365, %v1286
      %1375 = vst.msk [vmem:[#allocation3 + $0x48] sm:$0xff] %vm1365, %v1288
      %1376 = vst.msk [vmem:[#allocation3 + $0x50] sm:$0xff] %vm1365, %v1290
      %1377 = vst.msk [vmem:[#allocation3 + $0x58] sm:$0xff] %vm1365, %v1292
      %1378 = vst.msk [vmem:[#allocation3 + $0x60] sm:$0xff] %vm1365, %v1294
      %1379 = vst.msk [vmem:[#allocation3 + $0x68] sm:$0xff] %vm1365, %v1296
      %1380 = vst.msk [vmem:[#allocation3 + $0x70] sm:$0xff] %vm1365, %v1298
      %1381 = vst.msk [vmem:[#allocation3 + $0x78] sm:$0xff] %vm1365, %v1300
      %1382 = vst.msk [vmem:[#allocation3 + $0x80] sm:$0xff] %vm1365, %v1302
      %1383 = vst.msk [vmem:[#allocation3 + $0x88] sm:$0xff] %vm1365, %v1304
      %1384 = vst.msk [vmem:[#allocation3 + $0x90] sm:$0xff] %vm1365, %v1306
      %1385 = vst.msk [vmem:[#allocation3 + $0x98] sm:$0xff] %vm1365, %v1308
      %1386 = vst.msk [vmem:[#allocation3 + $0xa0] sm:$0xff] %vm1365, %v1310
      %1387 = vst.msk [vmem:[#allocation3 + $0xa8] sm:$0xff] %vm1365, %v1312
      %1388 = vst.msk [vmem:[#allocation3 + $0xb0] sm:$0xff] %vm1365, %v1314
      %1389 = vst.msk [vmem:[#allocation3 + $0xb8] sm:$0xff] %vm1365, %v1316
      %1390 = vst.msk [vmem:[#allocation3 + $0xc0] sm:$0xff] %vm1365, %v1318
      %1391 = vst.msk [vmem:[#allocation3 + $0xc8] sm:$0xff] %vm1365, %v1320
      %1392 = vst.msk [vmem:[#allocation3 + $0xd0] sm:$0xff] %vm1365, %v1322
      %1393 = vst.msk [vmem:[#allocation3 + $0xd8] sm:$0xff] %vm1365, %v1324
      %1394 = vst.msk [vmem:[#allocation3 + $0xe0] sm:$0xff] %vm1365, %v1326
      %1395 = vst.msk [vmem:[#allocation3 + $0xe8] sm:$0xff] %vm1365, %v1328
      %1396 = vst.msk [vmem:[#allocation3 + $0xf0] sm:$0xff] %vm1365, %v1330
      %1397 = vst.msk [vmem:[#allocation3 + $0xf8] sm:$0xff] %vm1365, %v1332
      %s1398 = scalar_lea.vmem [#allocation2], 48
      %v1399 = vld [vmem:[%s1398] sm:$0xff]
      %v1400 = vld [vmem:[%s1398 + $0x8] sm:$0xff]
      %v1401 = vld [vmem:[%s1398 + $0x18] sm:$0xff]
      %v1402 = vld [vmem:[%s1398 + $0x20] sm:$0xff]
      %v1403 = vld [vmem:[%s1398 + $0x30] sm:$0xff]
      %v1404 = vld [vmem:[%s1398 + $0x38] sm:$0xff]
      %v1405 = vld [vmem:[%s1398 + $0x48] sm:$0xff]
      %v1406 = vld [vmem:[%s1398 + $0x50] sm:$0xff]
      %v1407 = vld [vmem:[%s1398 + $0x60] sm:$0xff]
      %v1408 = vld [vmem:[%s1398 + $0x68] sm:$0xff]
      %v1409 = vld [vmem:[%s1398 + $0x78] sm:$0xff]
      %v1410 = vld [vmem:[%s1398 + $0x80] sm:$0xff]
      %v1411 = vld [vmem:[%s1398 + $0x90] sm:$0xff]
      %v1412 = vld [vmem:[%s1398 + $0x98] sm:$0xff]
      %v1413 = vld [vmem:[%s1398 + $0xa8] sm:$0xff]
      %v1414 = vld [vmem:[%s1398 + $0xb0] sm:$0xff]
      %v1415 = vld [vmem:[%s1398 + $0xc0] sm:$0xff]
      %v1416 = vld [vmem:[%s1398 + $0xc8] sm:$0xff]
      %v1417 = vld [vmem:[%s1398 + $0xd8] sm:$0xff]
      %v1418 = vld [vmem:[%s1398 + $0xe0] sm:$0xff]
      %v1419 = vld [vmem:[%s1398 + $0xf0] sm:$0xff]
      %v1420 = vld [vmem:[%s1398 + $0xf8] sm:$0xff]
      %v1421 = vld [vmem:[%s1398 + $0x108] sm:$0xff]
      %v1422 = vld [vmem:[%s1398 + $0x110] sm:$0xff]
      %v1423 = vld [vmem:[%s1398 + $0x120] sm:$0xff]
      %v1424 = vld [vmem:[%s1398 + $0x128] sm:$0xff]
      %v1425 = vld [vmem:[%s1398 + $0x138] sm:$0xff]
      %v1426 = vld [vmem:[%s1398 + $0x140] sm:$0xff]
      %v1427 = vld [vmem:[%s1398 + $0x150] sm:$0xff]
      %v1428 = vld [vmem:[%s1398 + $0x158] sm:$0xff]
      %v1429 = vld [vmem:[%s1398 + $0x168] sm:$0xff]
      %v1430 = vld [vmem:[%s1398 + $0x170] sm:$0xff]
      %1463 = vrot.lane.b32.xlu0 %v1399, 18
      %v1464 = vpop.permute.xlu0 %1463
      %1465 = vrot.lane.b32.xlu0 %v1400, 18
      %v1466 = vpop.permute.xlu0 %1465
      %1467 = vrot.lane.b32.xlu0 %v1401, 18
      %v1468 = vpop.permute.xlu0 %1467
      %1469 = vrot.lane.b32.xlu0 %v1402, 18
      %v1470 = vpop.permute.xlu0 %1469
      %1471 = vrot.lane.b32.xlu0 %v1403, 18
      %v1472 = vpop.permute.xlu0 %1471
      %1473 = vrot.lane.b32.xlu0 %v1404, 18
      %v1474 = vpop.permute.xlu0 %1473
      %1475 = vrot.lane.b32.xlu0 %v1405, 18
      %v1476 = vpop.permute.xlu0 %1475
      %1477 = vrot.lane.b32.xlu0 %v1406, 18
      %v1478 = vpop.permute.xlu0 %1477
      %1479 = vrot.lane.b32.xlu0 %v1407, 18
      %v1480 = vpop.permute.xlu0 %1479
      %1481 = vrot.lane.b32.xlu0 %v1408, 18
      %v1482 = vpop.permute.xlu0 %1481
      %1483 = vrot.lane.b32.xlu0 %v1409, 18
      %v1484 = vpop.permute.xlu0 %1483
      %1485 = vrot.lane.b32.xlu0 %v1410, 18
      %v1486 = vpop.permute.xlu0 %1485
      %1487 = vrot.lane.b32.xlu0 %v1411, 18
      %v1488 = vpop.permute.xlu0 %1487
      %1489 = vrot.lane.b32.xlu0 %v1412, 18
      %v1490 = vpop.permute.xlu0 %1489
      %1491 = vrot.lane.b32.xlu0 %v1413, 18
      %v1492 = vpop.permute.xlu0 %1491
      %1493 = vrot.lane.b32.xlu0 %v1414, 18
      %v1494 = vpop.permute.xlu0 %1493
      %1495 = vrot.lane.b32.xlu0 %v1415, 18
      %v1496 = vpop.permute.xlu0 %1495
      %1497 = vrot.lane.b32.xlu0 %v1416, 18
      %v1498 = vpop.permute.xlu0 %1497
      %1499 = vrot.lane.b32.xlu0 %v1417, 18
      %v1500 = vpop.permute.xlu0 %1499
      %1501 = vrot.lane.b32.xlu0 %v1418, 18
      %v1502 = vpop.permute.xlu0 %1501
      %1503 = vrot.lane.b32.xlu0 %v1419, 18
      %v1504 = vpop.permute.xlu0 %1503
      %1505 = vrot.lane.b32.xlu0 %v1420, 18
      %v1506 = vpop.permute.xlu0 %1505
      %1507 = vrot.lane.b32.xlu0 %v1421, 18
      %v1508 = vpop.permute.xlu0 %1507
      %1509 = vrot.lane.b32.xlu0 %v1422, 18
      %v1510 = vpop.permute.xlu0 %1509
      %1511 = vrot.lane.b32.xlu0 %v1423, 18
      %v1512 = vpop.permute.xlu0 %1511
      %1513 = vrot.lane.b32.xlu0 %v1424, 18
      %v1514 = vpop.permute.xlu0 %1513
      %1515 = vrot.lane.b32.xlu0 %v1425, 18
      %v1516 = vpop.permute.xlu0 %1515
      %1517 = vrot.lane.b32.xlu0 %v1426, 18
      %v1518 = vpop.permute.xlu0 %1517
      %1519 = vrot.lane.b32.xlu0 %v1427, 18
      %v1520 = vpop.permute.xlu0 %1519
      %1521 = vrot.lane.b32.xlu0 %v1428, 18
      %v1522 = vpop.permute.xlu0 %1521
      %1523 = vrot.lane.b32.xlu0 %v1429, 18
      %v1524 = vpop.permute.xlu0 %1523
      %1525 = vrot.lane.b32.xlu0 %v1430, 18
      %v1526 = vpop.permute.xlu0 %1525
      %vm1559 = vcmask 171152
      %1560 = vst.msk [vmem:[#allocation3] sm:$0xff] %vm1559, %v1464
      %1561 = vst.msk [vmem:[#allocation3 + $0x8] sm:$0xff] %vm1559, %v1466
      %1562 = vst.msk [vmem:[#allocation3 + $0x10] sm:$0xff] %vm1559, %v1468
      %1563 = vst.msk [vmem:[#allocation3 + $0x18] sm:$0xff] %vm1559, %v1470
      %1564 = vst.msk [vmem:[#allocation3 + $0x20] sm:$0xff] %vm1559, %v1472
      %1565 = vst.msk [vmem:[#allocation3 + $0x28] sm:$0xff] %vm1559, %v1474
      %1566 = vst.msk [vmem:[#allocation3 + $0x30] sm:$0xff] %vm1559, %v1476
      %1567 = vst.msk [vmem:[#allocation3 + $0x38] sm:$0xff] %vm1559, %v1478
      %1568 = vst.msk [vmem:[#allocation3 + $0x40] sm:$0xff] %vm1559, %v1480
      %1569 = vst.msk [vmem:[#allocation3 + $0x48] sm:$0xff] %vm1559, %v1482
      %1570 = vst.msk [vmem:[#allocation3 + $0x50] sm:$0xff] %vm1559, %v1484
      %1571 = vst.msk [vmem:[#allocation3 + $0x58] sm:$0xff] %vm1559, %v1486
      %1572 = vst.msk [vmem:[#allocation3 + $0x60] sm:$0xff] %vm1559, %v1488
      %1573 = vst.msk [vmem:[#allocation3 + $0x68] sm:$0xff] %vm1559, %v1490
      %1574 = vst.msk [vmem:[#allocation3 + $0x70] sm:$0xff] %vm1559, %v1492
      %1575 = vst.msk [vmem:[#allocation3 + $0x78] sm:$0xff] %vm1559, %v1494
      %1576 = vst.msk [vmem:[#allocation3 + $0x80] sm:$0xff] %vm1559, %v1496
      %1577 = vst.msk [vmem:[#allocation3 + $0x88] sm:$0xff] %vm1559, %v1498
      %1578 = vst.msk [vmem:[#allocation3 + $0x90] sm:$0xff] %vm1559, %v1500
      %1579 = vst.msk [vmem:[#allocation3 + $0x98] sm:$0xff] %vm1559, %v1502
      %1580 = vst.msk [vmem:[#allocation3 + $0xa0] sm:$0xff] %vm1559, %v1504
      %1581 = vst.msk [vmem:[#allocation3 + $0xa8] sm:$0xff] %vm1559, %v1506
      %1582 = vst.msk [vmem:[#allocation3 + $0xb0] sm:$0xff] %vm1559, %v1508
      %1583 = vst.msk [vmem:[#allocation3 + $0xb8] sm:$0xff] %vm1559, %v1510
      %1584 = vst.msk [vmem:[#allocation3 + $0xc0] sm:$0xff] %vm1559, %v1512
      %1585 = vst.msk [vmem:[#allocation3 + $0xc8] sm:$0xff] %vm1559, %v1514
      %1586 = vst.msk [vmem:[#allocation3 + $0xd0] sm:$0xff] %vm1559, %v1516
      %1587 = vst.msk [vmem:[#allocation3 + $0xd8] sm:$0xff] %vm1559, %v1518
      %1588 = vst.msk [vmem:[#allocation3 + $0xe0] sm:$0xff] %vm1559, %v1520
      %1589 = vst.msk [vmem:[#allocation3 + $0xe8] sm:$0xff] %vm1559, %v1522
      %1590 = vst.msk [vmem:[#allocation3 + $0xf0] sm:$0xff] %vm1559, %v1524
      %1591 = vst.msk [vmem:[#allocation3 + $0xf8] sm:$0xff] %vm1559, %v1526
      %v1592 = vld [vmem:[%s1398 + $0x1] sm:$0xff]
      %v1593 = vld [vmem:[%s1398 + $0x9] sm:$0xff]
      %v1594 = vld [vmem:[%s1398 + $0x19] sm:$0xff]
      %v1595 = vld [vmem:[%s1398 + $0x21] sm:$0xff]
      %v1596 = vld [vmem:[%s1398 + $0x31] sm:$0xff]
      %v1597 = vld [vmem:[%s1398 + $0x39] sm:$0xff]
      %v1598 = vld [vmem:[%s1398 + $0x49] sm:$0xff]
      %v1599 = vld [vmem:[%s1398 + $0x51] sm:$0xff]
      %v1600 = vld [vmem:[%s1398 + $0x61] sm:$0xff]
      %v1601 = vld [vmem:[%s1398 + $0x69] sm:$0xff]
      %v1602 = vld [vmem:[%s1398 + $0x79] sm:$0xff]
      %v1603 = vld [vmem:[%s1398 + $0x81] sm:$0xff]
      %v1604 = vld [vmem:[%s1398 + $0x91] sm:$0xff]
      %v1605 = vld [vmem:[%s1398 + $0x99] sm:$0xff]
      %v1606 = vld [vmem:[%s1398 + $0xa9] sm:$0xff]
      %v1607 = vld [vmem:[%s1398 + $0xb1] sm:$0xff]
      %v1608 = vld [vmem:[%s1398 + $0xc1] sm:$0xff]
      %v1609 = vld [vmem:[%s1398 + $0xc9] sm:$0xff]
      %v1610 = vld [vmem:[%s1398 + $0xd9] sm:$0xff]
      %v1611 = vld [vmem:[%s1398 + $0xe1] sm:$0xff]
      %v1612 = vld [vmem:[%s1398 + $0xf1] sm:$0xff]
      %v1613 = vld [vmem:[%s1398 + $0xf9] sm:$0xff]
      %v1614 = vld [vmem:[%s1398 + $0x109] sm:$0xff]
      %v1615 = vld [vmem:[%s1398 + $0x111] sm:$0xff]
      %v1616 = vld [vmem:[%s1398 + $0x121] sm:$0xff]
      %v1617 = vld [vmem:[%s1398 + $0x129] sm:$0xff]
      %v1618 = vld [vmem:[%s1398 + $0x139] sm:$0xff]
      %v1619 = vld [vmem:[%s1398 + $0x141] sm:$0xff]
      %v1620 = vld [vmem:[%s1398 + $0x151] sm:$0xff]
      %v1621 = vld [vmem:[%s1398 + $0x159] sm:$0xff]
      %v1622 = vld [vmem:[%s1398 + $0x169] sm:$0xff]
      %v1623 = vld [vmem:[%s1398 + $0x171] sm:$0xff]
      %1656 = vrot.lane.b32.xlu0 %v1592, 21
      %v1657 = vpop.permute.xlu0 %1656
      %1658 = vrot.lane.b32.xlu0 %v1593, 21
      %v1659 = vpop.permute.xlu0 %1658
      %1660 = vrot.lane.b32.xlu0 %v1594, 21
      %v1661 = vpop.permute.xlu0 %1660
      %1662 = vrot.lane.b32.xlu0 %v1595, 21
      %v1663 = vpop.permute.xlu0 %1662
      %1664 = vrot.lane.b32.xlu0 %v1596, 21
      %v1665 = vpop.permute.xlu0 %1664
      %1666 = vrot.lane.b32.xlu0 %v1597, 21
      %v1667 = vpop.permute.xlu0 %1666
      %1668 = vrot.lane.b32.xlu0 %v1598, 21
      %v1669 = vpop.permute.xlu0 %1668
      %1670 = vrot.lane.b32.xlu0 %v1599, 21
      %v1671 = vpop.permute.xlu0 %1670
      %1672 = vrot.lane.b32.xlu0 %v1600, 21
      %v1673 = vpop.permute.xlu0 %1672
      %1674 = vrot.lane.b32.xlu0 %v1601, 21
      %v1675 = vpop.permute.xlu0 %1674
      %1676 = vrot.lane.b32.xlu0 %v1602, 21
      %v1677 = vpop.permute.xlu0 %1676
      %1678 = vrot.lane.b32.xlu0 %v1603, 21
      %v1679 = vpop.permute.xlu0 %1678
      %1680 = vrot.lane.b32.xlu0 %v1604, 21
      %v1681 = vpop.permute.xlu0 %1680
      %1682 = vrot.lane.b32.xlu0 %v1605, 21
      %v1683 = vpop.permute.xlu0 %1682
      %1684 = vrot.lane.b32.xlu0 %v1606, 21
      %v1685 = vpop.permute.xlu0 %1684
      %1686 = vrot.lane.b32.xlu0 %v1607, 21
      %v1687 = vpop.permute.xlu0 %1686
      %1688 = vrot.lane.b32.xlu0 %v1608, 21
      %v1689 = vpop.permute.xlu0 %1688
      %1690 = vrot.lane.b32.xlu0 %v1609, 21
      %v1691 = vpop.permute.xlu0 %1690
      %1692 = vrot.lane.b32.xlu0 %v1610, 21
      %v1693 = vpop.permute.xlu0 %1692
      %1694 = vrot.lane.b32.xlu0 %v1611, 21
      %v1695 = vpop.permute.xlu0 %1694
      %1696 = vrot.lane.b32.xlu0 %v1612, 21
      %v1697 = vpop.permute.xlu0 %1696
      %1698 = vrot.lane.b32.xlu0 %v1613, 21
      %v1699 = vpop.permute.xlu0 %1698
      %1700 = vrot.lane.b32.xlu0 %v1614, 21
      %v1701 = vpop.permute.xlu0 %1700
      %1702 = vrot.lane.b32.xlu0 %v1615, 21
      %v1703 = vpop.permute.xlu0 %1702
      %1704 = vrot.lane.b32.xlu0 %v1616, 21
      %v1705 = vpop.permute.xlu0 %1704
      %1706 = vrot.lane.b32.xlu0 %v1617, 21
      %v1707 = vpop.permute.xlu0 %1706
      %1708 = vrot.lane.b32.xlu0 %v1618, 21
      %v1709 = vpop.permute.xlu0 %1708
      %1710 = vrot.lane.b32.xlu0 %v1619, 21
      %v1711 = vpop.permute.xlu0 %1710
      %1712 = vrot.lane.b32.xlu0 %v1620, 21
      %v1713 = vpop.permute.xlu0 %1712
      %1714 = vrot.lane.b32.xlu0 %v1621, 21
      %v1715 = vpop.permute.xlu0 %1714
      %1716 = vrot.lane.b32.xlu0 %v1622, 21
      %v1717 = vpop.permute.xlu0 %1716
      %1718 = vrot.lane.b32.xlu0 %v1623, 21
      %v1719 = vpop.permute.xlu0 %1718
      %vm1752 = vcmask 195752
      %1753 = vst.msk [vmem:[#allocation3] sm:$0xff] %vm1752, %v1657
      %1754 = vst.msk [vmem:[#allocation3 + $0x8] sm:$0xff] %vm1752, %v1659
      %1755 = vst.msk [vmem:[#allocation3 + $0x10] sm:$0xff] %vm1752, %v1661
      %1756 = vst.msk [vmem:[#allocation3 + $0x18] sm:$0xff] %vm1752, %v1663
      %1757 = vst.msk [vmem:[#allocation3 + $0x20] sm:$0xff] %vm1752, %v1665
      %1758 = vst.msk [vmem:[#allocation3 + $0x28] sm:$0xff] %vm1752, %v1667
      %1759 = vst.msk [vmem:[#allocation3 + $0x30] sm:$0xff] %vm1752, %v1669
      %1760 = vst.msk [vmem:[#allocation3 + $0x38] sm:$0xff] %vm1752, %v1671
      %1761 = vst.msk [vmem:[#allocation3 + $0x40] sm:$0xff] %vm1752, %v1673
      %1762 = vst.msk [vmem:[#allocation3 + $0x48] sm:$0xff] %vm1752, %v1675
      %1763 = vst.msk [vmem:[#allocation3 + $0x50] sm:$0xff] %vm1752, %v1677
      %1764 = vst.msk [vmem:[#allocation3 + $0x58] sm:$0xff] %vm1752, %v1679
      %1765 = vst.msk [vmem:[#allocation3 + $0x60] sm:$0xff] %vm1752, %v1681
      %1766 = vst.msk [vmem:[#allocation3 + $0x68] sm:$0xff] %vm1752, %v1683
      %1767 = vst.msk [vmem:[#allocation3 + $0x70] sm:$0xff] %vm1752, %v1685
      %1768 = vst.msk [vmem:[#allocation3 + $0x78] sm:$0xff] %vm1752, %v1687
      %1769 = vst.msk [vmem:[#allocation3 + $0x80] sm:$0xff] %vm1752, %v1689
      %1770 = vst.msk [vmem:[#allocation3 + $0x88] sm:$0xff] %vm1752, %v1691
      %1771 = vst.msk [vmem:[#allocation3 + $0x90] sm:$0xff] %vm1752, %v1693
      %1772 = vst.msk [vmem:[#allocation3 + $0x98] sm:$0xff] %vm1752, %v1695
      %1773 = vst.msk [vmem:[#allocation3 + $0xa0] sm:$0xff] %vm1752, %v1697
      %1774 = vst.msk [vmem:[#allocation3 + $0xa8] sm:$0xff] %vm1752, %v1699
      %1775 = vst.msk [vmem:[#allocation3 + $0xb0] sm:$0xff] %vm1752, %v1701
      %1776 = vst.msk [vmem:[#allocation3 + $0xb8] sm:$0xff] %vm1752, %v1703
      %1777 = vst.msk [vmem:[#allocation3 + $0xc0] sm:$0xff] %vm1752, %v1705
      %1778 = vst.msk [vmem:[#allocation3 + $0xc8] sm:$0xff] %vm1752, %v1707
      %1779 = vst.msk [vmem:[#allocation3 + $0xd0] sm:$0xff] %vm1752, %v1709
      %1780 = vst.msk [vmem:[#allocation3 + $0xd8] sm:$0xff] %vm1752, %v1711
      %1781 = vst.msk [vmem:[#allocation3 + $0xe0] sm:$0xff] %vm1752, %v1713
      %1782 = vst.msk [vmem:[#allocation3 + $0xe8] sm:$0xff] %vm1752, %v1715
      %1783 = vst.msk [vmem:[#allocation3 + $0xf0] sm:$0xff] %vm1752, %v1717
      %1784 = vst.msk [vmem:[#allocation3 + $0xf8] sm:$0xff] %vm1752, %v1719
      %v1785 = vld [vmem:[%s1398 + $0x2] sm:$0xff]
      %v1786 = vld [vmem:[%s1398 + $0xa] sm:$0xff]
      %v1787 = vld [vmem:[%s1398 + $0x1a] sm:$0xff]
      %v1788 = vld [vmem:[%s1398 + $0x22] sm:$0xff]
      %v1789 = vld [vmem:[%s1398 + $0x32] sm:$0xff]
      %v1790 = vld [vmem:[%s1398 + $0x3a] sm:$0xff]
      %v1791 = vld [vmem:[%s1398 + $0x4a] sm:$0xff]
      %v1792 = vld [vmem:[%s1398 + $0x52] sm:$0xff]
      %v1793 = vld [vmem:[%s1398 + $0x62] sm:$0xff]
      %v1794 = vld [vmem:[%s1398 + $0x6a] sm:$0xff]
      %v1795 = vld [vmem:[%s1398 + $0x7a] sm:$0xff]
      %v1796 = vld [vmem:[%s1398 + $0x82] sm:$0xff]
      %v1797 = vld [vmem:[%s1398 + $0x92] sm:$0xff]
      %v1798 = vld [vmem:[%s1398 + $0x9a] sm:$0xff]
      %v1799 = vld [vmem:[%s1398 + $0xaa] sm:$0xff]
      %v1800 = vld [vmem:[%s1398 + $0xb2] sm:$0xff]
      %v1801 = vld [vmem:[%s1398 + $0xc2] sm:$0xff]
      %v1802 = vld [vmem:[%s1398 + $0xca] sm:$0xff]
      %v1803 = vld [vmem:[%s1398 + $0xda] sm:$0xff]
      %v1804 = vld [vmem:[%s1398 + $0xe2] sm:$0xff]
      %v1805 = vld [vmem:[%s1398 + $0xf2] sm:$0xff]
      %v1806 = vld [vmem:[%s1398 + $0xfa] sm:$0xff]
      %v1807 = vld [vmem:[%s1398 + $0x10a] sm:$0xff]
      %v1808 = vld [vmem:[%s1398 + $0x112] sm:$0xff]
      %v1809 = vld [vmem:[%s1398 + $0x122] sm:$0xff]
      %v1810 = vld [vmem:[%s1398 + $0x12a] sm:$0xff]
      %v1811 = vld [vmem:[%s1398 + $0x13a] sm:$0xff]
      %v1812 = vld [vmem:[%s1398 + $0x142] sm:$0xff]
      %v1813 = vld [vmem:[%s1398 + $0x152] sm:$0xff]
      %v1814 = vld [vmem:[%s1398 + $0x15a] sm:$0xff]
      %v1815 = vld [vmem:[%s1398 + $0x16a] sm:$0xff]
      %v1816 = vld [vmem:[%s1398 + $0x172] sm:$0xff]
      %1849 = vrot.lane.b32.xlu0 %v1785, 24
      %v1850 = vpop.permute.xlu0 %1849
      %1851 = vrot.lane.b32.xlu0 %v1786, 24
      %v1852 = vpop.permute.xlu0 %1851
      %1853 = vrot.lane.b32.xlu0 %v1787, 24
      %v1854 = vpop.permute.xlu0 %1853
      %1855 = vrot.lane.b32.xlu0 %v1788, 24
      %v1856 = vpop.permute.xlu0 %1855
      %1857 = vrot.lane.b32.xlu0 %v1789, 24
      %v1858 = vpop.permute.xlu0 %1857
      %1859 = vrot.lane.b32.xlu0 %v1790, 24
      %v1860 = vpop.permute.xlu0 %1859
      %1861 = vrot.lane.b32.xlu0 %v1791, 24
      %v1862 = vpop.permute.xlu0 %1861
      %1863 = vrot.lane.b32.xlu0 %v1792, 24
      %v1864 = vpop.permute.xlu0 %1863
      %1865 = vrot.lane.b32.xlu0 %v1793, 24
      %v1866 = vpop.permute.xlu0 %1865
      %1867 = vrot.lane.b32.xlu0 %v1794, 24
      %v1868 = vpop.permute.xlu0 %1867
      %1869 = vrot.lane.b32.xlu0 %v1795, 24
      %v1870 = vpop.permute.xlu0 %1869
      %1871 = vrot.lane.b32.xlu0 %v1796, 24
      %v1872 = vpop.permute.xlu0 %1871
      %1873 = vrot.lane.b32.xlu0 %v1797, 24
      %v1874 = vpop.permute.xlu0 %1873
      %1875 = vrot.lane.b32.xlu0 %v1798, 24
      %v1876 = vpop.permute.xlu0 %1875
      %1877 = vrot.lane.b32.xlu0 %v1799, 24
      %v1878 = vpop.permute.xlu0 %1877
      %1879 = vrot.lane.b32.xlu0 %v1800, 24
      %v1880 = vpop.permute.xlu0 %1879
      %1881 = vrot.lane.b32.xlu0 %v1801, 24
      %v1882 = vpop.permute.xlu0 %1881
      %1883 = vrot.lane.b32.xlu0 %v1802, 24
      %v1884 = vpop.permute.xlu0 %1883
      %1885 = vrot.lane.b32.xlu0 %v1803, 24
      %v1886 = vpop.permute.xlu0 %1885
      %1887 = vrot.lane.b32.xlu0 %v1804, 24
      %v1888 = vpop.permute.xlu0 %1887
      %1889 = vrot.lane.b32.xlu0 %v1805, 24
      %v1890 = vpop.permute.xlu0 %1889
      %1891 = vrot.lane.b32.xlu0 %v1806, 24
      %v1892 = vpop.permute.xlu0 %1891
      %1893 = vrot.lane.b32.xlu0 %v1807, 24
      %v1894 = vpop.permute.xlu0 %1893
      %1895 = vrot.lane.b32.xlu0 %v1808, 24
      %v1896 = vpop.permute.xlu0 %1895
      %1897 = vrot.lane.b32.xlu0 %v1809, 24
      %v1898 = vpop.permute.xlu0 %1897
      %1899 = vrot.lane.b32.xlu0 %v1810, 24
      %v1900 = vpop.permute.xlu0 %1899
      %1901 = vrot.lane.b32.xlu0 %v1811, 24
      %v1902 = vpop.permute.xlu0 %1901
      %1903 = vrot.lane.b32.xlu0 %v1812, 24
      %v1904 = vpop.permute.xlu0 %1903
      %1905 = vrot.lane.b32.xlu0 %v1813, 24
      %v1906 = vpop.permute.xlu0 %1905
      %1907 = vrot.lane.b32.xlu0 %v1814, 24
      %v1908 = vpop.permute.xlu0 %1907
      %1909 = vrot.lane.b32.xlu0 %v1815, 24
      %v1910 = vpop.permute.xlu0 %1909
      %1911 = vrot.lane.b32.xlu0 %v1816, 24
      %v1912 = vpop.permute.xlu0 %1911
      %vm1945 = vcmask 220352
      %1946 = vst.msk [vmem:[#allocation3] sm:$0xff] %vm1945, %v1850
      %1947 = vst.msk [vmem:[#allocation3 + $0x8] sm:$0xff] %vm1945, %v1852
      %1948 = vst.msk [vmem:[#allocation3 + $0x10] sm:$0xff] %vm1945, %v1854
      %1949 = vst.msk [vmem:[#allocation3 + $0x18] sm:$0xff] %vm1945, %v1856
      %1950 = vst.msk [vmem:[#allocation3 + $0x20] sm:$0xff] %vm1945, %v1858
      %1951 = vst.msk [vmem:[#allocation3 + $0x28] sm:$0xff] %vm1945, %v1860
      %1952 = vst.msk [vmem:[#allocation3 + $0x30] sm:$0xff] %vm1945, %v1862
      %1953 = vst.msk [vmem:[#allocation3 + $0x38] sm:$0xff] %vm1945, %v1864
      %1954 = vst.msk [vmem:[#allocation3 + $0x40] sm:$0xff] %vm1945, %v1866
      %1955 = vst.msk [vmem:[#allocation3 + $0x48] sm:$0xff] %vm1945, %v1868
      %1956 = vst.msk [vmem:[#allocation3 + $0x50] sm:$0xff] %vm1945, %v1870
      %1957 = vst.msk [vmem:[#allocation3 + $0x58] sm:$0xff] %vm1945, %v1872
      %1958 = vst.msk [vmem:[#allocation3 + $0x60] sm:$0xff] %vm1945, %v1874
      %1959 = vst.msk [vmem:[#allocation3 + $0x68] sm:$0xff] %vm1945, %v1876
      %1960 = vst.msk [vmem:[#allocation3 + $0x70] sm:$0xff] %vm1945, %v1878
      %1961 = vst.msk [vmem:[#allocation3 + $0x78] sm:$0xff] %vm1945, %v1880
      %1962 = vst.msk [vmem:[#allocation3 + $0x80] sm:$0xff] %vm1945, %v1882
      %1963 = vst.msk [vmem:[#allocation3 + $0x88] sm:$0xff] %vm1945, %v1884
      %1964 = vst.msk [vmem:[#allocation3 + $0x90] sm:$0xff] %vm1945, %v1886
      %1965 = vst.msk [vmem:[#allocation3 + $0x98] sm:$0xff] %vm1945, %v1888
      %1966 = vst.msk [vmem:[#allocation3 + $0xa0] sm:$0xff] %vm1945, %v1890
      %1967 = vst.msk [vmem:[#allocation3 + $0xa8] sm:$0xff] %vm1945, %v1892
      %1968 = vst.msk [vmem:[#allocation3 + $0xb0] sm:$0xff] %vm1945, %v1894
      %1969 = vst.msk [vmem:[#allocation3 + $0xb8] sm:$0xff] %vm1945, %v1896
      %1970 = vst.msk [vmem:[#allocation3 + $0xc0] sm:$0xff] %vm1945, %v1898
      %1971 = vst.msk [vmem:[#allocation3 + $0xc8] sm:$0xff] %vm1945, %v1900
      %1972 = vst.msk [vmem:[#allocation3 + $0xd0] sm:$0xff] %vm1945, %v1902
      %1973 = vst.msk [vmem:[#allocation3 + $0xd8] sm:$0xff] %vm1945, %v1904
      %1974 = vst.msk [vmem:[#allocation3 + $0xe0] sm:$0xff] %vm1945, %v1906
      %1975 = vst.msk [vmem:[#allocation3 + $0xe8] sm:$0xff] %vm1945, %v1908
      %1976 = vst.msk [vmem:[#allocation3 + $0xf0] sm:$0xff] %vm1945, %v1910
      %1977 = vst.msk [vmem:[#allocation3 + $0xf8] sm:$0xff] %vm1945, %v1912
      %v1978 = vld [vmem:[#allocation3] sm:$0xff]
      %v1979 = vld [vmem:[#allocation3 + $0x8] sm:$0xff]
      %v1980 = vld [vmem:[#allocation3 + $0x10] sm:$0xff]
      %v1981 = vld [vmem:[#allocation3 + $0x18] sm:$0xff]
      %v1982 = vld [vmem:[#allocation3 + $0x20] sm:$0xff]
      %v1983 = vld [vmem:[#allocation3 + $0x28] sm:$0xff]
      %v1984 = vld [vmem:[#allocation3 + $0x30] sm:$0xff]
      %v1985 = vld [vmem:[#allocation3 + $0x38] sm:$0xff]
      %v1986 = vld [vmem:[#allocation3 + $0x40] sm:$0xff]
      %v1987 = vld [vmem:[#allocation3 + $0x48] sm:$0xff]
      %v1988 = vld [vmem:[#allocation3 + $0x50] sm:$0xff]
      %v1989 = vld [vmem:[#allocation3 + $0x58] sm:$0xff]
      %v1990 = vld [vmem:[#allocation3 + $0x60] sm:$0xff]
      %v1991 = vld [vmem:[#allocation3 + $0x68] sm:$0xff]
      %v1992 = vld [vmem:[#allocation3 + $0x70] sm:$0xff]
      %v1993 = vld [vmem:[#allocation3 + $0x78] sm:$0xff]
      %v1994 = vld [vmem:[#allocation3 + $0x80] sm:$0xff]
      %v1995 = vld [vmem:[#allocation3 + $0x88] sm:$0xff]
      %v1996 = vld [vmem:[#allocation3 + $0x90] sm:$0xff]
      %v1997 = vld [vmem:[#allocation3 + $0x98] sm:$0xff]
      %v1998 = vld [vmem:[#allocation3 + $0xa0] sm:$0xff]
      %v1999 = vld [vmem:[#allocation3 + $0xa8] sm:$0xff]
      %v2000 = vld [vmem:[#allocation3 + $0xb0] sm:$0xff]
      %v2001 = vld [vmem:[#allocation3 + $0xb8] sm:$0xff]
      %v2002 = vld [vmem:[#allocation3 + $0xc0] sm:$0xff]
      %v2003 = vld [vmem:[#allocation3 + $0xc8] sm:$0xff]
      %v2004 = vld [vmem:[#allocation3 + $0xd0] sm:$0xff]
      %v2005 = vld [vmem:[#allocation3 + $0xd8] sm:$0xff]
      %v2006 = vld [vmem:[#allocation3 + $0xe0] sm:$0xff]
      %v2007 = vld [vmem:[#allocation3 + $0xe8] sm:$0xff]
      %v2008 = vld [vmem:[#allocation3 + $0xf0] sm:$0xff]
      %v2009 = vld [vmem:[#allocation3 + $0xf8] sm:$0xff]
      %v2010 = vld [vmem:[%s1] sm:$0xff]
      %v2011 = vld [vmem:[%s1 + $0x8] sm:$0xff]
      %v2012 = vld [vmem:[%s1 + $0x10] sm:$0xff]
      %v2013 = vld [vmem:[%s1 + $0x18] sm:$0x7]
      %v2014 = vld [vmem:[%s2] sm:$0x1]
      %v2016 = vlaneseq
      %v2017 = vshrl.u32 %v2016, 7
      %v2018 = vsub.s32 0, %v2017
      %v2019 = vrot.slane %v2014, %v2018
      %vm2021 = vcmask 220160
      %v2023 = vsel %vm2021, %v1978, 0
      %v2026 = vsel %vm2021, %v1979, 0
      %v2029 = vsel %vm2021, %v1980, 0
      %v2032 = vsel %vm2021, %v1981, 0
      %v2035 = vsel %vm2021, %v1982, 0
      %v2038 = vsel %vm2021, %v1983, 0
      %v2041 = vsel %vm2021, %v1984, 0
      %v2044 = vsel %vm2021, %v1985, 0
      %v2047 = vsel %vm2021, %v1986, 0
      %v2050 = vsel %vm2021, %v1987, 0
      %v2053 = vsel %vm2021, %v1988, 0
      %v2056 = vsel %vm2021, %v1989, 0
      %v2059 = vsel %vm2021, %v1990, 0
      %v2062 = vsel %vm2021, %v1991, 0
      %v2065 = vsel %vm2021, %v1992, 0
      %v2068 = vsel %vm2021, %v1993, 0
      %v2071 = vsel %vm2021, %v1994, 0
      %v2074 = vsel %vm2021, %v1995, 0
      %v2077 = vsel %vm2021, %v1996, 0
      %v2080 = vsel %vm2021, %v1997, 0
      %v2083 = vsel %vm2021, %v1998, 0
      %v2086 = vsel %vm2021, %v1999, 0
      %v2089 = vsel %vm2021, %v2000, 0
      %v2092 = vsel %vm2021, %v2001, 0
      %v2095 = vsel %vm2021, %v2002, 0
      %v2098 = vsel %vm2021, %v2003, 0
      %v2101 = vsel %vm2021, %v2004, 0
      %v2104 = vsel %vm2021, %v2005, 0
      %v2107 = vsel %vm2021, %v2006, 0
      %v2110 = vsel %vm2021, %v2007, 0
      %v2113 = vsel %vm2021, %v2008, 0
      %v2116 = vsel %vm2021, %v2009, 0
      %vm2118 = vcmask 1042432
      %v2120 = vsel %vm2118, %v2013, 0
      %2122 = vmatprep.subr.mxu0 0.0
      %2123 = vmatpush1.msra.mxu0 0.0
      %2124 = vmatprep.subr.mxu0 0.0
      %2125 = vmatpush1.msra.mxu0 0.0
      %2126 = vmatprep.subr.mxu0 0.0
      %2127 = vmatpush1.msra.mxu0 0.0
      %2128 = vmatprep.subr.mxu0 0.0
      %2129 = vmatpush1.msra.mxu0 0.0
      %2130 = vmatprep.subr.mxu0 0.0
      %2131 = vmatpush1.msra.mxu0 0.0
      %2132 = vmatprep.subr.mxu0 0.0
      %2133 = vmatpush1.msra.mxu0 0.0
      %2134 = vmatprep.subr.mxu0 0.0
      %2135 = vmatpush1.msra.mxu0 0.0
      %2136 = vmatprep.subr.mxu0 0.0
      %2137 = vmatpush1.msra.mxu0 0.0
      %2138 = vmatprep.subr.mxu0 0.0
      %2139 = vmatpush1.msra.mxu0 0.0
      %2140 = vmatprep.subr.mxu0 0.0
      %2141 = vmatpush1.msra.mxu0 0.0
      %2142 = vmatprep.subr.mxu0 0.0
      %2143 = vmatpush1.msra.mxu0 0.0
      %2144 = vmatprep.subr.mxu0 0.0
      %2145 = vmatpush1.msra.mxu0 0.0
      %2146 = vmatprep.subr.mxu0 0.0
      %2147 = vmatpush1.msra.mxu0 %v2120
      %2148 = vmatprep.subr.mxu0 0.0
      %2149 = vmatpush1.msra.mxu0 %v2012
      %2150 = vmatprep.subr.mxu0 0.0
      %2151 = vmatpush1.msra.mxu0 %v2011
      %2152 = vmatprep.subr.mxu0 0.0
      %2153 = vmatpush1.msra.mxu0 %v2010
      %2154 = vmatprep.subr.mxu0 0.0
      %2155 = vmatpush2.msra.mxu0 0.0
      %2156 = vmatprep.subr.mxu0 0.0
      %2157 = vmatpush2.msra.mxu0 0.0
      %2158 = vmatprep.subr.mxu0 0.0
      %2159 = vmatpush2.msra.mxu0 0.0
      %2160 = vmatprep.subr.mxu0 0.0
      %2161 = vmatpush2.msra.mxu0 0.0
      %2162 = vmatprep.subr.mxu0 0.0
      %2163 = vmatpush2.msra.mxu0 0.0
      %2164 = vmatprep.subr.mxu0 0.0
      %2165 = vmatpush2.msra.mxu0 0.0
      %2166 = vmatprep.subr.mxu0 0.0
      %2167 = vmatpush2.msra.mxu0 0.0
      %2168 = vmatprep.subr.mxu0 0.0
      %2169 = vmatpush2.msra.mxu0 0.0
      %2170 = vmatprep.subr.mxu0 0.0
      %2171 = vmatpush2.msra.mxu0 0.0
      %2172 = vmatprep.subr.mxu0 0.0
      %2173 = vmatpush2.msra.mxu0 0.0
      %2174 = vmatprep.subr.mxu0 0.0
      %2175 = vmatpush2.msra.mxu0 0.0
      %2176 = vmatprep.subr.mxu0 0.0
      %2177 = vmatpush2.msra.mxu0 0.0
      %2178 = vmatprep.subr.mxu0 0.0
      %2179 = vmatpush2.msra.mxu0 0.0
      %2180 = vmatprep.subr.mxu0 0.0
      %2181 = vmatpush2.msra.mxu0 0.0
      %2182 = vmatprep.subr.mxu0 0.0
      %2183 = vmatpush2.msra.mxu0 0.0
      %2184 = vmatprep.subr.mxu0 0.0
      %2185 = vmatpush2.msra.mxu0 0.0
      %2186 = vmatprep.mubr.f32.mxu0 0.0
      %2187 = vmatmul.mubr.f32.gmra.mxu0 %v2023
      %v2188 = vpop.f32.mrf.mxu0
      %v2189 = vadd.f32 %v2019, %v2188
      %v2190 = vpop.f32.mrf.mxu0
      %2191 = vmatprep.mubr.f32.mxu0 0.0
      %2192 = vmatmul.mubr.f32.gmra.mxu0 %v2026
      %v2193 = vpop.f32.mrf.mxu0
      %v2194 = vadd.f32 %v2019, %v2193
      %v2195 = vpop.f32.mrf.mxu0
      %2196 = vmatprep.mubr.f32.mxu0 0.0
      %2197 = vmatmul.mubr.f32.gmra.mxu0 %v2029
      %v2198 = vpop.f32.mrf.mxu0
      %v2199 = vadd.f32 %v2019, %v2198
      %v2200 = vpop.f32.mrf.mxu0
      %2201 = vmatprep.mubr.f32.mxu0 0.0
      %2202 = vmatmul.mubr.f32.gmra.mxu0 %v2032
      %v2203 = vpop.f32.mrf.mxu0
      %v2204 = vadd.f32 %v2019, %v2203
      %v2205 = vpop.f32.mrf.mxu0
      %2206 = vmatprep.mubr.f32.mxu0 0.0
      %2207 = vmatmul.mubr.f32.gmra.mxu0 %v2035
      %v2208 = vpop.f32.mrf.mxu0
      %v2209 = vadd.f32 %v2019, %v2208
      %v2210 = vpop.f32.mrf.mxu0
      %2211 = vmatprep.mubr.f32.mxu0 0.0
      %2212 = vmatmul.mubr.f32.gmra.mxu0 %v2038
      %v2213 = vpop.f32.mrf.mxu0
      %v2214 = vadd.f32 %v2019, %v2213
      %v2215 = vpop.f32.mrf.mxu0
      %2216 = vmatprep.mubr.f32.mxu0 0.0
      %2217 = vmatmul.mubr.f32.gmra.mxu0 %v2041
      %v2218 = vpop.f32.mrf.mxu0
      %v2219 = vadd.f32 %v2019, %v2218
      %v2220 = vpop.f32.mrf.mxu0
      %2221 = vmatprep.mubr.f32.mxu0 0.0
      %2222 = vmatmul.mubr.f32.gmra.mxu0 %v2044
      %v2223 = vpop.f32.mrf.mxu0
      %v2224 = vadd.f32 %v2019, %v2223
      %v2225 = vpop.f32.mrf.mxu0
      %2226 = vmatprep.mubr.f32.mxu0 0.0
      %2227 = vmatmul.mubr.f32.gmra.mxu0 %v2047
      %v2228 = vpop.f32.mrf.mxu0
      %v2229 = vadd.f32 %v2019, %v2228
      %v2230 = vpop.f32.mrf.mxu0
      %2231 = vmatprep.mubr.f32.mxu0 0.0
      %2232 = vmatmul.mubr.f32.gmra.mxu0 %v2050
      %v2233 = vpop.f32.mrf.mxu0
      %v2234 = vadd.f32 %v2019, %v2233
      %v2235 = vpop.f32.mrf.mxu0
      %2236 = vmatprep.mubr.f32.mxu0 0.0
      %2237 = vmatmul.mubr.f32.gmra.mxu0 %v2053
      %v2238 = vpop.f32.mrf.mxu0
      %v2239 = vadd.f32 %v2019, %v2238
      %v2240 = vpop.f32.mrf.mxu0
      %2241 = vmatprep.mubr.f32.mxu0 0.0
      %2242 = vmatmul.mubr.f32.gmra.mxu0 %v2056
      %v2243 = vpop.f32.mrf.mxu0
      %v2244 = vadd.f32 %v2019, %v2243
      %v2245 = vpop.f32.mrf.mxu0
      %2246 = vmatprep.mubr.f32.mxu0 0.0
      %2247 = vmatmul.mubr.f32.gmra.mxu0 %v2059
      %v2248 = vpop.f32.mrf.mxu0
      %v2249 = vadd.f32 %v2019, %v2248
      %v2250 = vpop.f32.mrf.mxu0
      %2251 = vmatprep.mubr.f32.mxu0 0.0
      %2252 = vmatmul.mubr.f32.gmra.mxu0 %v2062
      %v2253 = vpop.f32.mrf.mxu0
      %v2254 = vadd.f32 %v2019, %v2253
      %v2255 = vpop.f32.mrf.mxu0
      %2256 = vmatprep.mubr.f32.mxu0 0.0
      %2257 = vmatmul.mubr.f32.gmra.mxu0 %v2065
      %v2258 = vpop.f32.mrf.mxu0
      %v2259 = vadd.f32 %v2019, %v2258
      %v2260 = vpop.f32.mrf.mxu0
      %2261 = vmatprep.mubr.f32.mxu0 0.0
      %2262 = vmatmul.mubr.f32.gmra.mxu0 %v2068
      %v2263 = vpop.f32.mrf.mxu0
      %v2264 = vadd.f32 %v2019, %v2263
      %v2265 = vpop.f32.mrf.mxu0
      %2266 = vmatprep.mubr.f32.mxu0 0.0
      %2267 = vmatmul.mubr.f32.gmra.mxu0 %v2071
      %v2268 = vpop.f32.mrf.mxu0
      %v2269 = vadd.f32 %v2019, %v2268
      %v2270 = vpop.f32.mrf.mxu0
      %2271 = vmatprep.mubr.f32.mxu0 0.0
      %2272 = vmatmul.mubr.f32.gmra.mxu0 %v2074
      %v2273 = vpop.f32.mrf.mxu0
      %v2274 = vadd.f32 %v2019, %v2273
      %v2275 = vpop.f32.mrf.mxu0
      %2276 = vmatprep.mubr.f32.mxu0 0.0
      %2277 = vmatmul.mubr.f32.gmra.mxu0 %v2077
      %v2278 = vpop.f32.mrf.mxu0
      %v2279 = vadd.f32 %v2019, %v2278
      %v2280 = vpop.f32.mrf.mxu0
      %2281 = vmatprep.mubr.f32.mxu0 0.0
      %2282 = vmatmul.mubr.f32.gmra.mxu0 %v2080
      %v2283 = vpop.f32.mrf.mxu0
      %v2284 = vadd.f32 %v2019, %v2283
      %v2285 = vpop.f32.mrf.mxu0
      %2286 = vmatprep.mubr.f32.mxu0 0.0
      %2287 = vmatmul.mubr.f32.gmra.mxu0 %v2083
      %v2288 = vpop.f32.mrf.mxu0
      %v2289 = vadd.f32 %v2019, %v2288
      %v2290 = vpop.f32.mrf.mxu0
      %2291 = vmatprep.mubr.f32.mxu0 0.0
      %2292 = vmatmul.mubr.f32.gmra.mxu0 %v2086
      %v2293 = vpop.f32.mrf.mxu0
      %v2294 = vadd.f32 %v2019, %v2293
      %v2295 = vpop.f32.mrf.mxu0
      %2296 = vmatprep.mubr.f32.mxu0 0.0
      %2297 = vmatmul.mubr.f32.gmra.mxu0 %v2089
      %v2298 = vpop.f32.mrf.mxu0
      %v2299 = vadd.f32 %v2019, %v2298
      %v2300 = vpop.f32.mrf.mxu0
      %2301 = vmatprep.mubr.f32.mxu0 0.0
      %2302 = vmatmul.mubr.f32.gmra.mxu0 %v2092
      %v2303 = vpop.f32.mrf.mxu0
      %v2304 = vadd.f32 %v2019, %v2303
      %v2305 = vpop.f32.mrf.mxu0
      %2306 = vmatprep.mubr.f32.mxu0 0.0
      %2307 = vmatmul.mubr.f32.gmra.mxu0 %v2095
      %v2308 = vpop.f32.mrf.mxu0
      %v2309 = vadd.f32 %v2019, %v2308
      %v2310 = vpop.f32.mrf.mxu0
      %2311 = vmatprep.mubr.f32.mxu0 0.0
      %2312 = vmatmul.mubr.f32.gmra.mxu0 %v2098
      %v2313 = vpop.f32.mrf.mxu0
      %v2314 = vadd.f32 %v2019, %v2313
      %v2315 = vpop.f32.mrf.mxu0
      %2316 = vmatprep.mubr.f32.mxu0 0.0
      %2317 = vmatmul.mubr.f32.gmra.mxu0 %v2101
      %v2318 = vpop.f32.mrf.mxu0
      %v2319 = vadd.f32 %v2019, %v2318
      %v2320 = vpop.f32.mrf.mxu0
      %2321 = vmatprep.mubr.f32.mxu0 0.0
      %2322 = vmatmul.mubr.f32.gmra.mxu0 %v2104
      %v2323 = vpop.f32.mrf.mxu0
      %v2324 = vadd.f32 %v2019, %v2323
      %v2325 = vpop.f32.mrf.mxu0
      %2326 = vmatprep.mubr.f32.mxu0 0.0
      %2327 = vmatmul.mubr.f32.gmra.mxu0 %v2107
      %v2328 = vpop.f32.mrf.mxu0
      %v2329 = vadd.f32 %v2019, %v2328
      %v2330 = vpop.f32.mrf.mxu0
      %2331 = vmatprep.mubr.f32.mxu0 0.0
      %2332 = vmatmul.mubr.f32.gmra.mxu0 %v2110
      %v2333 = vpop.f32.mrf.mxu0
      %v2334 = vadd.f32 %v2019, %v2333
      %v2335 = vpop.f32.mrf.mxu0
      %2336 = vmatprep.mubr.f32.mxu0 0.0
      %2337 = vmatmul.mubr.f32.gmra.mxu0 %v2113
      %v2338 = vpop.f32.mrf.mxu0
      %v2339 = vadd.f32 %v2019, %v2338
      %v2340 = vpop.f32.mrf.mxu0
      %2341 = vmatprep.mubr.f32.mxu0 0.0
      %2342 = vmatmul.mubr.f32.gmra.mxu0 %v2116
      %v2343 = vpop.f32.mrf.mxu0
      %v2344 = vadd.f32 %v2019, %v2343
      %v2345 = vpop.f32.mrf.mxu0
      %2346 = vdwg.mxu0
      %vm2347 = vcmp.ge.f32.partialorder %v2189, 0.0
      %vm2348 = vcmp.ge.f32.partialorder %v2194, 0.0
      %vm2349 = vcmp.ge.f32.partialorder %v2199, 0.0
      %vm2350 = vcmp.ge.f32.partialorder %v2204, 0.0
      %vm2351 = vcmp.ge.f32.partialorder %v2209, 0.0
      %vm2352 = vcmp.ge.f32.partialorder %v2214, 0.0
      %vm2353 = vcmp.ge.f32.partialorder %v2219, 0.0
      %vm2354 = vcmp.ge.f32.partialorder %v2224, 0.0
      %vm2355 = vcmp.ge.f32.partialorder %v2229, 0.0
      %vm2356 = vcmp.ge.f32.partialorder %v2234, 0.0
      %vm2357 = vcmp.ge.f32.partialorder %v2239, 0.0
      %vm2358 = vcmp.ge.f32.partialorder %v2244, 0.0
      %vm2359 = vcmp.ge.f32.partialorder %v2249, 0.0
      %vm2360 = vcmp.ge.f32.partialorder %v2254, 0.0
      %vm2361 = vcmp.ge.f32.partialorder %v2259, 0.0
      %vm2362 = vcmp.ge.f32.partialorder %v2264, 0.0
      %vm2363 = vcmp.ge.f32.partialorder %v2269, 0.0
      %vm2364 = vcmp.ge.f32.partialorder %v2274, 0.0
      %vm2365 = vcmp.ge.f32.partialorder %v2279, 0.0
      %vm2366 = vcmp.ge.f32.partialorder %v2284, 0.0
      %vm2367 = vcmp.ge.f32.partialorder %v2289, 0.0
      %vm2368 = vcmp.ge.f32.partialorder %v2294, 0.0
      %vm2369 = vcmp.ge.f32.partialorder %v2299, 0.0
      %vm2370 = vcmp.ge.f32.partialorder %v2304, 0.0
      %vm2371 = vcmp.ge.f32.partialorder %v2309, 0.0
      %vm2372 = vcmp.ge.f32.partialorder %v2314, 0.0
      %vm2373 = vcmp.ge.f32.partialorder %v2319, 0.0
      %vm2374 = vcmp.ge.f32.partialorder %v2324, 0.0
      %vm2375 = vcmp.ge.f32.partialorder %v2329, 0.0
      %vm2376 = vcmp.ge.f32.partialorder %v2334, 0.0
      %vm2377 = vcmp.ge.f32.partialorder %v2339, 0.0
      %vm2378 = vcmp.ge.f32.partialorder %v2344, 0.0
      %v2379 = vmul.f32 %v2189, 0.1
      %v2380 = vmul.f32 %v2194, 0.1
      %v2381 = vmul.f32 %v2199, 0.1
      %v2382 = vmul.f32 %v2204, 0.1
      %v2383 = vmul.f32 %v2209, 0.1
      %v2384 = vmul.f32 %v2214, 0.1
      %v2385 = vmul.f32 %v2219, 0.1
      %v2386 = vmul.f32 %v2224, 0.1
      %v2387 = vmul.f32 %v2229, 0.1
      %v2388 = vmul.f32 %v2234, 0.1
      %v2389 = vmul.f32 %v2239, 0.1
      %v2390 = vmul.f32 %v2244, 0.1
      %v2391 = vmul.f32 %v2249, 0.1
      %v2392 = vmul.f32 %v2254, 0.1
      %v2393 = vmul.f32 %v2259, 0.1
      %v2394 = vmul.f32 %v2264, 0.1
      %v2395 = vmul.f32 %v2269, 0.1
      %v2396 = vmul.f32 %v2274, 0.1
      %v2397 = vmul.f32 %v2279, 0.1
      %v2398 = vmul.f32 %v2284, 0.1
      %v2399 = vmul.f32 %v2289, 0.1
      %v2400 = vmul.f32 %v2294, 0.1
      %v2401 = vmul.f32 %v2299, 0.1
      %v2402 = vmul.f32 %v2304, 0.1
      %v2403 = vmul.f32 %v2309, 0.1
      %v2404 = vmul.f32 %v2314, 0.1
      %v2405 = vmul.f32 %v2319, 0.1
      %v2406 = vmul.f32 %v2324, 0.1
      %v2407 = vmul.f32 %v2329, 0.1
      %v2408 = vmul.f32 %v2334, 0.1
      %v2409 = vmul.f32 %v2339, 0.1
      %v2410 = vmul.f32 %v2344, 0.1
      %v2411 = vsel %vm2347, %v2189, %v2379
      %v2412 = vsel %vm2348, %v2194, %v2380
      %v2413 = vsel %vm2349, %v2199, %v2381
      %v2414 = vsel %vm2350, %v2204, %v2382
      %v2415 = vsel %vm2351, %v2209, %v2383
      %v2416 = vsel %vm2352, %v2214, %v2384
      %v2417 = vsel %vm2353, %v2219, %v2385
      %v2418 = vsel %vm2354, %v2224, %v2386
      %v2419 = vsel %vm2355, %v2229, %v2387
      %v2420 = vsel %vm2356, %v2234, %v2388
      %v2421 = vsel %vm2357, %v2239, %v2389
      %v2422 = vsel %vm2358, %v2244, %v2390
      %v2423 = vsel %vm2359, %v2249, %v2391
      %v2424 = vsel %vm2360, %v2254, %v2392
      %v2425 = vsel %vm2361, %v2259, %v2393
      %v2426 = vsel %vm2362, %v2264, %v2394
      %v2427 = vsel %vm2363, %v2269, %v2395
      %v2428 = vsel %vm2364, %v2274, %v2396
      %v2429 = vsel %vm2365, %v2279, %v2397
      %v2430 = vsel %vm2366, %v2284, %v2398
      %v2431 = vsel %vm2367, %v2289, %v2399
      %v2432 = vsel %vm2368, %v2294, %v2400
      %v2433 = vsel %vm2369, %v2299, %v2401
      %v2434 = vsel %vm2370, %v2304, %v2402
      %v2435 = vsel %vm2371, %v2309, %v2403
      %v2436 = vsel %vm2372, %v2314, %v2404
      %v2437 = vsel %vm2373, %v2319, %v2405
      %v2438 = vsel %vm2374, %v2324, %v2406
      %v2439 = vsel %vm2375, %v2329, %v2407
      %v2440 = vsel %vm2376, %v2334, %v2408
      %v2441 = vsel %vm2377, %v2339, %v2409
      %v2442 = vsel %vm2378, %v2344, %v2410
      %v2475 = vcombine.high %v2411, %v2411
      %v2477 = vunpack.c.l.s4 1983009808
      %v2478 = vunpack.c.0.s8 %v2477
      %v2479 = vlaneseq
      %v2480 = vshrl.u32 %v2479, 7
      %v2481 = vsub.s32 %v2478, %v2480
      %v2482 = vrot.slane %v2411, %v2481
      %v2484 = vunpack.c.l.s4 1983009808
      %v2485 = vunpack.c.0.s8 %v2484
      %v2486 = vlaneseq
      %v2487 = vshrl.u32 %v2486, 7
      %v2488 = vsub.s32 %v2485, %v2487
      %v2489 = vrot.slane %v2475, %v2488
      %v2490 = vcombine.high %v2482, %v2482
      %v2491 = vcombine.high %v2489, %v2489
      %v2492 = vcombine.high %v2412, %v2412
      %v2494 = vunpack.c.l.s4 1983009808
      %v2495 = vunpack.c.0.s8 %v2494
      %v2496 = vlaneseq
      %v2497 = vshrl.u32 %v2496, 7
      %v2498 = vsub.s32 %v2495, %v2497
      %v2499 = vrot.slane %v2412, %v2498
      %v2501 = vunpack.c.l.s4 1983009808
      %v2502 = vunpack.c.0.s8 %v2501
      %v2503 = vlaneseq
      %v2504 = vshrl.u32 %v2503, 7
      %v2505 = vsub.s32 %v2502, %v2504
      %v2506 = vrot.slane %v2492, %v2505
      %v2507 = vcombine.high %v2499, %v2499
      %v2508 = vcombine.high %v2506, %v2506
      %v2509 = vcombine.high %v2413, %v2413
      %v2511 = vunpack.c.l.s4 1983009808
      %v2512 = vunpack.c.0.s8 %v2511
      %v2513 = vlaneseq
      %v2514 = vshrl.u32 %v2513, 7
      %v2515 = vsub.s32 %v2512, %v2514
      %v2516 = vrot.slane %v2413, %v2515
      %v2518 = vunpack.c.l.s4 1983009808
      %v2519 = vunpack.c.0.s8 %v2518
      %v2520 = vlaneseq
      %v2521 = vshrl.u32 %v2520, 7
      %v2522 = vsub.s32 %v2519, %v2521
      %v2523 = vrot.slane %v2509, %v2522
      %v2524 = vcombine.high %v2516, %v2516
      %v2525 = vcombine.high %v2523, %v2523
      %v2526 = vcombine.high %v2414, %v2414
      %v2528 = vunpack.c.l.s4 1983009808
      %v2529 = vunpack.c.0.s8 %v2528
      %v2530 = vlaneseq
      %v2531 = vshrl.u32 %v2530, 7
      %v2532 = vsub.s32 %v2529, %v2531
      %v2533 = vrot.slane %v2414, %v2532
      %v2535 = vunpack.c.l.s4 1983009808
      %v2536 = vunpack.c.0.s8 %v2535
      %v2537 = vlaneseq
      %v2538 = vshrl.u32 %v2537, 7
      %v2539 = vsub.s32 %v2536, %v2538
      %v2540 = vrot.slane %v2526, %v2539
      %v2541 = vcombine.high %v2533, %v2533
      %v2542 = vcombine.high %v2540, %v2540
      %v2543 = vcombine.high %v2415, %v2415
      %v2545 = vunpack.c.l.s4 1983009808
      %v2546 = vunpack.c.0.s8 %v2545
      %v2547 = vlaneseq
      %v2548 = vshrl.u32 %v2547, 7
      %v2549 = vsub.s32 %v2546, %v2548
      %v2550 = vrot.slane %v2415, %v2549
      %v2552 = vunpack.c.l.s4 1983009808
      %v2553 = vunpack.c.0.s8 %v2552
      %v2554 = vlaneseq
      %v2555 = vshrl.u32 %v2554, 7
      %v2556 = vsub.s32 %v2553, %v2555
      %v2557 = vrot.slane %v2543, %v2556
      %v2558 = vcombine.high %v2550, %v2550
      %v2559 = vcombine.high %v2557, %v2557
      %v2560 = vcombine.high %v2416, %v2416
      %v2562 = vunpack.c.l.s4 1983009808
      %v2563 = vunpack.c.0.s8 %v2562
      %v2564 = vlaneseq
      %v2565 = vshrl.u32 %v2564, 7
      %v2566 = vsub.s32 %v2563, %v2565
      %v2567 = vrot.slane %v2416, %v2566
      %v2569 = vunpack.c.l.s4 1983009808
      %v2570 = vunpack.c.0.s8 %v2569
      %v2571 = vlaneseq
      %v2572 = vshrl.u32 %v2571, 7
      %v2573 = vsub.s32 %v2570, %v2572
      %v2574 = vrot.slane %v2560, %v2573
      %v2575 = vcombine.high %v2567, %v2567
      %v2576 = vcombine.high %v2574, %v2574
      %v2577 = vcombine.high %v2417, %v2417
      %v2579 = vunpack.c.l.s4 1983009808
      %v2580 = vunpack.c.0.s8 %v2579
      %v2581 = vlaneseq
      %v2582 = vshrl.u32 %v2581, 7
      %v2583 = vsub.s32 %v2580, %v2582
      %v2584 = vrot.slane %v2417, %v2583
      %v2586 = vunpack.c.l.s4 1983009808
      %v2587 = vunpack.c.0.s8 %v2586
      %v2588 = vlaneseq
      %v2589 = vshrl.u32 %v2588, 7
      %v2590 = vsub.s32 %v2587, %v2589
      %v2591 = vrot.slane %v2577, %v2590
      %v2592 = vcombine.high %v2584, %v2584
      %v2593 = vcombine.high %v2591, %v2591
      %v2594 = vcombine.high %v2418, %v2418
      %v2596 = vunpack.c.l.s4 1983009808
      %v2597 = vunpack.c.0.s8 %v2596
      %v2598 = vlaneseq
      %v2599 = vshrl.u32 %v2598, 7
      %v2600 = vsub.s32 %v2597, %v2599
      %v2601 = vrot.slane %v2418, %v2600
      %v2603 = vunpack.c.l.s4 1983009808
      %v2604 = vunpack.c.0.s8 %v2603
      %v2605 = vlaneseq
      %v2606 = vshrl.u32 %v2605, 7
      %v2607 = vsub.s32 %v2604, %v2606
      %v2608 = vrot.slane %v2594, %v2607
      %v2609 = vcombine.high %v2601, %v2601
      %v2610 = vcombine.high %v2608, %v2608
      %v2611 = vcombine.high %v2419, %v2419
      %v2613 = vunpack.c.l.s4 1983009808
      %v2614 = vunpack.c.0.s8 %v2613
      %v2615 = vlaneseq
      %v2616 = vshrl.u32 %v2615, 7
      %v2617 = vsub.s32 %v2614, %v2616
      %v2618 = vrot.slane %v2419, %v2617
      %v2620 = vunpack.c.l.s4 1983009808
      %v2621 = vunpack.c.0.s8 %v2620
      %v2622 = vlaneseq
      %v2623 = vshrl.u32 %v2622, 7
      %v2624 = vsub.s32 %v2621, %v2623
      %v2625 = vrot.slane %v2611, %v2624
      %v2626 = vcombine.high %v2618, %v2618
      %v2627 = vcombine.high %v2625, %v2625
      %v2628 = vcombine.high %v2420, %v2420
      %v2630 = vunpack.c.l.s4 1983009808
      %v2631 = vunpack.c.0.s8 %v2630
      %v2632 = vlaneseq
      %v2633 = vshrl.u32 %v2632, 7
      %v2634 = vsub.s32 %v2631, %v2633
      %v2635 = vrot.slane %v2420, %v2634
      %v2637 = vunpack.c.l.s4 1983009808
      %v2638 = vunpack.c.0.s8 %v2637
      %v2639 = vlaneseq
      %v2640 = vshrl.u32 %v2639, 7
      %v2641 = vsub.s32 %v2638, %v2640
      %v2642 = vrot.slane %v2628, %v2641
      %v2643 = vcombine.high %v2635, %v2635
      %v2644 = vcombine.high %v2642, %v2642
      %v2645 = vcombine.high %v2421, %v2421
      %v2647 = vunpack.c.l.s4 1983009808
      %v2648 = vunpack.c.0.s8 %v2647
      %v2649 = vlaneseq
      %v2650 = vshrl.u32 %v2649, 7
      %v2651 = vsub.s32 %v2648, %v2650
      %v2652 = vrot.slane %v2421, %v2651
      %v2654 = vunpack.c.l.s4 1983009808
      %v2655 = vunpack.c.0.s8 %v2654
      %v2656 = vlaneseq
      %v2657 = vshrl.u32 %v2656, 7
      %v2658 = vsub.s32 %v2655, %v2657
      %v2659 = vrot.slane %v2645, %v2658
      %v2660 = vcombine.high %v2652, %v2652
      %v2661 = vcombine.high %v2659, %v2659
      %v2662 = vcombine.high %v2422, %v2422
      %v2664 = vunpack.c.l.s4 1983009808
      %v2665 = vunpack.c.0.s8 %v2664
      %v2666 = vlaneseq
      %v2667 = vshrl.u32 %v2666, 7
      %v2668 = vsub.s32 %v2665, %v2667
      %v2669 = vrot.slane %v2422, %v2668
      %v2671 = vunpack.c.l.s4 1983009808
      %v2672 = vunpack.c.0.s8 %v2671
      %v2673 = vlaneseq
      %v2674 = vshrl.u32 %v2673, 7
      %v2675 = vsub.s32 %v2672, %v2674
      %v2676 = vrot.slane %v2662, %v2675
      %v2677 = vcombine.high %v2669, %v2669
      %v2678 = vcombine.high %v2676, %v2676
      %v2679 = vcombine.high %v2423, %v2423
      %v2681 = vunpack.c.l.s4 1983009808
      %v2682 = vunpack.c.0.s8 %v2681
      %v2683 = vlaneseq
      %v2684 = vshrl.u32 %v2683, 7
      %v2685 = vsub.s32 %v2682, %v2684
      %v2686 = vrot.slane %v2423, %v2685
      %v2688 = vunpack.c.l.s4 1983009808
      %v2689 = vunpack.c.0.s8 %v2688
      %v2690 = vlaneseq
      %v2691 = vshrl.u32 %v2690, 7
      %v2692 = vsub.s32 %v2689, %v2691
      %v2693 = vrot.slane %v2679, %v2692
      %v2694 = vcombine.high %v2686, %v2686
      %v2695 = vcombine.high %v2693, %v2693
      %v2696 = vcombine.high %v2424, %v2424
      %v2698 = vunpack.c.l.s4 1983009808
      %v2699 = vunpack.c.0.s8 %v2698
      %v2700 = vlaneseq
      %v2701 = vshrl.u32 %v2700, 7
      %v2702 = vsub.s32 %v2699, %v2701
      %v2703 = vrot.slane %v2424, %v2702
      %v2705 = vunpack.c.l.s4 1983009808
      %v2706 = vunpack.c.0.s8 %v2705
      %v2707 = vlaneseq
      %v2708 = vshrl.u32 %v2707, 7
      %v2709 = vsub.s32 %v2706, %v2708
      %v2710 = vrot.slane %v2696, %v2709
      %v2711 = vcombine.high %v2703, %v2703
      %v2712 = vcombine.high %v2710, %v2710
      %v2713 = vcombine.high %v2425, %v2425
      %v2715 = vunpack.c.l.s4 1983009808
      %v2716 = vunpack.c.0.s8 %v2715
      %v2717 = vlaneseq
      %v2718 = vshrl.u32 %v2717, 7
      %v2719 = vsub.s32 %v2716, %v2718
      %v2720 = vrot.slane %v2425, %v2719
      %v2722 = vunpack.c.l.s4 1983009808
      %v2723 = vunpack.c.0.s8 %v2722
      %v2724 = vlaneseq
      %v2725 = vshrl.u32 %v2724, 7
      %v2726 = vsub.s32 %v2723, %v2725
      %v2727 = vrot.slane %v2713, %v2726
      %v2728 = vcombine.high %v2720, %v2720
      %v2729 = vcombine.high %v2727, %v2727
      %v2730 = vcombine.high %v2426, %v2426
      %v2732 = vunpack.c.l.s4 1983009808
      %v2733 = vunpack.c.0.s8 %v2732
      %v2734 = vlaneseq
      %v2735 = vshrl.u32 %v2734, 7
      %v2736 = vsub.s32 %v2733, %v2735
      %v2737 = vrot.slane %v2426, %v2736
      %v2739 = vunpack.c.l.s4 1983009808
      %v2740 = vunpack.c.0.s8 %v2739
      %v2741 = vlaneseq
      %v2742 = vshrl.u32 %v2741, 7
      %v2743 = vsub.s32 %v2740, %v2742
      %v2744 = vrot.slane %v2730, %v2743
      %v2745 = vcombine.high %v2737, %v2737
      %v2746 = vcombine.high %v2744, %v2744
      %v2747 = vcombine.high %v2427, %v2427
      %v2749 = vunpack.c.l.s4 1983009808
      %v2750 = vunpack.c.0.s8 %v2749
      %v2751 = vlaneseq
      %v2752 = vshrl.u32 %v2751, 7
      %v2753 = vsub.s32 %v2750, %v2752
      %v2754 = vrot.slane %v2427, %v2753
      %v2756 = vunpack.c.l.s4 1983009808
      %v2757 = vunpack.c.0.s8 %v2756
      %v2758 = vlaneseq
      %v2759 = vshrl.u32 %v2758, 7
      %v2760 = vsub.s32 %v2757, %v2759
      %v2761 = vrot.slane %v2747, %v2760
      %v2762 = vcombine.high %v2754, %v2754
      %v2763 = vcombine.high %v2761, %v2761
      %v2764 = vcombine.high %v2428, %v2428
      %v2766 = vunpack.c.l.s4 1983009808
      %v2767 = vunpack.c.0.s8 %v2766
      %v2768 = vlaneseq
      %v2769 = vshrl.u32 %v2768, 7
      %v2770 = vsub.s32 %v2767, %v2769
      %v2771 = vrot.slane %v2428, %v2770
      %v2773 = vunpack.c.l.s4 1983009808
      %v2774 = vunpack.c.0.s8 %v2773
      %v2775 = vlaneseq
      %v2776 = vshrl.u32 %v2775, 7
      %v2777 = vsub.s32 %v2774, %v2776
      %v2778 = vrot.slane %v2764, %v2777
      %v2779 = vcombine.high %v2771, %v2771
      %v2780 = vcombine.high %v2778, %v2778
      %v2781 = vcombine.high %v2429, %v2429
      %v2783 = vunpack.c.l.s4 1983009808
      %v2784 = vunpack.c.0.s8 %v2783
      %v2785 = vlaneseq
      %v2786 = vshrl.u32 %v2785, 7
      %v2787 = vsub.s32 %v2784, %v2786
      %v2788 = vrot.slane %v2429, %v2787
      %v2790 = vunpack.c.l.s4 1983009808
      %v2791 = vunpack.c.0.s8 %v2790
      %v2792 = vlaneseq
      %v2793 = vshrl.u32 %v2792, 7
      %v2794 = vsub.s32 %v2791, %v2793
      %v2795 = vrot.slane %v2781, %v2794
      %v2796 = vcombine.high %v2788, %v2788
      %v2797 = vcombine.high %v2795, %v2795
      %v2798 = vcombine.high %v2430, %v2430
      %v2800 = vunpack.c.l.s4 1983009808
      %v2801 = vunpack.c.0.s8 %v2800
      %v2802 = vlaneseq
      %v2803 = vshrl.u32 %v2802, 7
      %v2804 = vsub.s32 %v2801, %v2803
      %v2805 = vrot.slane %v2430, %v2804
      %v2807 = vunpack.c.l.s4 1983009808
      %v2808 = vunpack.c.0.s8 %v2807
      %v2809 = vlaneseq
      %v2810 = vshrl.u32 %v2809, 7
      %v2811 = vsub.s32 %v2808, %v2810
      %v2812 = vrot.slane %v2798, %v2811
      %v2813 = vcombine.high %v2805, %v2805
      %v2814 = vcombine.high %v2812, %v2812
      %v2815 = vcombine.high %v2431, %v2431
      %v2817 = vunpack.c.l.s4 1983009808
      %v2818 = vunpack.c.0.s8 %v2817
      %v2819 = vlaneseq
      %v2820 = vshrl.u32 %v2819, 7
      %v2821 = vsub.s32 %v2818, %v2820
      %v2822 = vrot.slane %v2431, %v2821
      %v2824 = vunpack.c.l.s4 1983009808
      %v2825 = vunpack.c.0.s8 %v2824
      %v2826 = vlaneseq
      %v2827 = vshrl.u32 %v2826, 7
      %v2828 = vsub.s32 %v2825, %v2827
      %v2829 = vrot.slane %v2815, %v2828
      %v2830 = vcombine.high %v2822, %v2822
      %v2831 = vcombine.high %v2829, %v2829
      %v2832 = vcombine.high %v2432, %v2432
      %v2834 = vunpack.c.l.s4 1983009808
      %v2835 = vunpack.c.0.s8 %v2834
      %v2836 = vlaneseq
      %v2837 = vshrl.u32 %v2836, 7
      %v2838 = vsub.s32 %v2835, %v2837
      %v2839 = vrot.slane %v2432, %v2838
      %v2841 = vunpack.c.l.s4 1983009808
      %v2842 = vunpack.c.0.s8 %v2841
      %v2843 = vlaneseq
      %v2844 = vshrl.u32 %v2843, 7
      %v2845 = vsub.s32 %v2842, %v2844
      %v2846 = vrot.slane %v2832, %v2845
      %v2847 = vcombine.high %v2839, %v2839
      %v2848 = vcombine.high %v2846, %v2846
      %v2849 = vcombine.high %v2433, %v2433
      %v2851 = vunpack.c.l.s4 1983009808
      %v2852 = vunpack.c.0.s8 %v2851
      %v2853 = vlaneseq
      %v2854 = vshrl.u32 %v2853, 7
      %v2855 = vsub.s32 %v2852, %v2854
      %v2856 = vrot.slane %v2433, %v2855
      %v2858 = vunpack.c.l.s4 1983009808
      %v2859 = vunpack.c.0.s8 %v2858
      %v2860 = vlaneseq
      %v2861 = vshrl.u32 %v2860, 7
      %v2862 = vsub.s32 %v2859, %v2861
      %v2863 = vrot.slane %v2849, %v2862
      %v2864 = vcombine.high %v2856, %v2856
      %v2865 = vcombine.high %v2863, %v2863
      %v2866 = vcombine.high %v2434, %v2434
      %v2868 = vunpack.c.l.s4 1983009808
      %v2869 = vunpack.c.0.s8 %v2868
      %v2870 = vlaneseq
      %v2871 = vshrl.u32 %v2870, 7
      %v2872 = vsub.s32 %v2869, %v2871
      %v2873 = vrot.slane %v2434, %v2872
      %v2875 = vunpack.c.l.s4 1983009808
      %v2876 = vunpack.c.0.s8 %v2875
      %v2877 = vlaneseq
      %v2878 = vshrl.u32 %v2877, 7
      %v2879 = vsub.s32 %v2876, %v2878
      %v2880 = vrot.slane %v2866, %v2879
      %v2881 = vcombine.high %v2873, %v2873
      %v2882 = vcombine.high %v2880, %v2880
      %v2883 = vcombine.high %v2435, %v2435
      %v2885 = vunpack.c.l.s4 1983009808
      %v2886 = vunpack.c.0.s8 %v2885
      %v2887 = vlaneseq
      %v2888 = vshrl.u32 %v2887, 7
      %v2889 = vsub.s32 %v2886, %v2888
      %v2890 = vrot.slane %v2435, %v2889
      %v2892 = vunpack.c.l.s4 1983009808
      %v2893 = vunpack.c.0.s8 %v2892
      %v2894 = vlaneseq
      %v2895 = vshrl.u32 %v2894, 7
      %v2896 = vsub.s32 %v2893, %v2895
      %v2897 = vrot.slane %v2883, %v2896
      %v2898 = vcombine.high %v2890, %v2890
      %v2899 = vcombine.high %v2897, %v2897
      %v2900 = vcombine.high %v2436, %v2436
      %v2902 = vunpack.c.l.s4 1983009808
      %v2903 = vunpack.c.0.s8 %v2902
      %v2904 = vlaneseq
      %v2905 = vshrl.u32 %v2904, 7
      %v2906 = vsub.s32 %v2903, %v2905
      %v2907 = vrot.slane %v2436, %v2906
      %v2909 = vunpack.c.l.s4 1983009808
      %v2910 = vunpack.c.0.s8 %v2909
      %v2911 = vlaneseq
      %v2912 = vshrl.u32 %v2911, 7
      %v2913 = vsub.s32 %v2910, %v2912
      %v2914 = vrot.slane %v2900, %v2913
      %v2915 = vcombine.high %v2907, %v2907
      %v2916 = vcombine.high %v2914, %v2914
      %v2917 = vcombine.high %v2437, %v2437
      %v2919 = vunpack.c.l.s4 1983009808
      %v2920 = vunpack.c.0.s8 %v2919
      %v2921 = vlaneseq
      %v2922 = vshrl.u32 %v2921, 7
      %v2923 = vsub.s32 %v2920, %v2922
      %v2924 = vrot.slane %v2437, %v2923
      %v2926 = vunpack.c.l.s4 1983009808
      %v2927 = vunpack.c.0.s8 %v2926
      %v2928 = vlaneseq
      %v2929 = vshrl.u32 %v2928, 7
      %v2930 = vsub.s32 %v2927, %v2929
      %v2931 = vrot.slane %v2917, %v2930
      %v2932 = vcombine.high %v2924, %v2924
      %v2933 = vcombine.high %v2931, %v2931
      %v2934 = vcombine.high %v2438, %v2438
      %v2936 = vunpack.c.l.s4 1983009808
      %v2937 = vunpack.c.0.s8 %v2936
      %v2938 = vlaneseq
      %v2939 = vshrl.u32 %v2938, 7
      %v2940 = vsub.s32 %v2937, %v2939
      %v2941 = vrot.slane %v2438, %v2940
      %v2943 = vunpack.c.l.s4 1983009808
      %v2944 = vunpack.c.0.s8 %v2943
      %v2945 = vlaneseq
      %v2946 = vshrl.u32 %v2945, 7
      %v2947 = vsub.s32 %v2944, %v2946
      %v2948 = vrot.slane %v2934, %v2947
      %v2949 = vcombine.high %v2941, %v2941
      %v2950 = vcombine.high %v2948, %v2948
      %v2951 = vcombine.high %v2439, %v2439
      %v2953 = vunpack.c.l.s4 1983009808
      %v2954 = vunpack.c.0.s8 %v2953
      %v2955 = vlaneseq
      %v2956 = vshrl.u32 %v2955, 7
      %v2957 = vsub.s32 %v2954, %v2956
      %v2958 = vrot.slane %v2439, %v2957
      %v2960 = vunpack.c.l.s4 1983009808
      %v2961 = vunpack.c.0.s8 %v2960
      %v2962 = vlaneseq
      %v2963 = vshrl.u32 %v2962, 7
      %v2964 = vsub.s32 %v2961, %v2963
      %v2965 = vrot.slane %v2951, %v2964
      %v2966 = vcombine.high %v2958, %v2958
      %v2967 = vcombine.high %v2965, %v2965
      %v2968 = vcombine.high %v2440, %v2440
      %v2970 = vunpack.c.l.s4 1983009808
      %v2971 = vunpack.c.0.s8 %v2970
      %v2972 = vlaneseq
      %v2973 = vshrl.u32 %v2972, 7
      %v2974 = vsub.s32 %v2971, %v2973
      %v2975 = vrot.slane %v2440, %v2974
      %v2977 = vunpack.c.l.s4 1983009808
      %v2978 = vunpack.c.0.s8 %v2977
      %v2979 = vlaneseq
      %v2980 = vshrl.u32 %v2979, 7
      %v2981 = vsub.s32 %v2978, %v2980
      %v2982 = vrot.slane %v2968, %v2981
      %v2983 = vcombine.high %v2975, %v2975
      %v2984 = vcombine.high %v2982, %v2982
      %v2985 = vcombine.high %v2441, %v2441
      %v2987 = vunpack.c.l.s4 1983009808
      %v2988 = vunpack.c.0.s8 %v2987
      %v2989 = vlaneseq
      %v2990 = vshrl.u32 %v2989, 7
      %v2991 = vsub.s32 %v2988, %v2990
      %v2992 = vrot.slane %v2441, %v2991
      %v2994 = vunpack.c.l.s4 1983009808
      %v2995 = vunpack.c.0.s8 %v2994
      %v2996 = vlaneseq
      %v2997 = vshrl.u32 %v2996, 7
      %v2998 = vsub.s32 %v2995, %v2997
      %v2999 = vrot.slane %v2985, %v2998
      %v3000 = vcombine.high %v2992, %v2992
      %v3001 = vcombine.high %v2999, %v2999
      %v3002 = vcombine.high %v2442, %v2442
      %v3004 = vunpack.c.l.s4 1983009808
      %v3005 = vunpack.c.0.s8 %v3004
      %v3006 = vlaneseq
      %v3007 = vshrl.u32 %v3006, 7
      %v3008 = vsub.s32 %v3005, %v3007
      %v3009 = vrot.slane %v2442, %v3008
      %v3011 = vunpack.c.l.s4 1983009808
      %v3012 = vunpack.c.0.s8 %v3011
      %v3013 = vlaneseq
      %v3014 = vshrl.u32 %v3013, 7
      %v3015 = vsub.s32 %v3012, %v3014
      %v3016 = vrot.slane %v3002, %v3015
      %v3017 = vcombine.high %v3009, %v3009
      %v3018 = vcombine.high %v3016, %v3016
      %v3147 = vrot.slane %v2482, 7
      %v3148 = vrot.slane %v3147, 2
      %v3149 = vrot.slane %v2490, 7
      %v3150 = vrot.slane %v3149, 2
      %v3151 = vrot.slane %v2489, 7
      %v3152 = vrot.slane %v3151, 2
      %v3153 = vrot.slane %v2491, 7
      %v3154 = vrot.slane %v3153, 2
      %v3155 = vrot.slane %v2499, 7
      %v3156 = vrot.slane %v3155, 2
      %v3157 = vrot.slane %v2507, 7
      %v3158 = vrot.slane %v3157, 2
      %v3159 = vrot.slane %v2506, 7
      %v3160 = vrot.slane %v3159, 2
      %v3161 = vrot.slane %v2508, 7
      %v3162 = vrot.slane %v3161, 2
      %v3163 = vrot.slane %v2550, 7
      %v3164 = vrot.slane %v3163, 2
      %v3165 = vrot.slane %v2558, 7
      %v3166 = vrot.slane %v3165, 2
      %v3167 = vrot.slane %v2557, 7
      %v3168 = vrot.slane %v3167, 2
      %v3169 = vrot.slane %v2559, 7
      %v3170 = vrot.slane %v3169, 2
      %v3171 = vrot.slane %v2567, 7
      %v3172 = vrot.slane %v3171, 2
      %v3173 = vrot.slane %v2575, 7
      %v3174 = vrot.slane %v3173, 2
      %v3175 = vrot.slane %v2574, 7
      %v3176 = vrot.slane %v3175, 2
      %v3177 = vrot.slane %v2576, 7
      %v3178 = vrot.slane %v3177, 2
      %v3179 = vrot.slane %v2618, 7
      %v3180 = vrot.slane %v3179, 2
      %v3181 = vrot.slane %v2626, 7
      %v3182 = vrot.slane %v3181, 2
      %v3183 = vrot.slane %v2625, 7
      %v3184 = vrot.slane %v3183, 2
      %v3185 = vrot.slane %v2627, 7
      %v3186 = vrot.slane %v3185, 2
      %v3187 = vrot.slane %v2635, 7
      %v3188 = vrot.slane %v3187, 2
      %v3189 = vrot.slane %v2643, 7
      %v3190 = vrot.slane %v3189, 2
      %v3191 = vrot.slane %v2642, 7
      %v3192 = vrot.slane %v3191, 2
      %v3193 = vrot.slane %v2644, 7
      %v3194 = vrot.slane %v3193, 2
      %v3195 = vrot.slane %v2686, 7
      %v3196 = vrot.slane %v3195, 2
      %v3197 = vrot.slane %v2694, 7
      %v3198 = vrot.slane %v3197, 2
      %v3199 = vrot.slane %v2693, 7
      %v3200 = vrot.slane %v3199, 2
      %v3201 = vrot.slane %v2695, 7
      %v3202 = vrot.slane %v3201, 2
      %v3203 = vrot.slane %v2703, 7
      %v3204 = vrot.slane %v3203, 2
      %v3205 = vrot.slane %v2711, 7
      %v3206 = vrot.slane %v3205, 2
      %v3207 = vrot.slane %v2710, 7
      %v3208 = vrot.slane %v3207, 2
      %v3209 = vrot.slane %v2712, 7
      %v3210 = vrot.slane %v3209, 2
      %v3211 = vrot.slane %v2754, 7
      %v3212 = vrot.slane %v3211, 2
      %v3213 = vrot.slane %v2762, 7
      %v3214 = vrot.slane %v3213, 2
      %v3215 = vrot.slane %v2761, 7
      %v3216 = vrot.slane %v3215, 2
      %v3217 = vrot.slane %v2763, 7
      %v3218 = vrot.slane %v3217, 2
      %v3219 = vrot.slane %v2771, 7
      %v3220 = vrot.slane %v3219, 2
      %v3221 = vrot.slane %v2779, 7
      %v3222 = vrot.slane %v3221, 2
      %v3223 = vrot.slane %v2778, 7
      %v3224 = vrot.slane %v3223, 2
      %v3225 = vrot.slane %v2780, 7
      %v3226 = vrot.slane %v3225, 2
      %v3227 = vrot.slane %v2822, 7
      %v3228 = vrot.slane %v3227, 2
      %v3229 = vrot.slane %v2830, 7
      %v3230 = vrot.slane %v3229, 2
      %v3231 = vrot.slane %v2829, 7
      %v3232 = vrot.slane %v3231, 2
      %v3233 = vrot.slane %v2831, 7
      %v3234 = vrot.slane %v3233, 2
      %v3235 = vrot.slane %v2839, 7
      %v3236 = vrot.slane %v3235, 2
      %v3237 = vrot.slane %v2847, 7
      %v3238 = vrot.slane %v3237, 2
      %v3239 = vrot.slane %v2846, 7
      %v3240 = vrot.slane %v3239, 2
      %v3241 = vrot.slane %v2848, 7
      %v3242 = vrot.slane %v3241, 2
      %v3243 = vrot.slane %v2890, 7
      %v3244 = vrot.slane %v3243, 2
      %v3245 = vrot.slane %v2898, 7
      %v3246 = vrot.slane %v3245, 2
      %v3247 = vrot.slane %v2897, 7
      %v3248 = vrot.slane %v3247, 2
      %v3249 = vrot.slane %v2899, 7
      %v3250 = vrot.slane %v3249, 2
      %v3251 = vrot.slane %v2907, 7
      %v3252 = vrot.slane %v3251, 2
      %v3253 = vrot.slane %v2915, 7
      %v3254 = vrot.slane %v3253, 2
      %v3255 = vrot.slane %v2914, 7
      %v3256 = vrot.slane %v3255, 2
      %v3257 = vrot.slane %v2916, 7
      %v3258 = vrot.slane %v3257, 2
      %v3259 = vrot.slane %v2958, 7
      %v3260 = vrot.slane %v3259, 2
      %v3261 = vrot.slane %v2966, 7
      %v3262 = vrot.slane %v3261, 2
      %v3263 = vrot.slane %v2965, 7
      %v3264 = vrot.slane %v3263, 2
      %v3265 = vrot.slane %v2967, 7
      %v3266 = vrot.slane %v3265, 2
      %v3267 = vrot.slane %v2975, 7
      %v3268 = vrot.slane %v3267, 2
      %v3269 = vrot.slane %v2983, 7
      %v3270 = vrot.slane %v3269, 2
      %v3271 = vrot.slane %v2982, 7
      %v3272 = vrot.slane %v3271, 2
      %v3273 = vrot.slane %v2984, 7
      %v3274 = vrot.slane %v3273, 2
      %v3339 = vmax.f32 %v2482, %v3148
      %v3340 = vmax.f32 %v2490, %v3150
      %v3341 = vmax.f32 %v2489, %v3152
      %v3342 = vmax.f32 %v2491, %v3154
      %v3343 = vmax.f32 %v2499, %v3156
      %v3344 = vmax.f32 %v2507, %v3158
      %v3345 = vmax.f32 %v2506, %v3160
      %v3346 = vmax.f32 %v2508, %v3162
      %v3347 = vmax.f32 %v2550, %v3164
      %v3348 = vmax.f32 %v2558, %v3166
      %v3349 = vmax.f32 %v2557, %v3168
      %v3350 = vmax.f32 %v2559, %v3170
      %v3351 = vmax.f32 %v2567, %v3172
      %v3352 = vmax.f32 %v2575, %v3174
      %v3353 = vmax.f32 %v2574, %v3176
      %v3354 = vmax.f32 %v2576, %v3178
      %v3355 = vmax.f32 %v2618, %v3180
      %v3356 = vmax.f32 %v2626, %v3182
      %v3357 = vmax.f32 %v2625, %v3184
      %v3358 = vmax.f32 %v2627, %v3186
      %v3359 = vmax.f32 %v2635, %v3188
      %v3360 = vmax.f32 %v2643, %v3190
      %v3361 = vmax.f32 %v2642, %v3192
      %v3362 = vmax.f32 %v2644, %v3194
      %v3363 = vmax.f32 %v2686, %v3196
      %v3364 = vmax.f32 %v2694, %v3198
      %v3365 = vmax.f32 %v2693, %v3200
      %v3366 = vmax.f32 %v2695, %v3202
      %v3367 = vmax.f32 %v2703, %v3204
      %v3368 = vmax.f32 %v2711, %v3206
      %v3369 = vmax.f32 %v2710, %v3208
      %v3370 = vmax.f32 %v2712, %v3210
      %v3371 = vmax.f32 %v2754, %v3212
      %v3372 = vmax.f32 %v2762, %v3214
      %v3373 = vmax.f32 %v2761, %v3216
      %v3374 = vmax.f32 %v2763, %v3218
      %v3375 = vmax.f32 %v2771, %v3220
      %v3376 = vmax.f32 %v2779, %v3222
      %v3377 = vmax.f32 %v2778, %v3224
      %v3378 = vmax.f32 %v2780, %v3226
      %v3379 = vmax.f32 %v2822, %v3228
      %v3380 = vmax.f32 %v2830, %v3230
      %v3381 = vmax.f32 %v2829, %v3232
      %v3382 = vmax.f32 %v2831, %v3234
      %v3383 = vmax.f32 %v2839, %v3236
      %v3384 = vmax.f32 %v2847, %v3238
      %v3385 = vmax.f32 %v2846, %v3240
      %v3386 = vmax.f32 %v2848, %v3242
      %v3387 = vmax.f32 %v2890, %v3244
      %v3388 = vmax.f32 %v2898, %v3246
      %v3389 = vmax.f32 %v2897, %v3248
      %v3390 = vmax.f32 %v2899, %v3250
      %v3391 = vmax.f32 %v2907, %v3252
      %v3392 = vmax.f32 %v2915, %v3254
      %v3393 = vmax.f32 %v2914, %v3256
      %v3394 = vmax.f32 %v2916, %v3258
      %v3395 = vmax.f32 %v2958, %v3260
      %v3396 = vmax.f32 %v2966, %v3262
      %v3397 = vmax.f32 %v2965, %v3264
      %v3398 = vmax.f32 %v2967, %v3266
      %v3399 = vmax.f32 %v2975, %v3268
      %v3400 = vmax.f32 %v2983, %v3270
      %v3401 = vmax.f32 %v2982, %v3272
      %v3402 = vmax.f32 %v2984, %v3274
      %v3403 = vrot.slane %v2516, 7
      %v3404 = vrot.slane %v3403, 2
      %v3405 = vrot.slane %v2524, 7
      %v3406 = vrot.slane %v3405, 2
      %v3407 = vrot.slane %v2523, 7
      %v3408 = vrot.slane %v3407, 2
      %v3409 = vrot.slane %v2525, 7
      %v3410 = vrot.slane %v3409, 2
      %v3411 = vrot.slane %v2533, 7
      %v3412 = vrot.slane %v3411, 2
      %v3413 = vrot.slane %v2541, 7
      %v3414 = vrot.slane %v3413, 2
      %v3415 = vrot.slane %v2540, 7
      %v3416 = vrot.slane %v3415, 2
      %v3417 = vrot.slane %v2542, 7
      %v3418 = vrot.slane %v3417, 2
      %v3419 = vrot.slane %v2584, 7
      %v3420 = vrot.slane %v3419, 2
      %v3421 = vrot.slane %v2592, 7
      %v3422 = vrot.slane %v3421, 2
      %v3423 = vrot.slane %v2591, 7
      %v3424 = vrot.slane %v3423, 2
      %v3425 = vrot.slane %v2593, 7
      %v3426 = vrot.slane %v3425, 2
      %v3427 = vrot.slane %v2601, 7
      %v3428 = vrot.slane %v3427, 2
      %v3429 = vrot.slane %v2609, 7
      %v3430 = vrot.slane %v3429, 2
      %v3431 = vrot.slane %v2608, 7
      %v3432 = vrot.slane %v3431, 2
      %v3433 = vrot.slane %v2610, 7
      %v3434 = vrot.slane %v3433, 2
      %v3435 = vrot.slane %v2652, 7
      %v3436 = vrot.slane %v3435, 2
      %v3437 = vrot.slane %v2660, 7
      %v3438 = vrot.slane %v3437, 2
      %v3439 = vrot.slane %v2659, 7
      %v3440 = vrot.slane %v3439, 2
      %v3441 = vrot.slane %v2661, 7
      %v3442 = vrot.slane %v3441, 2
      %v3443 = vrot.slane %v2669, 7
      %v3444 = vrot.slane %v3443, 2
      %v3445 = vrot.slane %v2677, 7
      %v3446 = vrot.slane %v3445, 2
      %v3447 = vrot.slane %v2676, 7
      %v3448 = vrot.slane %v3447, 2
      %v3449 = vrot.slane %v2678, 7
      %v3450 = vrot.slane %v3449, 2
      %v3451 = vrot.slane %v2720, 7
      %v3452 = vrot.slane %v3451, 2
      %v3453 = vrot.slane %v2728, 7
      %v3454 = vrot.slane %v3453, 2
      %v3455 = vrot.slane %v2727, 7
      %v3456 = vrot.slane %v3455, 2
      %v3457 = vrot.slane %v2729, 7
      %v3458 = vrot.slane %v3457, 2
      %v3459 = vrot.slane %v2737, 7
      %v3460 = vrot.slane %v3459, 2
      %v3461 = vrot.slane %v2745, 7
      %v3462 = vrot.slane %v3461, 2
      %v3463 = vrot.slane %v2744, 7
      %v3464 = vrot.slane %v3463, 2
      %v3465 = vrot.slane %v2746, 7
      %v3466 = vrot.slane %v3465, 2
      %v3467 = vrot.slane %v2788, 7
      %v3468 = vrot.slane %v3467, 2
      %v3469 = vrot.slane %v2796, 7
      %v3470 = vrot.slane %v3469, 2
      %v3471 = vrot.slane %v2795, 7
      %v3472 = vrot.slane %v3471, 2
      %v3473 = vrot.slane %v2797, 7
      %v3474 = vrot.slane %v3473, 2
      %v3475 = vrot.slane %v2805, 7
      %v3476 = vrot.slane %v3475, 2
      %v3477 = vrot.slane %v2813, 7
      %v3478 = vrot.slane %v3477, 2
      %v3479 = vrot.slane %v2812, 7
      %v3480 = vrot.slane %v3479, 2
      %v3481 = vrot.slane %v2814, 7
      %v3482 = vrot.slane %v3481, 2
      %v3483 = vrot.slane %v2856, 7
      %v3484 = vrot.slane %v3483, 2
      %v3485 = vrot.slane %v2864, 7
      %v3486 = vrot.slane %v3485, 2
      %v3487 = vrot.slane %v2863, 7
      %v3488 = vrot.slane %v3487, 2
      %v3489 = vrot.slane %v2865, 7
      %v3490 = vrot.slane %v3489, 2
      %v3491 = vrot.slane %v2873, 7
      %v3492 = vrot.slane %v3491, 2
      %v3493 = vrot.slane %v2881, 7
      %v3494 = vrot.slane %v3493, 2
      %v3495 = vrot.slane %v2880, 7
      %v3496 = vrot.slane %v3495, 2
      %v3497 = vrot.slane %v2882, 7
      %v3498 = vrot.slane %v3497, 2
      %v3499 = vrot.slane %v2924, 7
      %v3500 = vrot.slane %v3499, 2
      %v3501 = vrot.slane %v2932, 7
      %v3502 = vrot.slane %v3501, 2
      %v3503 = vrot.slane %v2931, 7
      %v3504 = vrot.slane %v3503, 2
      %v3505 = vrot.slane %v2933, 7
      %v3506 = vrot.slane %v3505, 2
      %v3507 = vrot.slane %v2941, 7
      %v3508 = vrot.slane %v3507, 2
      %v3509 = vrot.slane %v2949, 7
      %v3510 = vrot.slane %v3509, 2
      %v3511 = vrot.slane %v2948, 7
      %v3512 = vrot.slane %v3511, 2
      %v3513 = vrot.slane %v2950, 7
      %v3514 = vrot.slane %v3513, 2
      %v3515 = vrot.slane %v2992, 7
      %v3516 = vrot.slane %v3515, 2
      %v3517 = vrot.slane %v3000, 7
      %v3518 = vrot.slane %v3517, 2
      %v3519 = vrot.slane %v2999, 7
      %v3520 = vrot.slane %v3519, 2
      %v3521 = vrot.slane %v3001, 7
      %v3522 = vrot.slane %v3521, 2
      %v3523 = vrot.slane %v3009, 7
      %v3524 = vrot.slane %v3523, 2
      %v3525 = vrot.slane %v3017, 7
      %v3526 = vrot.slane %v3525, 2
      %v3527 = vrot.slane %v3016, 7
      %v3528 = vrot.slane %v3527, 2
      %v3529 = vrot.slane %v3018, 7
      %v3530 = vrot.slane %v3529, 2
      %v3595 = vmax.f32 %v2516, %v3404
      %v3596 = vmax.f32 %v2524, %v3406
      %v3597 = vmax.f32 %v2523, %v3408
      %v3598 = vmax.f32 %v2525, %v3410
      %v3599 = vmax.f32 %v2533, %v3412
      %v3600 = vmax.f32 %v2541, %v3414
      %v3601 = vmax.f32 %v2540, %v3416
      %v3602 = vmax.f32 %v2542, %v3418
      %v3603 = vmax.f32 %v2584, %v3420
      %v3604 = vmax.f32 %v2592, %v3422
      %v3605 = vmax.f32 %v2591, %v3424
      %v3606 = vmax.f32 %v2593, %v3426
      %v3607 = vmax.f32 %v2601, %v3428
      %v3608 = vmax.f32 %v2609, %v3430
      %v3609 = vmax.f32 %v2608, %v3432
      %v3610 = vmax.f32 %v2610, %v3434
      %v3611 = vmax.f32 %v2652, %v3436
      %v3612 = vmax.f32 %v2660, %v3438
      %v3613 = vmax.f32 %v2659, %v3440
      %v3614 = vmax.f32 %v2661, %v3442
      %v3615 = vmax.f32 %v2669, %v3444
      %v3616 = vmax.f32 %v2677, %v3446
      %v3617 = vmax.f32 %v2676, %v3448
      %v3618 = vmax.f32 %v2678, %v3450
      %v3619 = vmax.f32 %v2720, %v3452
      %v3620 = vmax.f32 %v2728, %v3454
      %v3621 = vmax.f32 %v2727, %v3456
      %v3622 = vmax.f32 %v2729, %v3458
      %v3623 = vmax.f32 %v2737, %v3460
      %v3624 = vmax.f32 %v2745, %v3462
      %v3625 = vmax.f32 %v2744, %v3464
      %v3626 = vmax.f32 %v2746, %v3466
      %v3627 = vmax.f32 %v2788, %v3468
      %v3628 = vmax.f32 %v2796, %v3470
      %v3629 = vmax.f32 %v2795, %v3472
      %v3630 = vmax.f32 %v2797, %v3474
      %v3631 = vmax.f32 %v2805, %v3476
      %v3632 = vmax.f32 %v2813, %v3478
      %v3633 = vmax.f32 %v2812, %v3480
      %v3634 = vmax.f32 %v2814, %v3482
      %v3635 = vmax.f32 %v2856, %v3484
      %v3636 = vmax.f32 %v2864, %v3486
      %v3637 = vmax.f32 %v2863, %v3488
      %v3638 = vmax.f32 %v2865, %v3490
      %v3639 = vmax.f32 %v2873, %v3492
      %v3640 = vmax.f32 %v2881, %v3494
      %v3641 = vmax.f32 %v2880, %v3496
      %v3642 = vmax.f32 %v2882, %v3498
      %v3643 = vmax.f32 %v2924, %v3500
      %v3644 = vmax.f32 %v2932, %v3502
      %v3645 = vmax.f32 %v2931, %v3504
      %v3646 = vmax.f32 %v2933, %v3506
      %v3647 = vmax.f32 %v2941, %v3508
      %v3648 = vmax.f32 %v2949, %v3510
      %v3649 = vmax.f32 %v2948, %v3512
      %v3650 = vmax.f32 %v2950, %v3514
      %v3651 = vmax.f32 %v2992, %v3516
      %v3652 = vmax.f32 %v3000, %v3518
      %v3653 = vmax.f32 %v2999, %v3520
      %v3654 = vmax.f32 %v3001, %v3522
      %v3655 = vmax.f32 %v3009, %v3524
      %v3656 = vmax.f32 %v3017, %v3526
      %v3657 = vmax.f32 %v3016, %v3528
      %v3658 = vmax.f32 %v3018, %v3530
      %v3659 = vmax.f32 %v3339, %v3595
      %v3660 = vmax.f32 %v3340, %v3596
      %v3661 = vmax.f32 %v3341, %v3597
      %v3662 = vmax.f32 %v3342, %v3598
      %v3663 = vmax.f32 %v3343, %v3599
      %v3664 = vmax.f32 %v3344, %v3600
      %v3665 = vmax.f32 %v3345, %v3601
      %v3666 = vmax.f32 %v3346, %v3602
      %v3667 = vmax.f32 %v3347, %v3603
      %v3668 = vmax.f32 %v3348, %v3604
      %v3669 = vmax.f32 %v3349, %v3605
      %v3670 = vmax.f32 %v3350, %v3606
      %v3671 = vmax.f32 %v3351, %v3607
      %v3672 = vmax.f32 %v3352, %v3608
      %v3673 = vmax.f32 %v3353, %v3609
      %v3674 = vmax.f32 %v3354, %v3610
      %v3675 = vmax.f32 %v3355, %v3611
      %v3676 = vmax.f32 %v3356, %v3612
      %v3677 = vmax.f32 %v3357, %v3613
      %v3678 = vmax.f32 %v3358, %v3614
      %v3679 = vmax.f32 %v3359, %v3615
      %v3680 = vmax.f32 %v3360, %v3616
      %v3681 = vmax.f32 %v3361, %v3617
      %v3682 = vmax.f32 %v3362, %v3618
      %v3683 = vmax.f32 %v3363, %v3619
      %v3684 = vmax.f32 %v3364, %v3620
      %v3685 = vmax.f32 %v3365, %v3621
      %v3686 = vmax.f32 %v3366, %v3622
      %v3687 = vmax.f32 %v3367, %v3623
      %v3688 = vmax.f32 %v3368, %v3624
      %v3689 = vmax.f32 %v3369, %v3625
      %v3690 = vmax.f32 %v3370, %v3626
      %v3691 = vmax.f32 %v3371, %v3627
      %v3692 = vmax.f32 %v3372, %v3628
      %v3693 = vmax.f32 %v3373, %v3629
      %v3694 = vmax.f32 %v3374, %v3630
      %v3695 = vmax.f32 %v3375, %v3631
      %v3696 = vmax.f32 %v3376, %v3632
      %v3697 = vmax.f32 %v3377, %v3633
      %v3698 = vmax.f32 %v3378, %v3634
      %v3699 = vmax.f32 %v3379, %v3635
      %v3700 = vmax.f32 %v3380, %v3636
      %v3701 = vmax.f32 %v3381, %v3637
      %v3702 = vmax.f32 %v3382, %v3638
      %v3703 = vmax.f32 %v3383, %v3639
      %v3704 = vmax.f32 %v3384, %v3640
      %v3705 = vmax.f32 %v3385, %v3641
      %v3706 = vmax.f32 %v3386, %v3642
      %v3707 = vmax.f32 %v3387, %v3643
      %v3708 = vmax.f32 %v3388, %v3644
      %v3709 = vmax.f32 %v3389, %v3645
      %v3710 = vmax.f32 %v3390, %v3646
      %v3711 = vmax.f32 %v3391, %v3647
      %v3712 = vmax.f32 %v3392, %v3648
      %v3713 = vmax.f32 %v3393, %v3649
      %v3714 = vmax.f32 %v3394, %v3650
      %v3715 = vmax.f32 %v3395, %v3651
      %v3716 = vmax.f32 %v3396, %v3652
      %v3717 = vmax.f32 %v3397, %v3653
      %v3718 = vmax.f32 %v3398, %v3654
      %v3719 = vmax.f32 %v3399, %v3655
      %v3720 = vmax.f32 %v3400, %v3656
      %v3721 = vmax.f32 %v3401, %v3657
      %v3722 = vmax.f32 %v3402, %v3658
      %vm3723 = vcmask 261120
      %3724 = vst.msk [vmem:[#allocation4] sm:$0xff] %vm3723, 0.0
      %vm3725 = vcmask 254976
      %3726 = vst.msk [vmem:[#allocation4 + $0x8] sm:$0x3] %vm3725, 0.0
      %3727 = vst.msk [vmem:[#allocation4 + $0x10] sm:$0xff] %vm3723, 0.0
      %3728 = vst.msk [vmem:[#allocation4 + $0x18] sm:$0x3] %vm3725, 0.0
      %3729 = vst.msk [vmem:[#allocation4 + $0x20] sm:$0xff] %vm3723, 0.0
      %3730 = vst.msk [vmem:[#allocation4 + $0x28] sm:$0x3] %vm3725, 0.0
      %3731 = vst.msk [vmem:[#allocation4 + $0x30] sm:$0xff] %vm3723, 0.0
      %3732 = vst.msk [vmem:[#allocation4 + $0x38] sm:$0x3] %vm3725, 0.0
      %3733 = vst.msk [vmem:[#allocation4 + $0x40] sm:$0xff] %vm3723, 0.0
      %3734 = vst.msk [vmem:[#allocation4 + $0x48] sm:$0x3] %vm3725, 0.0
      %3735 = vst.msk [vmem:[#allocation4 + $0x50] sm:$0xff] %vm3723, 0.0
      %3736 = vst.msk [vmem:[#allocation4 + $0x58] sm:$0x3] %vm3725, 0.0
      %3737 = vst.msk [vmem:[#allocation4 + $0x60] sm:$0xff] %vm3723, 0.0
      %3738 = vst.msk [vmem:[#allocation4 + $0x68] sm:$0x3] %vm3725, 0.0
      %3739 = vst.msk [vmem:[#allocation4 + $0x70] sm:$0xff] %vm3723, 0.0
      %3740 = vst.msk [vmem:[#allocation4 + $0x78] sm:$0x3] %vm3725, 0.0
      %3741 = vst.msk [vmem:[#allocation4 + $0x80] sm:$0xff] %vm3723, 0.0
      %3742 = vst.msk [vmem:[#allocation4 + $0x88] sm:$0x3] %vm3725, 0.0
      %3743 = vst.msk [vmem:[#allocation4 + $0x90] sm:$0xff] %vm3723, 0.0
      %3744 = vst.msk [vmem:[#allocation4 + $0x98] sm:$0x3] %vm3725, 0.0
      %v3809 = vlaneseq
      %v3810 = vshrl.u32 %v3809, 7
      %v3811 = vsub.s32 0, %v3810
      %v3812 = vrot.slane %v3659, %v3811
      %v3813 = vlaneseq
      %v3814 = vshrl.u32 %v3813, 7
      %v3815 = vsub.s32 0, %v3814
      %v3816 = vrot.slane %v3660, %v3815
      %v3817 = vlaneseq
      %v3818 = vshrl.u32 %v3817, 7
      %v3819 = vsub.s32 0, %v3818
      %v3820 = vrot.slane %v3661, %v3819
      %v3821 = vlaneseq
      %v3822 = vshrl.u32 %v3821, 7
      %v3823 = vsub.s32 0, %v3822
      %v3824 = vrot.slane %v3662, %v3823
      %v3825 = vlaneseq
      %v3826 = vshrl.u32 %v3825, 7
      %v3827 = vsub.s32 0, %v3826
      %v3828 = vrot.slane %v3663, %v3827
      %v3829 = vlaneseq
      %v3830 = vshrl.u32 %v3829, 7
      %v3831 = vsub.s32 0, %v3830
      %v3832 = vrot.slane %v3664, %v3831
      %v3833 = vlaneseq
      %v3834 = vshrl.u32 %v3833, 7
      %v3835 = vsub.s32 0, %v3834
      %v3836 = vrot.slane %v3665, %v3835
      %v3837 = vlaneseq
      %v3838 = vshrl.u32 %v3837, 7
      %v3839 = vsub.s32 0, %v3838
      %v3840 = vrot.slane %v3666, %v3839
      %v3841 = vlaneseq
      %v3842 = vshrl.u32 %v3841, 7
      %v3843 = vsub.s32 0, %v3842
      %v3844 = vrot.slane %v3667, %v3843
      %v3845 = vlaneseq
      %v3846 = vshrl.u32 %v3845, 7
      %v3847 = vsub.s32 0, %v3846
      %v3848 = vrot.slane %v3668, %v3847
      %v3849 = vlaneseq
      %v3850 = vshrl.u32 %v3849, 7
      %v3851 = vsub.s32 0, %v3850
      %v3852 = vrot.slane %v3669, %v3851
      %v3853 = vlaneseq
      %v3854 = vshrl.u32 %v3853, 7
      %v3855 = vsub.s32 0, %v3854
      %v3856 = vrot.slane %v3670, %v3855
      %v3857 = vlaneseq
      %v3858 = vshrl.u32 %v3857, 7
      %v3859 = vsub.s32 0, %v3858
      %v3860 = vrot.slane %v3671, %v3859
      %v3861 = vlaneseq
      %v3862 = vshrl.u32 %v3861, 7
      %v3863 = vsub.s32 0, %v3862
      %v3864 = vrot.slane %v3672, %v3863
      %v3865 = vlaneseq
      %v3866 = vshrl.u32 %v3865, 7
      %v3867 = vsub.s32 0, %v3866
      %v3868 = vrot.slane %v3673, %v3867
      %v3869 = vlaneseq
      %v3870 = vshrl.u32 %v3869, 7
      %v3871 = vsub.s32 0, %v3870
      %v3872 = vrot.slane %v3674, %v3871
      %v3873 = vlaneseq
      %v3874 = vshrl.u32 %v3873, 7
      %v3875 = vsub.s32 0, %v3874
      %v3876 = vrot.slane %v3675, %v3875
      %v3877 = vlaneseq
      %v3878 = vshrl.u32 %v3877, 7
      %v3879 = vsub.s32 0, %v3878
      %v3880 = vrot.slane %v3676, %v3879
      %v3881 = vlaneseq
      %v3882 = vshrl.u32 %v3881, 7
      %v3883 = vsub.s32 0, %v3882
      %v3884 = vrot.slane %v3677, %v3883
      %v3885 = vlaneseq
      %v3886 = vshrl.u32 %v3885, 7
      %v3887 = vsub.s32 0, %v3886
      %v3888 = vrot.slane %v3678, %v3887
      %v3889 = vlaneseq
      %v3890 = vshrl.u32 %v3889, 7
      %v3891 = vsub.s32 0, %v3890
      %v3892 = vrot.slane %v3679, %v3891
      %v3893 = vlaneseq
      %v3894 = vshrl.u32 %v3893, 7
      %v3895 = vsub.s32 0, %v3894
      %v3896 = vrot.slane %v3680, %v3895
      %v3897 = vlaneseq
      %v3898 = vshrl.u32 %v3897, 7
      %v3899 = vsub.s32 0, %v3898
      %v3900 = vrot.slane %v3681, %v3899
      %v3901 = vlaneseq
      %v3902 = vshrl.u32 %v3901, 7
      %v3903 = vsub.s32 0, %v3902
      %v3904 = vrot.slane %v3682, %v3903
      %v3905 = vlaneseq
      %v3906 = vshrl.u32 %v3905, 7
      %v3907 = vsub.s32 0, %v3906
      %v3908 = vrot.slane %v3683, %v3907
      %v3909 = vlaneseq
      %v3910 = vshrl.u32 %v3909, 7
      %v3911 = vsub.s32 0, %v3910
      %v3912 = vrot.slane %v3684, %v3911
      %v3913 = vlaneseq
      %v3914 = vshrl.u32 %v3913, 7
      %v3915 = vsub.s32 0, %v3914
      %v3916 = vrot.slane %v3685, %v3915
      %v3917 = vlaneseq
      %v3918 = vshrl.u32 %v3917, 7
      %v3919 = vsub.s32 0, %v3918
      %v3920 = vrot.slane %v3686, %v3919
      %v3921 = vlaneseq
      %v3922 = vshrl.u32 %v3921, 7
      %v3923 = vsub.s32 0, %v3922
      %v3924 = vrot.slane %v3687, %v3923
      %v3925 = vlaneseq
      %v3926 = vshrl.u32 %v3925, 7
      %v3927 = vsub.s32 0, %v3926
      %v3928 = vrot.slane %v3688, %v3927
      %v3929 = vlaneseq
      %v3930 = vshrl.u32 %v3929, 7
      %v3931 = vsub.s32 0, %v3930
      %v3932 = vrot.slane %v3689, %v3931
      %v3933 = vlaneseq
      %v3934 = vshrl.u32 %v3933, 7
      %v3935 = vsub.s32 0, %v3934
      %v3936 = vrot.slane %v3690, %v3935
      %v3937 = vlaneseq
      %v3938 = vshrl.u32 %v3937, 7
      %v3939 = vsub.s32 0, %v3938
      %v3940 = vrot.slane %v3691, %v3939
      %v3941 = vlaneseq
      %v3942 = vshrl.u32 %v3941, 7
      %v3943 = vsub.s32 0, %v3942
      %v3944 = vrot.slane %v3692, %v3943
      %v3945 = vlaneseq
      %v3946 = vshrl.u32 %v3945, 7
      %v3947 = vsub.s32 0, %v3946
      %v3948 = vrot.slane %v3693, %v3947
      %v3949 = vlaneseq
      %v3950 = vshrl.u32 %v3949, 7
      %v3951 = vsub.s32 0, %v3950
      %v3952 = vrot.slane %v3694, %v3951
      %v3953 = vlaneseq
      %v3954 = vshrl.u32 %v3953, 7
      %v3955 = vsub.s32 0, %v3954
      %v3956 = vrot.slane %v3695, %v3955
      %v3957 = vlaneseq
      %v3958 = vshrl.u32 %v3957, 7
      %v3959 = vsub.s32 0, %v3958
      %v3960 = vrot.slane %v3696, %v3959
      %v3961 = vlaneseq
      %v3962 = vshrl.u32 %v3961, 7
      %v3963 = vsub.s32 0, %v3962
      %v3964 = vrot.slane %v3697, %v3963
      %v3965 = vlaneseq
      %v3966 = vshrl.u32 %v3965, 7
      %v3967 = vsub.s32 0, %v3966
      %v3968 = vrot.slane %v3698, %v3967
      %v3969 = vlaneseq
      %v3970 = vshrl.u32 %v3969, 7
      %v3971 = vsub.s32 0, %v3970
      %v3972 = vrot.slane %v3699, %v3971
      %v3973 = vlaneseq
      %v3974 = vshrl.u32 %v3973, 7
      %v3975 = vsub.s32 0, %v3974
      %v3976 = vrot.slane %v3700, %v3975
      %v3977 = vlaneseq
      %v3978 = vshrl.u32 %v3977, 7
      %v3979 = vsub.s32 0, %v3978
      %v3980 = vrot.slane %v3701, %v3979
      %v3981 = vlaneseq
      %v3982 = vshrl.u32 %v3981, 7
      %v3983 = vsub.s32 0, %v3982
      %v3984 = vrot.slane %v3702, %v3983
      %v3985 = vlaneseq
      %v3986 = vshrl.u32 %v3985, 7
      %v3987 = vsub.s32 0, %v3986
      %v3988 = vrot.slane %v3703, %v3987
      %v3989 = vlaneseq
      %v3990 = vshrl.u32 %v3989, 7
      %v3991 = vsub.s32 0, %v3990
      %v3992 = vrot.slane %v3704, %v3991
      %v3993 = vlaneseq
      %v3994 = vshrl.u32 %v3993, 7
      %v3995 = vsub.s32 0, %v3994
      %v3996 = vrot.slane %v3705, %v3995
      %v3997 = vlaneseq
      %v3998 = vshrl.u32 %v3997, 7
      %v3999 = vsub.s32 0, %v3998
      %v4000 = vrot.slane %v3706, %v3999
      %v4001 = vlaneseq
      %v4002 = vshrl.u32 %v4001, 7
      %v4003 = vsub.s32 0, %v4002
      %v4004 = vrot.slane %v3707, %v4003
      %v4005 = vlaneseq
      %v4006 = vshrl.u32 %v4005, 7
      %v4007 = vsub.s32 0, %v4006
      %v4008 = vrot.slane %v3708, %v4007
      %v4009 = vlaneseq
      %v4010 = vshrl.u32 %v4009, 7
      %v4011 = vsub.s32 0, %v4010
      %v4012 = vrot.slane %v3709, %v4011
      %v4013 = vlaneseq
      %v4014 = vshrl.u32 %v4013, 7
      %v4015 = vsub.s32 0, %v4014
      %v4016 = vrot.slane %v3710, %v4015
      %v4017 = vlaneseq
      %v4018 = vshrl.u32 %v4017, 7
      %v4019 = vsub.s32 0, %v4018
      %v4020 = vrot.slane %v3711, %v4019
      %v4021 = vlaneseq
      %v4022 = vshrl.u32 %v4021, 7
      %v4023 = vsub.s32 0, %v4022
      %v4024 = vrot.slane %v3712, %v4023
      %v4025 = vlaneseq
      %v4026 = vshrl.u32 %v4025, 7
      %v4027 = vsub.s32 0, %v4026
      %v4028 = vrot.slane %v3713, %v4027
      %v4029 = vlaneseq
      %v4030 = vshrl.u32 %v4029, 7
      %v4031 = vsub.s32 0, %v4030
      %v4032 = vrot.slane %v3714, %v4031
      %v4033 = vlaneseq
      %v4034 = vshrl.u32 %v4033, 7
      %v4035 = vsub.s32 0, %v4034
      %v4036 = vrot.slane %v3715, %v4035
      %v4037 = vlaneseq
      %v4038 = vshrl.u32 %v4037, 7
      %v4039 = vsub.s32 0, %v4038
      %v4040 = vrot.slane %v3716, %v4039
      %v4041 = vlaneseq
      %v4042 = vshrl.u32 %v4041, 7
      %v4043 = vsub.s32 0, %v4042
      %v4044 = vrot.slane %v3717, %v4043
      %v4045 = vlaneseq
      %v4046 = vshrl.u32 %v4045, 7
      %v4047 = vsub.s32 0, %v4046
      %v4048 = vrot.slane %v3718, %v4047
      %v4049 = vlaneseq
      %v4050 = vshrl.u32 %v4049, 7
      %v4051 = vsub.s32 0, %v4050
      %v4052 = vrot.slane %v3719, %v4051
      %v4053 = vlaneseq
      %v4054 = vshrl.u32 %v4053, 7
      %v4055 = vsub.s32 0, %v4054
      %v4056 = vrot.slane %v3720, %v4055
      %v4057 = vlaneseq
      %v4058 = vshrl.u32 %v4057, 7
      %v4059 = vsub.s32 0, %v4058
      %v4060 = vrot.slane %v3721, %v4059
      %v4061 = vlaneseq
      %v4062 = vshrl.u32 %v4061, 7
      %v4063 = vsub.s32 0, %v4062
      %v4064 = vrot.slane %v3722, %v4063
      %vm4065 = vcmask 1041409
      %v4066 = vsel %vm4065, %v3816, %v3812
      %vm4067 = vcmask 1042434
      %v4068 = vsel %vm4067, %v3820, %v4066
      %vm4069 = vcmask 1043459
      %v4070 = vsel %vm4069, %v3824, %v4068
      %vm4071 = vcmask 1044484
      %v4072 = vsel %vm4071, %v3828, %v4070
      %vm4073 = vcmask 1045509
      %v4074 = vsel %vm4073, %v3832, %v4072
      %vm4075 = vcmask 1046534
      %v4076 = vsel %vm4075, %v3836, %v4074
      %vm4077 = vcmask 1047559
      %v4078 = vsel %vm4077, %v3840, %v4076
      %v4079 = vsel %vm4065, %v3848, %v3844
      %v4080 = vsel %vm4067, %v3852, %v4079
      %v4081 = vsel %vm4069, %v3856, %v4080
      %v4082 = vsel %vm4071, %v3860, %v4081
      %v4083 = vsel %vm4073, %v3864, %v4082
      %v4084 = vsel %vm4075, %v3868, %v4083
      %v4085 = vsel %vm4077, %v3872, %v4084
      %v4086 = vsel %vm4065, %v3880, %v3876
      %v4087 = vsel %vm4067, %v3884, %v4086
      %v4088 = vsel %vm4069, %v3888, %v4087
      %v4089 = vsel %vm4071, %v3892, %v4088
      %v4090 = vsel %vm4073, %v3896, %v4089
      %v4091 = vsel %vm4075, %v3900, %v4090
      %v4092 = vsel %vm4077, %v3904, %v4091
      %v4093 = vsel %vm4065, %v3912, %v3908
      %v4094 = vsel %vm4067, %v3916, %v4093
      %v4095 = vsel %vm4069, %v3920, %v4094
      %v4096 = vsel %vm4071, %v3924, %v4095
      %v4097 = vsel %vm4073, %v3928, %v4096
      %v4098 = vsel %vm4075, %v3932, %v4097
      %v4099 = vsel %vm4077, %v3936, %v4098
      %v4100 = vsel %vm4065, %v3944, %v3940
      %v4101 = vsel %vm4067, %v3948, %v4100
      %v4102 = vsel %vm4069, %v3952, %v4101
      %v4103 = vsel %vm4071, %v3956, %v4102
      %v4104 = vsel %vm4073, %v3960, %v4103
      %v4105 = vsel %vm4075, %v3964, %v4104
      %v4106 = vsel %vm4077, %v3968, %v4105
      %v4107 = vsel %vm4065, %v3976, %v3972
      %v4108 = vsel %vm4067, %v3980, %v4107
      %v4109 = vsel %vm4069, %v3984, %v4108
      %v4110 = vsel %vm4071, %v3988, %v4109
      %v4111 = vsel %vm4073, %v3992, %v4110
      %v4112 = vsel %vm4075, %v3996, %v4111
      %v4113 = vsel %vm4077, %v4000, %v4112
      %v4114 = vsel %vm4065, %v4008, %v4004
      %v4115 = vsel %vm4067, %v4012, %v4114
      %v4116 = vsel %vm4069, %v4016, %v4115
      %v4117 = vsel %vm4071, %v4020, %v4116
      %v4118 = vsel %vm4073, %v4024, %v4117
      %v4119 = vsel %vm4075, %v4028, %v4118
      %v4120 = vsel %vm4077, %v4032, %v4119
      %v4121 = vsel %vm4065, %v4040, %v4036
      %v4122 = vsel %vm4067, %v4044, %v4121
      %v4123 = vsel %vm4069, %v4048, %v4122
      %v4124 = vsel %vm4071, %v4052, %v4123
      %v4125 = vsel %vm4073, %v4056, %v4124
      %v4126 = vsel %vm4075, %v4060, %v4125
      %v4127 = vsel %vm4077, %v4064, %v4126
      %s4136 = scalar_lea.vmem [#allocation4], 16
      %4137 = vst.msk [vmem:[%s4136 + $0x1] sm:$0xff] %vm3723, %v4078
      %4138 = vst.msk [vmem:[%s4136 + $0x11] sm:$0xff] %vm3723, %v4085
      %4139 = vst.msk [vmem:[%s4136 + $0x21] sm:$0xff] %vm3723, %v4092
      %4140 = vst.msk [vmem:[%s4136 + $0x31] sm:$0xff] %vm3723, %v4099
      %4141 = vst.msk [vmem:[%s4136 + $0x41] sm:$0xff] %vm3723, %v4106
      %4142 = vst.msk [vmem:[%s4136 + $0x51] sm:$0xff] %vm3723, %v4113
      %4143 = vst.msk [vmem:[%s4136 + $0x61] sm:$0xff] %vm3723, %v4120
      %4144 = vst.msk [vmem:[%s4136 + $0x71] sm:$0xff] %vm3723, %v4127
      %v4145 = vld [vmem:[#allocation4] sm:$0xff]
      %v4146 = vld [vmem:[#allocation4 + $0x10] sm:$0xff]
      %v4147 = vld [vmem:[#allocation4 + $0x20] sm:$0xff]
      %v4148 = vld [vmem:[#allocation4 + $0x30] sm:$0xff]
      %v4149 = vld [vmem:[#allocation4 + $0x40] sm:$0xff]
      %v4150 = vld [vmem:[#allocation4 + $0x50] sm:$0xff]
      %v4151 = vld [vmem:[#allocation4 + $0x60] sm:$0xff]
      %v4152 = vld [vmem:[#allocation4 + $0x70] sm:$0xff]
      %4153 = vst.msk [vmem:[#allocation5] sm:$0xff] %vm3723, %v4145
      %4154 = vst.msk [vmem:[#allocation5 + $0x18] sm:$0xff] %vm3723, %v4146
      %4155 = vst.msk [vmem:[#allocation5 + $0x30] sm:$0xff] %vm3723, %v4147
      %4156 = vst.msk [vmem:[#allocation5 + $0x48] sm:$0xff] %vm3723, %v4148
      %4157 = vst.msk [vmem:[#allocation5 + $0x60] sm:$0xff] %vm3723, %v4149
      %4158 = vst.msk [vmem:[#allocation5 + $0x78] sm:$0xff] %vm3723, %v4150
      %4159 = vst.msk [vmem:[#allocation5 + $0x90] sm:$0xff] %vm3723, %v4151
      %4160 = vst.msk [vmem:[#allocation5 + $0xa8] sm:$0xff] %vm3723, %v4152
      %v4161 = vld [vmem:[#allocation4 + $0x1] sm:$0xff]
      %v4162 = vld [vmem:[#allocation4 + $0x11] sm:$0xff]
      %v4163 = vld [vmem:[#allocation4 + $0x21] sm:$0xff]
      %v4164 = vld [vmem:[#allocation4 + $0x31] sm:$0xff]
      %v4165 = vld [vmem:[#allocation4 + $0x41] sm:$0xff]
      %v4166 = vld [vmem:[#allocation4 + $0x51] sm:$0xff]
      %v4167 = vld [vmem:[#allocation4 + $0x61] sm:$0xff]
      %v4168 = vld [vmem:[#allocation4 + $0x71] sm:$0xff]
      %4177 = vrot.lane.b32.xlu0 %v4161, 32
      %v4178 = vpop.permute.xlu0 %4177
      %4179 = vrot.lane.b32.xlu0 %v4162, 32
      %v4180 = vpop.permute.xlu0 %4179
      %4181 = vrot.lane.b32.xlu0 %v4163, 32
      %v4182 = vpop.permute.xlu0 %4181
      %4183 = vrot.lane.b32.xlu0 %v4164, 32
      %v4184 = vpop.permute.xlu0 %4183
      %4185 = vrot.lane.b32.xlu0 %v4165, 32
      %v4186 = vpop.permute.xlu0 %4185
      %4187 = vrot.lane.b32.xlu0 %v4166, 32
      %v4188 = vpop.permute.xlu0 %4187
      %4189 = vrot.lane.b32.xlu0 %v4167, 32
      %v4190 = vpop.permute.xlu0 %4189
      %4191 = vrot.lane.b32.xlu0 %v4168, 32
      %v4192 = vpop.permute.xlu0 %4191
      %vm4201 = vcmask 523520
      %4202 = vst.msk [vmem:[#allocation5] sm:$0xff] %vm4201, %v4178
      %4203 = vst.msk [vmem:[#allocation5 + $0x18] sm:$0xff] %vm4201, %v4180
      %4204 = vst.msk [vmem:[#allocation5 + $0x30] sm:$0xff] %vm4201, %v4182
      %4205 = vst.msk [vmem:[#allocation5 + $0x48] sm:$0xff] %vm4201, %v4184
      %4206 = vst.msk [vmem:[#allocation5 + $0x60] sm:$0xff] %vm4201, %v4186
      %4207 = vst.msk [vmem:[#allocation5 + $0x78] sm:$0xff] %vm4201, %v4188
      %4208 = vst.msk [vmem:[#allocation5 + $0x90] sm:$0xff] %vm4201, %v4190
      %4209 = vst.msk [vmem:[#allocation5 + $0xa8] sm:$0xff] %vm4201, %v4192
      %v4210 = vld [vmem:[#allocation4 + $0x2] sm:$0xff]
      %v4211 = vld [vmem:[#allocation4 + $0x12] sm:$0xff]
      %v4212 = vld [vmem:[#allocation4 + $0x22] sm:$0xff]
      %v4213 = vld [vmem:[#allocation4 + $0x32] sm:$0xff]
      %v4214 = vld [vmem:[#allocation4 + $0x42] sm:$0xff]
      %v4215 = vld [vmem:[#allocation4 + $0x52] sm:$0xff]
      %v4216 = vld [vmem:[#allocation4 + $0x62] sm:$0xff]
      %v4217 = vld [vmem:[#allocation4 + $0x72] sm:$0xff]
      %4226 = vrot.lane.b32.xlu0 %v4210, 64
      %v4227 = vpop.permute.xlu0 %4226
      %4228 = vrot.lane.b32.xlu0 %v4211, 64
      %v4229 = vpop.permute.xlu0 %4228
      %4230 = vrot.lane.b32.xlu0 %v4212, 64
      %v4231 = vpop.permute.xlu0 %4230
      %4232 = vrot.lane.b32.xlu0 %v4213, 64
      %v4233 = vpop.permute.xlu0 %4232
      %4234 = vrot.lane.b32.xlu0 %v4214, 64
      %v4235 = vpop.permute.xlu0 %4234
      %4236 = vrot.lane.b32.xlu0 %v4215, 64
      %v4237 = vpop.permute.xlu0 %4236
      %4238 = vrot.lane.b32.xlu0 %v4216, 64
      %v4239 = vpop.permute.xlu0 %4238
      %4240 = vrot.lane.b32.xlu0 %v4217, 64
      %v4241 = vpop.permute.xlu0 %4240
      %vm4250 = vcmask 785920
      %4251 = vst.msk [vmem:[#allocation5] sm:$0xff] %vm4250, %v4227
      %4252 = vst.msk [vmem:[#allocation5 + $0x18] sm:$0xff] %vm4250, %v4229
      %4253 = vst.msk [vmem:[#allocation5 + $0x30] sm:$0xff] %vm4250, %v4231
      %4254 = vst.msk [vmem:[#allocation5 + $0x48] sm:$0xff] %vm4250, %v4233
      %4255 = vst.msk [vmem:[#allocation5 + $0x60] sm:$0xff] %vm4250, %v4235
      %4256 = vst.msk [vmem:[#allocation5 + $0x78] sm:$0xff] %vm4250, %v4237
      %4257 = vst.msk [vmem:[#allocation5 + $0x90] sm:$0xff] %vm4250, %v4239
      %4258 = vst.msk [vmem:[#allocation5 + $0xa8] sm:$0xff] %vm4250, %v4241
      %v4259 = vld [vmem:[%s4136] sm:$0xff]
      %v4260 = vld [vmem:[%s4136 + $0x10] sm:$0xff]
      %v4261 = vld [vmem:[%s4136 + $0x20] sm:$0xff]
      %v4262 = vld [vmem:[%s4136 + $0x30] sm:$0xff]
      %v4263 = vld [vmem:[%s4136 + $0x40] sm:$0xff]
      %v4264 = vld [vmem:[%s4136 + $0x50] sm:$0xff]
      %v4265 = vld [vmem:[%s4136 + $0x60] sm:$0xff]
      %v4266 = vld [vmem:[%s4136 + $0x70] sm:$0xff]
      %4275 = vrot.lane.b32.xlu0 %v4259, 96
      %v4276 = vpop.permute.xlu0 %4275
      %4277 = vrot.lane.b32.xlu0 %v4260, 96
      %v4278 = vpop.permute.xlu0 %4277
      %4279 = vrot.lane.b32.xlu0 %v4261, 96
      %v4280 = vpop.permute.xlu0 %4279
      %4281 = vrot.lane.b32.xlu0 %v4262, 96
      %v4282 = vpop.permute.xlu0 %4281
      %4283 = vrot.lane.b32.xlu0 %v4263, 96
      %v4284 = vpop.permute.xlu0 %4283
      %4285 = vrot.lane.b32.xlu0 %v4264, 96
      %v4286 = vpop.permute.xlu0 %4285
      %4287 = vrot.lane.b32.xlu0 %v4265, 96
      %v4288 = vpop.permute.xlu0 %4287
      %4289 = vrot.lane.b32.xlu0 %v4266, 96
      %v4290 = vpop.permute.xlu0 %4289
      %vm4299 = vcmask 1048320
      %4300 = vst.msk [vmem:[#allocation5] sm:$0xff] %vm4299, %v4276
      %4301 = vst.msk [vmem:[#allocation5 + $0x18] sm:$0xff] %vm4299, %v4278
      %4302 = vst.msk [vmem:[#allocation5 + $0x30] sm:$0xff] %vm4299, %v4280
      %4303 = vst.msk [vmem:[#allocation5 + $0x48] sm:$0xff] %vm4299, %v4282
      %4304 = vst.msk [vmem:[#allocation5 + $0x60] sm:$0xff] %vm4299, %v4284
      %4305 = vst.msk [vmem:[#allocation5 + $0x78] sm:$0xff] %vm4299, %v4286
      %4306 = vst.msk [vmem:[#allocation5 + $0x90] sm:$0xff] %vm4299, %v4288
      %4307 = vst.msk [vmem:[#allocation5 + $0xa8] sm:$0xff] %vm4299, %v4290
      %v4308 = vld [vmem:[%s4136 + $0x1] sm:$0xff]
      %v4309 = vld [vmem:[%s4136 + $0x11] sm:$0xff]
      %v4310 = vld [vmem:[%s4136 + $0x21] sm:$0xff]
      %v4311 = vld [vmem:[%s4136 + $0x31] sm:$0xff]
      %v4312 = vld [vmem:[%s4136 + $0x41] sm:$0xff]
      %v4313 = vld [vmem:[%s4136 + $0x51] sm:$0xff]
      %v4314 = vld [vmem:[%s4136 + $0x61] sm:$0xff]
      %v4315 = vld [vmem:[%s4136 + $0x71] sm:$0xff]
      %4316 = vst.msk [vmem:[#allocation5 + $0x8] sm:$0xff] %vm3723, %v4308
      %4317 = vst.msk [vmem:[#allocation5 + $0x20] sm:$0xff] %vm3723, %v4309
      %4318 = vst.msk [vmem:[#allocation5 + $0x38] sm:$0xff] %vm3723, %v4310
      %4319 = vst.msk [vmem:[#allocation5 + $0x50] sm:$0xff] %vm3723, %v4311
      %4320 = vst.msk [vmem:[#allocation5 + $0x68] sm:$0xff] %vm3723, %v4312
      %4321 = vst.msk [vmem:[#allocation5 + $0x80] sm:$0xff] %vm3723, %v4313
      %4322 = vst.msk [vmem:[#allocation5 + $0x98] sm:$0xff] %vm3723, %v4314
      %4323 = vst.msk [vmem:[#allocation5 + $0xb0] sm:$0xff] %vm3723, %v4315
      %v4324 = vld [vmem:[%s4136 + $0x2] sm:$0xff]
      %v4325 = vld [vmem:[%s4136 + $0x12] sm:$0xff]
      %v4326 = vld [vmem:[%s4136 + $0x22] sm:$0xff]
      %v4327 = vld [vmem:[%s4136 + $0x32] sm:$0xff]
      %v4328 = vld [vmem:[%s4136 + $0x42] sm:$0xff]
      %v4329 = vld [vmem:[%s4136 + $0x52] sm:$0xff]
      %v4330 = vld [vmem:[%s4136 + $0x62] sm:$0xff]
      %v4331 = vld [vmem:[%s4136 + $0x72] sm:$0xff]
      %4340 = vrot.lane.b32.xlu0 %v4324, 32
      %v4341 = vpop.permute.xlu0 %4340
      %4342 = vrot.lane.b32.xlu0 %v4325, 32
      %v4343 = vpop.permute.xlu0 %4342
      %4344 = vrot.lane.b32.xlu0 %v4326, 32
      %v4345 = vpop.permute.xlu0 %4344
      %4346 = vrot.lane.b32.xlu0 %v4327, 32
      %v4347 = vpop.permute.xlu0 %4346
      %4348 = vrot.lane.b32.xlu0 %v4328, 32
      %v4349 = vpop.permute.xlu0 %4348
      %4350 = vrot.lane.b32.xlu0 %v4329, 32
      %v4351 = vpop.permute.xlu0 %4350
      %4352 = vrot.lane.b32.xlu0 %v4330, 32
      %v4353 = vpop.permute.xlu0 %4352
      %4354 = vrot.lane.b32.xlu0 %v4331, 32
      %v4355 = vpop.permute.xlu0 %4354
      %4364 = vst.msk [vmem:[#allocation5 + $0x8] sm:$0xff] %vm4201, %v4341
      %4365 = vst.msk [vmem:[#allocation5 + $0x20] sm:$0xff] %vm4201, %v4343
      %4366 = vst.msk [vmem:[#allocation5 + $0x38] sm:$0xff] %vm4201, %v4345
      %4367 = vst.msk [vmem:[#allocation5 + $0x50] sm:$0xff] %vm4201, %v4347
      %4368 = vst.msk [vmem:[#allocation5 + $0x68] sm:$0xff] %vm4201, %v4349
      %4369 = vst.msk [vmem:[#allocation5 + $0x80] sm:$0xff] %vm4201, %v4351
      %4370 = vst.msk [vmem:[#allocation5 + $0x98] sm:$0xff] %vm4201, %v4353
      %4371 = vst.msk [vmem:[#allocation5 + $0xb0] sm:$0xff] %vm4201, %v4355
      %s4372 = scalar_lea.vmem [#allocation4], 32
      %v4373 = vld [vmem:[%s4372] sm:$0xff]
      %v4374 = vld [vmem:[%s4372 + $0x10] sm:$0xff]
      %v4375 = vld [vmem:[%s4372 + $0x20] sm:$0xff]
      %v4376 = vld [vmem:[%s4372 + $0x30] sm:$0xff]
      %v4377 = vld [vmem:[%s4372 + $0x40] sm:$0xff]
      %v4378 = vld [vmem:[%s4372 + $0x50] sm:$0xff]
      %v4379 = vld [vmem:[%s4372 + $0x60] sm:$0xff]
      %v4380 = vld [vmem:[%s4372 + $0x70] sm:$0xff]
      %4389 = vrot.lane.b32.xlu0 %v4373, 64
      %v4390 = vpop.permute.xlu0 %4389
      %4391 = vrot.lane.b32.xlu0 %v4374, 64
      %v4392 = vpop.permute.xlu0 %4391
      %4393 = vrot.lane.b32.xlu0 %v4375, 64
      %v4394 = vpop.permute.xlu0 %4393
      %4395 = vrot.lane.b32.xlu0 %v4376, 64
      %v4396 = vpop.permute.xlu0 %4395
      %4397 = vrot.lane.b32.xlu0 %v4377, 64
      %v4398 = vpop.permute.xlu0 %4397
      %4399 = vrot.lane.b32.xlu0 %v4378, 64
      %v4400 = vpop.permute.xlu0 %4399
      %4401 = vrot.lane.b32.xlu0 %v4379, 64
      %v4402 = vpop.permute.xlu0 %4401
      %4403 = vrot.lane.b32.xlu0 %v4380, 64
      %v4404 = vpop.permute.xlu0 %4403
      %4413 = vst.msk [vmem:[#allocation5 + $0x8] sm:$0xff] %vm4250, %v4390
      %4414 = vst.msk [vmem:[#allocation5 + $0x20] sm:$0xff] %vm4250, %v4392
      %4415 = vst.msk [vmem:[#allocation5 + $0x38] sm:$0xff] %vm4250, %v4394
      %4416 = vst.msk [vmem:[#allocation5 + $0x50] sm:$0xff] %vm4250, %v4396
      %4417 = vst.msk [vmem:[#allocation5 + $0x68] sm:$0xff] %vm4250, %v4398
      %4418 = vst.msk [vmem:[#allocation5 + $0x80] sm:$0xff] %vm4250, %v4400
      %4419 = vst.msk [vmem:[#allocation5 + $0x98] sm:$0xff] %vm4250, %v4402
      %4420 = vst.msk [vmem:[#allocation5 + $0xb0] sm:$0xff] %vm4250, %v4404
      %v4421 = vld [vmem:[%s4372 + $0x1] sm:$0xff]
      %v4422 = vld [vmem:[%s4372 + $0x11] sm:$0xff]
      %v4423 = vld [vmem:[%s4372 + $0x21] sm:$0xff]
      %v4424 = vld [vmem:[%s4372 + $0x31] sm:$0xff]
      %v4425 = vld [vmem:[%s4372 + $0x41] sm:$0xff]
      %v4426 = vld [vmem:[%s4372 + $0x51] sm:$0xff]
      %v4427 = vld [vmem:[%s4372 + $0x61] sm:$0xff]
      %v4428 = vld [vmem:[%s4372 + $0x71] sm:$0xff]
      %4437 = vrot.lane.b32.xlu0 %v4421, 96
      %v4438 = vpop.permute.xlu0 %4437
      %4439 = vrot.lane.b32.xlu0 %v4422, 96
      %v4440 = vpop.permute.xlu0 %4439
      %4441 = vrot.lane.b32.xlu0 %v4423, 96
      %v4442 = vpop.permute.xlu0 %4441
      %4443 = vrot.lane.b32.xlu0 %v4424, 96
      %v4444 = vpop.permute.xlu0 %4443
      %4445 = vrot.lane.b32.xlu0 %v4425, 96
      %v4446 = vpop.permute.xlu0 %4445
      %4447 = vrot.lane.b32.xlu0 %v4426, 96
      %v4448 = vpop.permute.xlu0 %4447
      %4449 = vrot.lane.b32.xlu0 %v4427, 96
      %v4450 = vpop.permute.xlu0 %4449
      %4451 = vrot.lane.b32.xlu0 %v4428, 96
      %v4452 = vpop.permute.xlu0 %4451
      %4461 = vst.msk [vmem:[#allocation5 + $0x8] sm:$0xff] %vm4299, %v4438
      %4462 = vst.msk [vmem:[#allocation5 + $0x20] sm:$0xff] %vm4299, %v4440
      %4463 = vst.msk [vmem:[#allocation5 + $0x38] sm:$0xff] %vm4299, %v4442
      %4464 = vst.msk [vmem:[#allocation5 + $0x50] sm:$0xff] %vm4299, %v4444
      %4465 = vst.msk [vmem:[#allocation5 + $0x68] sm:$0xff] %vm4299, %v4446
      %4466 = vst.msk [vmem:[#allocation5 + $0x80] sm:$0xff] %vm4299, %v4448
      %4467 = vst.msk [vmem:[#allocation5 + $0x98] sm:$0xff] %vm4299, %v4450
      %4468 = vst.msk [vmem:[#allocation5 + $0xb0] sm:$0xff] %vm4299, %v4452
      %v4469 = vld [vmem:[%s4372 + $0x2] sm:$0xff]
      %v4470 = vld [vmem:[%s4372 + $0x12] sm:$0xff]
      %v4471 = vld [vmem:[%s4372 + $0x22] sm:$0xff]
      %v4472 = vld [vmem:[%s4372 + $0x32] sm:$0xff]
      %v4473 = vld [vmem:[%s4372 + $0x42] sm:$0xff]
      %v4474 = vld [vmem:[%s4372 + $0x52] sm:$0xff]
      %v4475 = vld [vmem:[%s4372 + $0x62] sm:$0xff]
      %v4476 = vld [vmem:[%s4372 + $0x72] sm:$0xff]
      %4477 = vst.msk [vmem:[#allocation5 + $0x10] sm:$0xff] %vm3723, %v4469
      %4478 = vst.msk [vmem:[#allocation5 + $0x28] sm:$0xff] %vm3723, %v4470
      %4479 = vst.msk [vmem:[#allocation5 + $0x40] sm:$0xff] %vm3723, %v4471
      %4480 = vst.msk [vmem:[#allocation5 + $0x58] sm:$0xff] %vm3723, %v4472
      %4481 = vst.msk [vmem:[#allocation5 + $0x70] sm:$0xff] %vm3723, %v4473
      %4482 = vst.msk [vmem:[#allocation5 + $0x88] sm:$0xff] %vm3723, %v4474
      %4483 = vst.msk [vmem:[#allocation5 + $0xa0] sm:$0xff] %vm3723, %v4475
      %4484 = vst.msk [vmem:[#allocation5 + $0xb8] sm:$0xff] %vm3723, %v4476
      %v4485 = vld [vmem:[#allocation5] sm:$0xff]
      %v4486 = vld [vmem:[#allocation5 + $0x8] sm:$0xff]
      %v4487 = vld [vmem:[#allocation5 + $0x10] sm:$0xff]
      %v4488 = vld [vmem:[#allocation5 + $0x18] sm:$0xff]
      %v4489 = vld [vmem:[#allocation5 + $0x20] sm:$0xff]
      %v4490 = vld [vmem:[#allocation5 + $0x28] sm:$0xff]
      %v4491 = vld [vmem:[#allocation5 + $0x30] sm:$0xff]
      %v4492 = vld [vmem:[#allocation5 + $0x38] sm:$0xff]
      %v4493 = vld [vmem:[#allocation5 + $0x40] sm:$0xff]
      %v4494 = vld [vmem:[#allocation5 + $0x48] sm:$0xff]
      %v4495 = vld [vmem:[#allocation5 + $0x50] sm:$0xff]
      %v4496 = vld [vmem:[#allocation5 + $0x58] sm:$0xff]
      %v4497 = vld [vmem:[#allocation5 + $0x60] sm:$0xff]
      %v4498 = vld [vmem:[#allocation5 + $0x68] sm:$0xff]
      %v4499 = vld [vmem:[#allocation5 + $0x70] sm:$0xff]
      %v4500 = vld [vmem:[#allocation5 + $0x78] sm:$0xff]
      %v4501 = vld [vmem:[#allocation5 + $0x80] sm:$0xff]
      %v4502 = vld [vmem:[#allocation5 + $0x88] sm:$0xff]
      %v4503 = vld [vmem:[#allocation5 + $0x90] sm:$0xff]
      %v4504 = vld [vmem:[#allocation5 + $0x98] sm:$0xff]
      %v4505 = vld [vmem:[#allocation5 + $0xa0] sm:$0xff]
      %v4506 = vld [vmem:[#allocation5 + $0xa8] sm:$0xff]
      %v4507 = vld [vmem:[#allocation5 + $0xb0] sm:$0xff]
      %v4508 = vld [vmem:[#allocation5 + $0xb8] sm:$0xff]
      %v4509 = vld [vmem:[%s3] sm:$0xff]
      %v4510 = vld [vmem:[%s3 + $0x8] sm:$0xff]
      %v4511 = vld [vmem:[%s3 + $0x10] sm:$0xff]
      %v4512 = vld [vmem:[%s3 + $0x18] sm:$0xff]
      %v4513 = vld [vmem:[%s3 + $0x20] sm:$0xff]
      %v4514 = vld [vmem:[%s3 + $0x28] sm:$0xff]
      %v4515 = vld [vmem:[%s3 + $0x30] sm:$0xff]
      %v4516 = vld [vmem:[%s3 + $0x38] sm:$0xff]
      %v4517 = vld [vmem:[%s3 + $0x40] sm:$0xff]
      %v4518 = vld [vmem:[%s3 + $0x48] sm:$0xff]
      %v4519 = vld [vmem:[%s3 + $0x50] sm:$0xff]
      %v4520 = vld [vmem:[%s3 + $0x58] sm:$0xff]
      %v4521 = vld [vmem:[%s3 + $0x60] sm:$0xff]
      %v4522 = vld [vmem:[%s3 + $0x68] sm:$0xff]
      %v4523 = vld [vmem:[%s3 + $0x70] sm:$0xff]
      %v4524 = vld [vmem:[%s3 + $0x78] sm:$0xff]
      %v4525 = vld [vmem:[%s3 + $0x80] sm:$0xff]
      %v4526 = vld [vmem:[%s3 + $0x88] sm:$0xff]
      %v4527 = vld [vmem:[%s3 + $0x90] sm:$0xff]
      %v4528 = vld [vmem:[%s3 + $0x98] sm:$0xff]
      %v4529 = vld [vmem:[%s3 + $0xa0] sm:$0xff]
      %v4530 = vld [vmem:[%s3 + $0xa8] sm:$0xff]
      %v4531 = vld [vmem:[%s3 + $0xb0] sm:$0xff]
      %v4532 = vld [vmem:[%s3 + $0xb8] sm:$0xff]
      %v4533 = vld [vmem:[%s3 + $0xc0] sm:$0xff]
      %v4534 = vld [vmem:[%s3 + $0xc8] sm:$0xff]
      %v4535 = vld [vmem:[%s3 + $0xd0] sm:$0xff]
      %v4536 = vld [vmem:[%s3 + $0xd8] sm:$0xff]
      %v4537 = vld [vmem:[%s3 + $0xe0] sm:$0xff]
      %v4538 = vld [vmem:[%s3 + $0xe8] sm:$0xff]
      %v4539 = vld [vmem:[%s3 + $0xf0] sm:$0xff]
      %v4540 = vld [vmem:[%s3 + $0xf8] sm:$0xff]
      %v4541 = vld [vmem:[%s3 + $0x100] sm:$0xff]
      %v4542 = vld [vmem:[%s3 + $0x108] sm:$0xff]
      %v4543 = vld [vmem:[%s3 + $0x110] sm:$0xff]
      %v4544 = vld [vmem:[%s3 + $0x118] sm:$0xff]
      %v4545 = vld [vmem:[%s4] sm:$0x1]
      %v4547 = vlaneseq
      %v4548 = vshrl.u32 %v4547, 7
      %v4549 = vsub.s32 0, %v4548
      %v4550 = vrot.slane %v4545, %v4549
      %v4553 = vsel %vm3723, %v4487, 0
      %v4556 = vsel %vm3723, %v4490, 0
      %v4559 = vsel %vm3723, %v4493, 0
      %v4562 = vsel %vm3723, %v4496, 0
      %v4565 = vsel %vm3723, %v4499, 0
      %v4568 = vsel %vm3723, %v4502, 0
      %v4571 = vsel %vm3723, %v4505, 0
      %v4574 = vsel %vm3723, %v4508, 0
      %4576 = vmatprep.subr.mxu0 0.0
      %4577 = vmatpush1.msra.mxu0 %v4524
      %4578 = vmatprep.subr.mxu0 0.0
      %4579 = vmatpush1.msra.mxu0 %v4523
      %4580 = vmatprep.subr.mxu0 0.0
      %4581 = vmatpush1.msra.mxu0 %v4522
      %4582 = vmatprep.subr.mxu0 0.0
      %4583 = vmatpush1.msra.mxu0 %v4521
      %4584 = vmatprep.subr.mxu0 0.0
      %4585 = vmatpush1.msra.mxu0 %v4520
      %4586 = vmatprep.subr.mxu0 0.0
      %4587 = vmatpush1.msra.mxu0 %v4519
      %4588 = vmatprep.subr.mxu0 0.0
      %4589 = vmatpush1.msra.mxu0 %v4518
      %4590 = vmatprep.subr.mxu0 0.0
      %4591 = vmatpush1.msra.mxu0 %v4517
      %4592 = vmatprep.subr.mxu0 0.0
      %4593 = vmatpush1.msra.mxu0 %v4516
      %4594 = vmatprep.subr.mxu0 0.0
      %4595 = vmatpush1.msra.mxu0 %v4515
      %4596 = vmatprep.subr.mxu0 0.0
      %4597 = vmatpush1.msra.mxu0 %v4514
      %4598 = vmatprep.subr.mxu0 0.0
      %4599 = vmatpush1.msra.mxu0 %v4513
      %4600 = vmatprep.subr.mxu0 0.0
      %4601 = vmatpush1.msra.mxu0 %v4512
      %4602 = vmatprep.subr.mxu0 0.0
      %4603 = vmatpush1.msra.mxu0 %v4511
      %4604 = vmatprep.subr.mxu0 0.0
      %4605 = vmatpush1.msra.mxu0 %v4510
      %4606 = vmatprep.subr.mxu0 0.0
      %4607 = vmatpush1.msra.mxu0 %v4509
      %4608 = vmatprep.subr.mxu0 0.0
      %4609 = vmatpush2.msra.mxu0 %v4540
      %4610 = vmatprep.subr.mxu0 0.0
      %4611 = vmatpush2.msra.mxu0 %v4539
      %4612 = vmatprep.subr.mxu0 0.0
      %4613 = vmatpush2.msra.mxu0 %v4538
      %4614 = vmatprep.subr.mxu0 0.0
      %4615 = vmatpush2.msra.mxu0 %v4537
      %4616 = vmatprep.subr.mxu0 0.0
      %4617 = vmatpush2.msra.mxu0 %v4536
      %4618 = vmatprep.subr.mxu0 0.0
      %4619 = vmatpush2.msra.mxu0 %v4535
      %4620 = vmatprep.subr.mxu0 0.0
      %4621 = vmatpush2.msra.mxu0 %v4534
      %4622 = vmatprep.subr.mxu0 0.0
      %4623 = vmatpush2.msra.mxu0 %v4533
      %4624 = vmatprep.subr.mxu0 0.0
      %4625 = vmatpush2.msra.mxu0 %v4532
      %4626 = vmatprep.subr.mxu0 0.0
      %4627 = vmatpush2.msra.mxu0 %v4531
      %4628 = vmatprep.subr.mxu0 0.0
      %4629 = vmatpush2.msra.mxu0 %v4530
      %4630 = vmatprep.subr.mxu0 0.0
      %4631 = vmatpush2.msra.mxu0 %v4529
      %4632 = vmatprep.subr.mxu0 0.0
      %4633 = vmatpush2.msra.mxu0 %v4528
      %4634 = vmatprep.subr.mxu0 0.0
      %4635 = vmatpush2.msra.mxu0 %v4527
      %4636 = vmatprep.subr.mxu0 0.0
      %4637 = vmatpush2.msra.mxu0 %v4526
      %4638 = vmatprep.subr.mxu0 0.0
      %4639 = vmatpush2.msra.mxu0 %v4525
      %4640 = vmatprep.mubr.f32.mxu0 %v4486
      %4641 = vmatmul.mubr.f32.gmra.mxu0 %v4485
      %v4642 = vpop.f32.mrf.mxu0
      %v4643 = vadd.f32 %v4550, %v4642
      %v4644 = vpop.f32.mrf.mxu0
      %4645 = vmatprep.mubr.f32.mxu0 %v4489
      %4646 = vmatmul.mubr.f32.gmra.mxu0 %v4488
      %v4647 = vpop.f32.mrf.mxu0
      %v4648 = vadd.f32 %v4550, %v4647
      %v4649 = vpop.f32.mrf.mxu0
      %4650 = vmatprep.mubr.f32.mxu0 %v4492
      %4651 = vmatmul.mubr.f32.gmra.mxu0 %v4491
      %v4652 = vpop.f32.mrf.mxu0
      %v4653 = vadd.f32 %v4550, %v4652
      %v4654 = vpop.f32.mrf.mxu0
      %4655 = vmatprep.mubr.f32.mxu0 %v4495
      %4656 = vmatmul.mubr.f32.gmra.mxu0 %v4494
      %v4657 = vpop.f32.mrf.mxu0
      %v4658 = vadd.f32 %v4550, %v4657
      %v4659 = vpop.f32.mrf.mxu0
      %4660 = vmatprep.mubr.f32.mxu0 %v4498
      %4661 = vmatmul.mubr.f32.gmra.mxu0 %v4497
      %v4662 = vpop.f32.mrf.mxu0
      %v4663 = vadd.f32 %v4550, %v4662
      %v4664 = vpop.f32.mrf.mxu0
      %4665 = vmatprep.mubr.f32.mxu0 %v4501
      %4666 = vmatmul.mubr.f32.gmra.mxu0 %v4500
      %v4667 = vpop.f32.mrf.mxu0
      %v4668 = vadd.f32 %v4550, %v4667
      %v4669 = vpop.f32.mrf.mxu0
      %4670 = vmatprep.mubr.f32.mxu0 %v4504
      %4671 = vmatmul.mubr.f32.gmra.mxu0 %v4503
      %v4672 = vpop.f32.mrf.mxu0
      %v4673 = vadd.f32 %v4550, %v4672
      %v4674 = vpop.f32.mrf.mxu0
      %4675 = vmatprep.mubr.f32.mxu0 %v4507
      %4676 = vmatmul.mubr.f32.gmra.mxu0 %v4506
      %v4677 = vpop.f32.mrf.mxu0
      %v4678 = vadd.f32 %v4550, %v4677
      %v4679 = vpop.f32.mrf.mxu0
      %4680 = vdwg.mxu0
      %4681 = vmatprep.subr.mxu0 0.0
      %4682 = vmatpush1.msra.mxu0 0.0
      %4683 = vmatprep.subr.mxu0 0.0
      %4684 = vmatpush1.msra.mxu0 0.0
      %4685 = vmatprep.subr.mxu0 0.0
      %4686 = vmatpush1.msra.mxu0 0.0
      %4687 = vmatprep.subr.mxu0 0.0
      %4688 = vmatpush1.msra.mxu0 0.0
      %4689 = vmatprep.subr.mxu0 0.0
      %4690 = vmatpush1.msra.mxu0 0.0
      %4691 = vmatprep.subr.mxu0 0.0
      %4692 = vmatpush1.msra.mxu0 0.0
      %4693 = vmatprep.subr.mxu0 0.0
      %4694 = vmatpush1.msra.mxu0 0.0
      %4695 = vmatprep.subr.mxu0 0.0
      %4696 = vmatpush1.msra.mxu0 0.0
      %4697 = vmatprep.subr.mxu0 0.0
      %4698 = vmatpush1.msra.mxu0 0.0
      %4699 = vmatprep.subr.mxu0 0.0
      %4700 = vmatpush1.msra.mxu0 0.0
      %4701 = vmatprep.subr.mxu0 0.0
      %4702 = vmatpush1.msra.mxu0 0.0
      %4703 = vmatprep.subr.mxu0 0.0
      %4704 = vmatpush1.msra.mxu0 0.0
      %4705 = vmatprep.subr.mxu0 0.0
      %4706 = vmatpush1.msra.mxu0 %v4544
      %4707 = vmatprep.subr.mxu0 0.0
      %4708 = vmatpush1.msra.mxu0 %v4543
      %4709 = vmatprep.subr.mxu0 0.0
      %4710 = vmatpush1.msra.mxu0 %v4542
      %4711 = vmatprep.subr.mxu0 0.0
      %4712 = vmatpush1.msra.mxu0 %v4541
      %4713 = vmatprep.subr.mxu0 0.0
      %4714 = vmatpush2.msra.mxu0 0.0
      %4715 = vmatprep.subr.mxu0 0.0
      %4716 = vmatpush2.msra.mxu0 0.0
      %4717 = vmatprep.subr.mxu0 0.0
      %4718 = vmatpush2.msra.mxu0 0.0
      %4719 = vmatprep.subr.mxu0 0.0
      %4720 = vmatpush2.msra.mxu0 0.0
      %4721 = vmatprep.subr.mxu0 0.0
      %4722 = vmatpush2.msra.mxu0 0.0
      %4723 = vmatprep.subr.mxu0 0.0
      %4724 = vmatpush2.msra.mxu0 0.0
      %4725 = vmatprep.subr.mxu0 0.0
      %4726 = vmatpush2.msra.mxu0 0.0
      %4727 = vmatprep.subr.mxu0 0.0
      %4728 = vmatpush2.msra.mxu0 0.0
      %4729 = vmatprep.subr.mxu0 0.0
      %4730 = vmatpush2.msra.mxu0 0.0
      %4731 = vmatprep.subr.mxu0 0.0
      %4732 = vmatpush2.msra.mxu0 0.0
      %4733 = vmatprep.subr.mxu0 0.0
      %4734 = vmatpush2.msra.mxu0 0.0
      %4735 = vmatprep.subr.mxu0 0.0
      %4736 = vmatpush2.msra.mxu0 0.0
      %4737 = vmatprep.subr.mxu0 0.0
      %4738 = vmatpush2.msra.mxu0 0.0
      %4739 = vmatprep.subr.mxu0 0.0
      %4740 = vmatpush2.msra.mxu0 0.0
      %4741 = vmatprep.subr.mxu0 0.0
      %4742 = vmatpush2.msra.mxu0 0.0
      %4743 = vmatprep.subr.mxu0 0.0
      %4744 = vmatpush2.msra.mxu0 0.0
      %4745 = vmatprep.mubr.f32.mxu0 0.0
      %4746 = vmatmul.mubr.f32.gmra.mxu0 %v4553
      %v4747 = vpop.f32.mrf.mxu0
      %v4748 = vadd.f32 %v4643, %v4747
      %v4749 = vpop.f32.mrf.mxu0
      %4750 = vmatprep.mubr.f32.mxu0 0.0
      %4751 = vmatmul.mubr.f32.gmra.mxu0 %v4556
      %v4752 = vpop.f32.mrf.mxu0
      %v4753 = vadd.f32 %v4648, %v4752
      %v4754 = vpop.f32.mrf.mxu0
      %4755 = vmatprep.mubr.f32.mxu0 0.0
      %4756 = vmatmul.mubr.f32.gmra.mxu0 %v4559
      %v4757 = vpop.f32.mrf.mxu0
      %v4758 = vadd.f32 %v4653, %v4757
      %v4759 = vpop.f32.mrf.mxu0
      %4760 = vmatprep.mubr.f32.mxu0 0.0
      %4761 = vmatmul.mubr.f32.gmra.mxu0 %v4562
      %v4762 = vpop.f32.mrf.mxu0
      %v4763 = vadd.f32 %v4658, %v4762
      %v4764 = vpop.f32.mrf.mxu0
      %4765 = vmatprep.mubr.f32.mxu0 0.0
      %4766 = vmatmul.mubr.f32.gmra.mxu0 %v4565
      %v4767 = vpop.f32.mrf.mxu0
      %v4768 = vadd.f32 %v4663, %v4767
      %v4769 = vpop.f32.mrf.mxu0
      %4770 = vmatprep.mubr.f32.mxu0 0.0
      %4771 = vmatmul.mubr.f32.gmra.mxu0 %v4568
      %v4772 = vpop.f32.mrf.mxu0
      %v4773 = vadd.f32 %v4668, %v4772
      %v4774 = vpop.f32.mrf.mxu0
      %4775 = vmatprep.mubr.f32.mxu0 0.0
      %4776 = vmatmul.mubr.f32.gmra.mxu0 %v4571
      %v4777 = vpop.f32.mrf.mxu0
      %v4778 = vadd.f32 %v4673, %v4777
      %v4779 = vpop.f32.mrf.mxu0
      %4780 = vmatprep.mubr.f32.mxu0 0.0
      %4781 = vmatmul.mubr.f32.gmra.mxu0 %v4574
      %v4782 = vpop.f32.mrf.mxu0
      %v4783 = vadd.f32 %v4678, %v4782
      %v4784 = vpop.f32.mrf.mxu0
      %4785 = vdwg.mxu0
      %vm4786 = vcmp.ge.f32.partialorder %v4748, 0.0
      %vm4787 = vcmp.ge.f32.partialorder %v4753, 0.0
      %vm4788 = vcmp.ge.f32.partialorder %v4758, 0.0
      %vm4789 = vcmp.ge.f32.partialorder %v4763, 0.0
      %vm4790 = vcmp.ge.f32.partialorder %v4768, 0.0
      %vm4791 = vcmp.ge.f32.partialorder %v4773, 0.0
      %vm4792 = vcmp.ge.f32.partialorder %v4778, 0.0
      %vm4793 = vcmp.ge.f32.partialorder %v4783, 0.0
      %v4794 = vmul.f32 %v4748, 0.1
      %v4795 = vmul.f32 %v4753, 0.1
      %v4796 = vmul.f32 %v4758, 0.1
      %v4797 = vmul.f32 %v4763, 0.1
      %v4798 = vmul.f32 %v4768, 0.1
      %v4799 = vmul.f32 %v4773, 0.1
      %v4800 = vmul.f32 %v4778, 0.1
      %v4801 = vmul.f32 %v4783, 0.1
      %v4802 = vsel %vm4786, %v4748, %v4794
      %v4803 = vsel %vm4787, %v4753, %v4795
      %v4804 = vsel %vm4788, %v4758, %v4796
      %v4805 = vsel %vm4789, %v4763, %v4797
      %v4806 = vsel %vm4790, %v4768, %v4798
      %v4807 = vsel %vm4791, %v4773, %v4799
      %v4808 = vsel %vm4792, %v4778, %v4800
      %v4809 = vsel %vm4793, %v4783, %v4801
      %v4818 = vcombine.high %v4802, %v4802
      %v4820 = vunpack.c.l.s4 1983009808
      %v4821 = vunpack.c.0.s8 %v4820
      %v4822 = vlaneseq
      %v4823 = vshrl.u32 %v4822, 7
      %v4824 = vsub.s32 %v4821, %v4823
      %v4825 = vrot.slane %v4802, %v4824
      %v4827 = vunpack.c.l.s4 1983009808
      %v4828 = vunpack.c.0.s8 %v4827
      %v4829 = vlaneseq
      %v4830 = vshrl.u32 %v4829, 7
      %v4831 = vsub.s32 %v4828, %v4830
      %v4832 = vrot.slane %v4818, %v4831
      %v4833 = vcombine.high %v4825, %v4825
      %v4834 = vcombine.high %v4832, %v4832
      %v4835 = vcombine.high %v4803, %v4803
      %v4837 = vunpack.c.l.s4 1983009808
      %v4838 = vunpack.c.0.s8 %v4837
      %v4839 = vlaneseq
      %v4840 = vshrl.u32 %v4839, 7
      %v4841 = vsub.s32 %v4838, %v4840
      %v4842 = vrot.slane %v4803, %v4841
      %v4844 = vunpack.c.l.s4 1983009808
      %v4845 = vunpack.c.0.s8 %v4844
      %v4846 = vlaneseq
      %v4847 = vshrl.u32 %v4846, 7
      %v4848 = vsub.s32 %v4845, %v4847
      %v4849 = vrot.slane %v4835, %v4848
      %v4850 = vcombine.high %v4842, %v4842
      %v4851 = vcombine.high %v4849, %v4849
      %v4852 = vcombine.high %v4804, %v4804
      %v4854 = vunpack.c.l.s4 1983009808
      %v4855 = vunpack.c.0.s8 %v4854
      %v4856 = vlaneseq
      %v4857 = vshrl.u32 %v4856, 7
      %v4858 = vsub.s32 %v4855, %v4857
      %v4859 = vrot.slane %v4804, %v4858
      %v4861 = vunpack.c.l.s4 1983009808
      %v4862 = vunpack.c.0.s8 %v4861
      %v4863 = vlaneseq
      %v4864 = vshrl.u32 %v4863, 7
      %v4865 = vsub.s32 %v4862, %v4864
      %v4866 = vrot.slane %v4852, %v4865
      %v4867 = vcombine.high %v4859, %v4859
      %v4868 = vcombine.high %v4866, %v4866
      %v4869 = vcombine.high %v4805, %v4805
      %v4871 = vunpack.c.l.s4 1983009808
      %v4872 = vunpack.c.0.s8 %v4871
      %v4873 = vlaneseq
      %v4874 = vshrl.u32 %v4873, 7
      %v4875 = vsub.s32 %v4872, %v4874
      %v4876 = vrot.slane %v4805, %v4875
      %v4878 = vunpack.c.l.s4 1983009808
      %v4879 = vunpack.c.0.s8 %v4878
      %v4880 = vlaneseq
      %v4881 = vshrl.u32 %v4880, 7
      %v4882 = vsub.s32 %v4879, %v4881
      %v4883 = vrot.slane %v4869, %v4882
      %v4884 = vcombine.high %v4876, %v4876
      %v4885 = vcombine.high %v4883, %v4883
      %v4886 = vcombine.high %v4806, %v4806
      %v4888 = vunpack.c.l.s4 1983009808
      %v4889 = vunpack.c.0.s8 %v4888
      %v4890 = vlaneseq
      %v4891 = vshrl.u32 %v4890, 7
      %v4892 = vsub.s32 %v4889, %v4891
      %v4893 = vrot.slane %v4806, %v4892
      %v4895 = vunpack.c.l.s4 1983009808
      %v4896 = vunpack.c.0.s8 %v4895
      %v4897 = vlaneseq
      %v4898 = vshrl.u32 %v4897, 7
      %v4899 = vsub.s32 %v4896, %v4898
      %v4900 = vrot.slane %v4886, %v4899
      %v4901 = vcombine.high %v4893, %v4893
      %v4902 = vcombine.high %v4900, %v4900
      %v4903 = vcombine.high %v4807, %v4807
      %v4905 = vunpack.c.l.s4 1983009808
      %v4906 = vunpack.c.0.s8 %v4905
      %v4907 = vlaneseq
      %v4908 = vshrl.u32 %v4907, 7
      %v4909 = vsub.s32 %v4906, %v4908
      %v4910 = vrot.slane %v4807, %v4909
      %v4912 = vunpack.c.l.s4 1983009808
      %v4913 = vunpack.c.0.s8 %v4912
      %v4914 = vlaneseq
      %v4915 = vshrl.u32 %v4914, 7
      %v4916 = vsub.s32 %v4913, %v4915
      %v4917 = vrot.slane %v4903, %v4916
      %v4918 = vcombine.high %v4910, %v4910
      %v4919 = vcombine.high %v4917, %v4917
      %v4920 = vcombine.high %v4808, %v4808
      %v4922 = vunpack.c.l.s4 1983009808
      %v4923 = vunpack.c.0.s8 %v4922
      %v4924 = vlaneseq
      %v4925 = vshrl.u32 %v4924, 7
      %v4926 = vsub.s32 %v4923, %v4925
      %v4927 = vrot.slane %v4808, %v4926
      %v4929 = vunpack.c.l.s4 1983009808
      %v4930 = vunpack.c.0.s8 %v4929
      %v4931 = vlaneseq
      %v4932 = vshrl.u32 %v4931, 7
      %v4933 = vsub.s32 %v4930, %v4932
      %v4934 = vrot.slane %v4920, %v4933
      %v4935 = vcombine.high %v4927, %v4927
      %v4936 = vcombine.high %v4934, %v4934
      %v4937 = vcombine.high %v4809, %v4809
      %v4939 = vunpack.c.l.s4 1983009808
      %v4940 = vunpack.c.0.s8 %v4939
      %v4941 = vlaneseq
      %v4942 = vshrl.u32 %v4941, 7
      %v4943 = vsub.s32 %v4940, %v4942
      %v4944 = vrot.slane %v4809, %v4943
      %v4946 = vunpack.c.l.s4 1983009808
      %v4947 = vunpack.c.0.s8 %v4946
      %v4948 = vlaneseq
      %v4949 = vshrl.u32 %v4948, 7
      %v4950 = vsub.s32 %v4947, %v4949
      %v4951 = vrot.slane %v4937, %v4950
      %v4952 = vcombine.high %v4944, %v4944
      %v4953 = vcombine.high %v4951, %v4951
      %v4986 = vrot.slane %v4825, 7
      %v4987 = vrot.slane %v4986, 2
      %v4988 = vrot.slane %v4833, 7
      %v4989 = vrot.slane %v4988, 2
      %v4990 = vrot.slane %v4832, 7
      %v4991 = vrot.slane %v4990, 2
      %v4992 = vrot.slane %v4834, 7
      %v4993 = vrot.slane %v4992, 2
      %v4994 = vrot.slane %v4859, 7
      %v4995 = vrot.slane %v4994, 2
      %v4996 = vrot.slane %v4867, 7
      %v4997 = vrot.slane %v4996, 2
      %v4998 = vrot.slane %v4866, 7
      %v4999 = vrot.slane %v4998, 2
      %v5000 = vrot.slane %v4868, 7
      %v5001 = vrot.slane %v5000, 2
      %v5002 = vrot.slane %v4893, 7
      %v5003 = vrot.slane %v5002, 2
      %v5004 = vrot.slane %v4901, 7
      %v5005 = vrot.slane %v5004, 2
      %v5006 = vrot.slane %v4900, 7
      %v5007 = vrot.slane %v5006, 2
      %v5008 = vrot.slane %v4902, 7
      %v5009 = vrot.slane %v5008, 2
      %v5010 = vrot.slane %v4927, 7
      %v5011 = vrot.slane %v5010, 2
      %v5012 = vrot.slane %v4935, 7
      %v5013 = vrot.slane %v5012, 2
      %v5014 = vrot.slane %v4934, 7
      %v5015 = vrot.slane %v5014, 2
      %v5016 = vrot.slane %v4936, 7
      %v5017 = vrot.slane %v5016, 2
      %v5034 = vmax.f32 %v4825, %v4987
      %v5035 = vmax.f32 %v4833, %v4989
      %v5036 = vmax.f32 %v4832, %v4991
      %v5037 = vmax.f32 %v4834, %v4993
      %v5038 = vmax.f32 %v4859, %v4995
      %v5039 = vmax.f32 %v4867, %v4997
      %v5040 = vmax.f32 %v4866, %v4999
      %v5041 = vmax.f32 %v4868, %v5001
      %v5042 = vmax.f32 %v4893, %v5003
      %v5043 = vmax.f32 %v4901, %v5005
      %v5044 = vmax.f32 %v4900, %v5007
      %v5045 = vmax.f32 %v4902, %v5009
      %v5046 = vmax.f32 %v4927, %v5011
      %v5047 = vmax.f32 %v4935, %v5013
      %v5048 = vmax.f32 %v4934, %v5015
      %v5049 = vmax.f32 %v4936, %v5017
      %v5050 = vrot.slane %v4842, 7
      %v5051 = vrot.slane %v5050, 2
      %v5052 = vrot.slane %v4850, 7
      %v5053 = vrot.slane %v5052, 2
      %v5054 = vrot.slane %v4849, 7
      %v5055 = vrot.slane %v5054, 2
      %v5056 = vrot.slane %v4851, 7
      %v5057 = vrot.slane %v5056, 2
      %v5058 = vrot.slane %v4876, 7
      %v5059 = vrot.slane %v5058, 2
      %v5060 = vrot.slane %v4884, 7
      %v5061 = vrot.slane %v5060, 2
      %v5062 = vrot.slane %v4883, 7
      %v5063 = vrot.slane %v5062, 2
      %v5064 = vrot.slane %v4885, 7
      %v5065 = vrot.slane %v5064, 2
      %v5066 = vrot.slane %v4910, 7
      %v5067 = vrot.slane %v5066, 2
      %v5068 = vrot.slane %v4918, 7
      %v5069 = vrot.slane %v5068, 2
      %v5070 = vrot.slane %v4917, 7
      %v5071 = vrot.slane %v5070, 2
      %v5072 = vrot.slane %v4919, 7
      %v5073 = vrot.slane %v5072, 2
      %v5074 = vrot.slane %v4944, 7
      %v5075 = vrot.slane %v5074, 2
      %v5076 = vrot.slane %v4952, 7
      %v5077 = vrot.slane %v5076, 2
      %v5078 = vrot.slane %v4951, 7
      %v5079 = vrot.slane %v5078, 2
      %v5080 = vrot.slane %v4953, 7
      %v5081 = vrot.slane %v5080, 2
      %v5098 = vmax.f32 %v4842, %v5051
      %v5099 = vmax.f32 %v4850, %v5053
      %v5100 = vmax.f32 %v4849, %v5055
      %v5101 = vmax.f32 %v4851, %v5057
      %v5102 = vmax.f32 %v4876, %v5059
      %v5103 = vmax.f32 %v4884, %v5061
      %v5104 = vmax.f32 %v4883, %v5063
      %v5105 = vmax.f32 %v4885, %v5065
      %v5106 = vmax.f32 %v4910, %v5067
      %v5107 = vmax.f32 %v4918, %v5069
      %v5108 = vmax.f32 %v4917, %v5071
      %v5109 = vmax.f32 %v4919, %v5073
      %v5110 = vmax.f32 %v4944, %v5075
      %v5111 = vmax.f32 %v4952, %v5077
      %v5112 = vmax.f32 %v4951, %v5079
      %v5113 = vmax.f32 %v4953, %v5081
      %v5114 = vmax.f32 %v5034, %v5098
      %v5115 = vmax.f32 %v5035, %v5099
      %v5116 = vmax.f32 %v5036, %v5100
      %v5117 = vmax.f32 %v5037, %v5101
      %v5118 = vmax.f32 %v5038, %v5102
      %v5119 = vmax.f32 %v5039, %v5103
      %v5120 = vmax.f32 %v5040, %v5104
      %v5121 = vmax.f32 %v5041, %v5105
      %v5122 = vmax.f32 %v5042, %v5106
      %v5123 = vmax.f32 %v5043, %v5107
      %v5124 = vmax.f32 %v5044, %v5108
      %v5125 = vmax.f32 %v5045, %v5109
      %v5126 = vmax.f32 %v5046, %v5110
      %v5127 = vmax.f32 %v5047, %v5111
      %v5128 = vmax.f32 %v5048, %v5112
      %v5129 = vmax.f32 %v5049, %v5113
      %v5146 = vlaneseq
      %v5147 = vshrl.u32 %v5146, 7
      %v5148 = vsub.s32 0, %v5147
      %v5149 = vrot.slane %v5114, %v5148
      %v5150 = vlaneseq
      %v5151 = vshrl.u32 %v5150, 7
      %v5152 = vsub.s32 0, %v5151
      %v5153 = vrot.slane %v5115, %v5152
      %v5154 = vlaneseq
      %v5155 = vshrl.u32 %v5154, 7
      %v5156 = vsub.s32 0, %v5155
      %v5157 = vrot.slane %v5116, %v5156
      %v5158 = vlaneseq
      %v5159 = vshrl.u32 %v5158, 7
      %v5160 = vsub.s32 0, %v5159
      %v5161 = vrot.slane %v5117, %v5160
      %v5162 = vlaneseq
      %v5163 = vshrl.u32 %v5162, 7
      %v5164 = vsub.s32 0, %v5163
      %v5165 = vrot.slane %v5118, %v5164
      %v5166 = vlaneseq
      %v5167 = vshrl.u32 %v5166, 7
      %v5168 = vsub.s32 0, %v5167
      %v5169 = vrot.slane %v5119, %v5168
      %v5170 = vlaneseq
      %v5171 = vshrl.u32 %v5170, 7
      %v5172 = vsub.s32 0, %v5171
      %v5173 = vrot.slane %v5120, %v5172
      %v5174 = vlaneseq
      %v5175 = vshrl.u32 %v5174, 7
      %v5176 = vsub.s32 0, %v5175
      %v5177 = vrot.slane %v5121, %v5176
      %v5178 = vlaneseq
      %v5179 = vshrl.u32 %v5178, 7
      %v5180 = vsub.s32 0, %v5179
      %v5181 = vrot.slane %v5122, %v5180
      %v5182 = vlaneseq
      %v5183 = vshrl.u32 %v5182, 7
      %v5184 = vsub.s32 0, %v5183
      %v5185 = vrot.slane %v5123, %v5184
      %v5186 = vlaneseq
      %v5187 = vshrl.u32 %v5186, 7
      %v5188 = vsub.s32 0, %v5187
      %v5189 = vrot.slane %v5124, %v5188
      %v5190 = vlaneseq
      %v5191 = vshrl.u32 %v5190, 7
      %v5192 = vsub.s32 0, %v5191
      %v5193 = vrot.slane %v5125, %v5192
      %v5194 = vlaneseq
      %v5195 = vshrl.u32 %v5194, 7
      %v5196 = vsub.s32 0, %v5195
      %v5197 = vrot.slane %v5126, %v5196
      %v5198 = vlaneseq
      %v5199 = vshrl.u32 %v5198, 7
      %v5200 = vsub.s32 0, %v5199
      %v5201 = vrot.slane %v5127, %v5200
      %v5202 = vlaneseq
      %v5203 = vshrl.u32 %v5202, 7
      %v5204 = vsub.s32 0, %v5203
      %v5205 = vrot.slane %v5128, %v5204
      %v5206 = vlaneseq
      %v5207 = vshrl.u32 %v5206, 7
      %v5208 = vsub.s32 0, %v5207
      %v5209 = vrot.slane %v5129, %v5208
      %v5210 = vsel %vm4065, %v5153, %v5149
      %v5211 = vsel %vm4067, %v5157, %v5210
      %v5212 = vsel %vm4069, %v5161, %v5211
      %v5213 = vsel %vm4065, %v5169, %v5165
      %v5214 = vsel %vm4067, %v5173, %v5213
      %v5215 = vsel %vm4069, %v5177, %v5214
      %v5216 = vsel %vm4065, %v5185, %v5181
      %v5217 = vsel %vm4067, %v5189, %v5216
      %v5218 = vsel %vm4069, %v5193, %v5217
      %v5219 = vsel %vm4065, %v5201, %v5197
      %v5220 = vsel %vm4067, %v5205, %v5219
      %v5221 = vsel %vm4069, %v5209, %v5220
      %vm5226 = vcmask 519168
      %v5227 = vsel %vm5226, %v5212, 0.0
      %v5228 = vrot.slane %v5227, 4
      %v5229 = vadd.f32 %v5227, %v5228
      %v5230 = vrot.slane %v5229, 2
      %v5231 = vadd.f32 %v5229, %v5230
      %v5232 = vrot.slane %v5231, 1
      %v5233 = vadd.f32 %v5231, %v5232
      %v5234 = vsel %vm5226, %v5215, 0.0
      %v5235 = vrot.slane %v5234, 4
      %v5236 = vadd.f32 %v5234, %v5235
      %v5237 = vrot.slane %v5236, 2
      %v5238 = vadd.f32 %v5236, %v5237
      %v5239 = vrot.slane %v5238, 1
      %v5240 = vadd.f32 %v5238, %v5239
      %v5241 = vsel %vm5226, %v5218, 0.0
      %v5242 = vrot.slane %v5241, 4
      %v5243 = vadd.f32 %v5241, %v5242
      %v5244 = vrot.slane %v5243, 2
      %v5245 = vadd.f32 %v5243, %v5244
      %v5246 = vrot.slane %v5245, 1
      %v5247 = vadd.f32 %v5245, %v5246
      %v5248 = vsel %vm5226, %v5221, 0.0
      %v5249 = vrot.slane %v5248, 4
      %v5250 = vadd.f32 %v5248, %v5249
      %v5251 = vrot.slane %v5250, 2
      %v5252 = vadd.f32 %v5250, %v5251
      %v5253 = vrot.slane %v5252, 1
      %v5254 = vadd.f32 %v5252, %v5253
      %v5259 = vrot.slane %v5240, 7
      %v5260 = vsel %vm4065, %v5259, %v5233
      %v5261 = vrot.slane %v5247, 6
      %v5262 = vsel %vm4067, %v5261, %v5260
      %v5263 = vrot.slane %v5254, 5
      %v5264 = vsel %vm4069, %v5263, %v5262
      %v5266 = vsel %vm5226, %v5264, 0.0
      %v5267 = vrot.slane %v5266, 4
      %v5268 = vadd.f32 %v5266, %v5267
      %v5269 = vrot.slane %v5268, 2
      %v5270 = vadd.f32 %v5268, %v5269
      %v5271 = vrot.slane %v5270, 1
      %v5272 = vadd.f32 %v5270, %v5271
      %v5273 = vmul.f32 %v5272, 0.0625
      %v5274 = vld [vmem:[%s5] sm:$0xff]
      %v5275 = vld [vmem:[%s5 + $0x8] sm:$0xff]
      %v5276 = vld [vmem:[%s5 + $0x10] sm:$0xff]
      %v5277 = vld [vmem:[%s5 + $0x18] sm:$0xff]
      %v5278 = vld [vmem:[%s5 + $0x20] sm:$0xff]
      %v5279 = vld [vmem:[%s5 + $0x28] sm:$0xff]
      %v5280 = vld [vmem:[%s5 + $0x30] sm:$0xff]
      %v5281 = vld [vmem:[%s5 + $0x38] sm:$0xff]
      %vm5282 = vcmask 523264
      %v5284 = vsel %vm5282, %v5273, 0
      %5286 = vmatprep.subr.mxu0 0.0
      %5287 = vmatpush1.msra.mxu0 0.0
      %5288 = vmatprep.subr.mxu0 0.0
      %5289 = vmatpush1.msra.mxu0 0.0
      %5290 = vmatprep.subr.mxu0 0.0
      %5291 = vmatpush1.msra.mxu0 0.0
      %5292 = vmatprep.subr.mxu0 0.0
      %5293 = vmatpush1.msra.mxu0 0.0
      %5294 = vmatprep.subr.mxu0 0.0
      %5295 = vmatpush1.msra.mxu0 0.0
      %5296 = vmatprep.subr.mxu0 0.0
      %5297 = vmatpush1.msra.mxu0 0.0
      %5298 = vmatprep.subr.mxu0 0.0
      %5299 = vmatpush1.msra.mxu0 0.0
      %5300 = vmatprep.subr.mxu0 0.0
      %5301 = vmatpush1.msra.mxu0 0.0
      %5302 = vmatprep.subr.mxu0 0.0
      %5303 = vmatpush1.msra.mxu0 %v5281
      %5304 = vmatprep.subr.mxu0 0.0
      %5305 = vmatpush1.msra.mxu0 %v5280
      %5306 = vmatprep.subr.mxu0 0.0
      %5307 = vmatpush1.msra.mxu0 %v5279
      %5308 = vmatprep.subr.mxu0 0.0
      %5309 = vmatpush1.msra.mxu0 %v5278
      %5310 = vmatprep.subr.mxu0 0.0
      %5311 = vmatpush1.msra.mxu0 %v5277
      %5312 = vmatprep.subr.mxu0 0.0
      %5313 = vmatpush1.msra.mxu0 %v5276
      %5314 = vmatprep.subr.mxu0 0.0
      %5315 = vmatpush1.msra.mxu0 %v5275
      %5316 = vmatprep.subr.mxu0 0.0
      %5317 = vmatpush1.msra.mxu0 %v5274
      %5318 = vmatprep.subr.mxu0 0.0
      %5319 = vmatpush2.msra.mxu0 0.0
      %5320 = vmatprep.subr.mxu0 0.0
      %5321 = vmatpush2.msra.mxu0 0.0
      %5322 = vmatprep.subr.mxu0 0.0
      %5323 = vmatpush2.msra.mxu0 0.0
      %5324 = vmatprep.subr.mxu0 0.0
      %5325 = vmatpush2.msra.mxu0 0.0
      %5326 = vmatprep.subr.mxu0 0.0
      %5327 = vmatpush2.msra.mxu0 0.0
      %5328 = vmatprep.subr.mxu0 0.0
      %5329 = vmatpush2.msra.mxu0 0.0
      %5330 = vmatprep.subr.mxu0 0.0
      %5331 = vmatpush2.msra.mxu0 0.0
      %5332 = vmatprep.subr.mxu0 0.0
      %5333 = vmatpush2.msra.mxu0 0.0
      %5334 = vmatprep.subr.mxu0 0.0
      %5335 = vmatpush2.msra.mxu0 0.0
      %5336 = vmatprep.subr.mxu0 0.0
      %5337 = vmatpush2.msra.mxu0 0.0
      %5338 = vmatprep.subr.mxu0 0.0
      %5339 = vmatpush2.msra.mxu0 0.0
      %5340 = vmatprep.subr.mxu0 0.0
      %5341 = vmatpush2.msra.mxu0 0.0
      %5342 = vmatprep.subr.mxu0 0.0
      %5343 = vmatpush2.msra.mxu0 0.0
      %5344 = vmatprep.subr.mxu0 0.0
      %5345 = vmatpush2.msra.mxu0 0.0
      %5346 = vmatprep.subr.mxu0 0.0
      %5347 = vmatpush2.msra.mxu0 0.0
      %5348 = vmatprep.subr.mxu0 0.0
      %5349 = vmatpush2.msra.mxu0 0.0
      %5350 = vmatprep.mubr.f32.mxu0 0.0
      %5351 = vmatmul.mubr.f32.gmra.mxu0 %v5284
      %v5352 = vpop.f32.mrf.mxu0
      %v5353 = vadd.f32 0.0, %v5352
      %v5354 = vpop.f32.mrf.mxu0
      %5355 = vdwg.mxu0
      %5356 = vst [vmem:[%s247] sm:$0x1] %v5353
      %p5357 = scmp.lt.s32.totalorder %s17, 1
      %s5358 = scalar_select %p5357, %s17, 1
      %s5359 = scalar_lea.vmem %s6, %s5358
      // Predicated region
      $region45: #{binary_cnn_forward.1} parent=43 // pred_check
        %p5360 = pneg %p166
      $region46: #{binary_cnn_forward.1} parent=43 // pred_check_branch
        %5362 = sbr.rel (%p5360) target = $region48
      $region47: #{binary_cnn_forward.1} parent=43 // pred_region
        _
      $region48: #{binary_cnn_forward.1} parent=43 // pred_fallthru
        _
    $region44: #{binary_cnn_forward.1} parent=5 // pred_fallthru
      _
    %p5363 = scmp.le.s32.totalorder 2, %s12
    // Predicated region
    $region49: #{binary_cnn_forward.1} parent=5 // pred_check
      %p5364 = pneg %p5363
    $region50: #{binary_cnn_forward.1} parent=5 // pred_check_branch
      %5366 = sbr.rel (%p5364) target = $region52
    $region51: #{binary_cnn_forward.1} parent=5 // pred_region
      %s5367 = ssub.s32 %s12, 2
      // Predicated region
      $region53: #{binary_cnn_forward.1} parent=51 // pred_check
        %p5368 = pneg %p172
      $region54: #{binary_cnn_forward.1} parent=51 // pred_check_branch
        %5370 = sbr.rel (%p5368) target = $region56
      $region55: #{binary_cnn_forward.1} parent=51 // pred_region
        %p5371 = scmp.lt.s32.totalorder %s18, 1
        %s5372 = scalar_select %p5371, %s18, 1
        %s5373 = scalar_lea.vmem %s6, %s5372
      $region56: #{binary_cnn_forward.1} parent=51 // pred_fallthru
        _
    $region52: #{binary_cnn_forward.1} parent=5 // pred_fallthru
      _
  $region6: #{binary_cnn_forward.1} parent=0 // loop_footer
    %s16 = sadd.s32 1, %s12
  $region7: #{binary_cnn_forward.1} parent=0 // loop_footer_branch
    %11 = sbr.rel target = $region3
  $region8: #{binary_cnn_forward.1} parent=0 // loop_exit
    _

</llo_original>
